<compile_context>
chip_gen: v7x
topology: tpu7x:2x2x1
jax: 0.10.0
libtpu: 0.0.40
codegen_flags: <defaults>
</compile_context>

<pallas_src>
import jax
import jax.numpy as jnp
from jax.experimental import pallas as pl
from jax.experimental.pallas import tpu as pltpu

# ---- mini "Longformer" config --------------------------------------------
BATCH = 2
SEQ = 8
HIDDEN = 64
NUM_HEADS = 2
HEAD_DIM = HIDDEN // NUM_HEADS
FFN = 128
VOCAB = 100
NUM_CLASSES = 2
NUM_LAYERS = 2
LN_EPS = 1e-5
LANE_PAD = 128          # classifier output padded to a full 128-lane register


def _layer_norm(x, g, b):
    mu = jnp.mean(x, axis=-1, keepdims=True)
    var = jnp.mean(jnp.square(x - mu), axis=-1, keepdims=True)
    return (x - mu) * jax.lax.rsqrt(var + LN_EPS) * g + b


# ---------------------------------------------------------------------------
# Fused Pallas kernel: all encoder layers + classifier for ONE batch element
# per grid step.  Layer loop and head loop are statically unrolled.
# ---------------------------------------------------------------------------
def fused_forward_kernel(x_ref, mb_ref,
                         wqkv_ref, bqkv_ref, wo_ref, bo_ref,
                         ln1g_ref, ln1b_ref, w1_ref, b1_ref,
                         w2_ref, b2_ref, ln2g_ref, ln2b_ref,
                         fcw_ref, fcb_ref, o_ref):
    x = x_ref[0]                    # (S, H)
    mb = mb_ref[0]                  # (1, S) additive key mask (0 / -1e9)
    scale = 1.0 / (HEAD_DIM ** 0.5)

    for l in range(NUM_LAYERS):     # statically unrolled
        # Fused QKV projection: one lane-dense (H, 3H) matmul instead of three.
        qkv = (jnp.dot(x, wqkv_ref[l], preferred_element_type=jnp.float32)
               + bqkv_ref[l])       # (S, 3H)
        wo_l = wo_ref[l]            # (H, H)

        attn = None
        for h in range(NUM_HEADS):  # statically unrolled; static lane slices
            qh = qkv[:, h * HEAD_DIM:(h + 1) * HEAD_DIM]
            kh = qkv[:, HIDDEN + h * HEAD_DIM:HIDDEN + (h + 1) * HEAD_DIM]
            vh = qkv[:, 2 * HIDDEN + h * HEAD_DIM:2 * HIDDEN + (h + 1) * HEAD_DIM]
            # q @ k^T via dot_general contracting dims -> no explicit transpose.
            s = jax.lax.dot_general(qh, kh, (((1,), (1,)), ((), ())),
                                    preferred_element_type=jnp.float32) * scale
            s = s + mb                                  # mask padded keys
            s = s - jnp.max(s, axis=-1, keepdims=True)  # stable softmax
            p = jnp.exp(s)
            inv = pl.reciprocal(jnp.sum(p, axis=-1, keepdims=True), approx=True)
            p = p * inv
            ho = jnp.dot(p, vh, preferred_element_type=jnp.float32)   # (S, HD)
            # Per-head output projection: slice the weight (free), never
            # concatenate activations along the lane axis.
            contrib = jnp.dot(ho, wo_l[h * HEAD_DIM:(h + 1) * HEAD_DIM, :],
                              preferred_element_type=jnp.float32)
            attn = contrib if attn is None else attn + contrib
        attn = attn + bo_ref[l]

        h1 = _layer_norm(x + attn, ln1g_ref[l], ln1b_ref[l])

        ff = jnp.dot(h1, w1_ref[l], preferred_element_type=jnp.float32) + b1_ref[l]
        # TODO(synk): HF 'gelu' is the exact erf-GELU; tanh approximation used
        #             for Mosaic-friendly lowering.
        ff = jax.nn.gelu(ff, approximate=True)
        ff = jnp.dot(ff, w2_ref[l], preferred_element_type=jnp.float32) + b2_ref[l]

        x = _layer_norm(h1 + ff, ln2g_ref[l], ln2b_ref[l])

    # Classifier applied to every row (row 0 = CLS is the one kept by the
    # wrapper); fc weight is zero-padded to 128 output lanes so the kernel's
    # only store is a dense (S, 128) slab (no masked sub-128-lane vst).
    o_ref[0] = (jnp.dot(x, fcw_ref[...], preferred_element_type=jnp.float32)
                + fcb_ref[...])


def fused_forward(x_emb, mask_bias, p):
    """x_emb: (B, S, H) f32, mask_bias: (B, 1, S) f32 -> (B, S, 128) f32."""
    B, S, H = x_emb.shape
    L = NUM_LAYERS

    def const(shape):
        return pl.BlockSpec(shape, lambda b, _n=len(shape): (0,) * _n)

    in_specs = [
        pl.BlockSpec((1, S, H), lambda b: (b, 0, 0)),     # x (per batch elem)
        pl.BlockSpec((1, 1, S), lambda b: (b, 0, 0)),     # mask bias
        const((L, H, 3 * H)), const((L, 1, 3 * H)),       # wqkv, bqkv
        const((L, H, H)),     const((L, 1, H)),           # wo, bo
        const((L, 1, H)),     const((L, 1, H)),           # ln1 gamma, beta
        const((L, H, FFN)),   const((L, 1, FFN)),         # w1, b1
        const((L, FFN, H)),   const((L, 1, H)),           # w2, b2
        const((L, 1, H)),     const((L, 1, H)),           # ln2 gamma, beta
        const((H, LANE_PAD)), const((1, LANE_PAD)),       # fc_w_pad, fc_b_pad
    ]
    out_spec = pl.BlockSpec((1, S, LANE_PAD), lambda b: (b, 0, 0))

    return pl.pallas_call(
        fused_forward_kernel,
        out_shape=jax.ShapeDtypeStruct((B, S, LANE_PAD), jnp.float32),
        grid=(B,),
        in_specs=in_specs,
        out_specs=out_spec,
        compiler_params=pltpu.CompilerParams(
            dimension_semantics=("parallel",)),
    )(x_emb, mask_bias,
      p["wqkv"], p["bqkv"], p["wo"], p["bo"], p["ln1_g"], p["ln1_b"],
      p["w1"], p["b1"], p["w2"], p["b2"], p["ln2_g"], p["ln2_b"],
      p["fc_w_pad"], p["fc_b_pad"])


# ---------------------------------------------------------------------------
# Deterministic parameter init (stacked per-layer weights, fused QKV)
# ---------------------------------------------------------------------------
def init_params(key):
    keys = iter(jax.random.split(key, 3 + NUM_LAYERS * 6))

    def dense(k, fan_in, fan_out):
        return (jax.random.normal(k, (fan_in, fan_out), jnp.float32)
                * (1.0 / jnp.sqrt(fan_in)))

    tok_emb = jax.random.normal(next(keys), (VOCAB, HIDDEN), jnp.float32) * 0.02
    pos_emb = jax.random.normal(next(keys), (SEQ, HIDDEN), jnp.float32) * 0.02
    fc_w = dense(next(keys), HIDDEN, NUM_CLASSES)

    wqkv, bqkv, wo, bo = [], [], [], []
    ln1g, ln1b, w1, b1, w2, b2, ln2g, ln2b = ([] for _ in range(8))
    for _ in range(NUM_LAYERS):
        wq = dense(next(keys), HIDDEN, HIDDEN)
        wk = dense(next(keys), HIDDEN, HIDDEN)
        wv = dense(next(keys), HIDDEN, HIDDEN)
        wqkv.append(jnp.concatenate([wq, wk, wv], axis=1))          # (H, 3H)
        bqkv.append(jnp.zeros((1, 3 * HIDDEN), jnp.float32))
        wo.append(dense(next(keys), HIDDEN, HIDDEN))
        bo.append(jnp.zeros((1, HIDDEN), jnp.float32))
        ln1g.append(jnp.ones((1, HIDDEN), jnp.float32))
        ln1b.append(jnp.zeros((1, HIDDEN), jnp.float32))
        w1.append(dense(next(keys), HIDDEN, FFN))
        b1.append(jnp.zeros((1, FFN), jnp.float32))
        w2.append(dense(next(keys), FFN, HIDDEN))
        b2.append(jnp.zeros((1, HIDDEN), jnp.float32))
        ln2g.append(jnp.ones((1, HIDDEN), jnp.float32))
        ln2b.append(jnp.zeros((1, HIDDEN), jnp.float32))

    fc_w_pad = jnp.zeros((HIDDEN, LANE_PAD), jnp.float32)
    fc_w_pad = fc_w_pad.at[:, :NUM_CLASSES].set(fc_w)
    fc_b_pad = jnp.zeros((1, LANE_PAD), jnp.float32)    # fc bias zero-init

    return {
        "tok_emb": tok_emb, "pos_emb": pos_emb,
        "emb_ln_g": jnp.ones((1, HIDDEN), jnp.float32),
        "emb_ln_b": jnp.zeros((1, HIDDEN), jnp.float32),
        "wqkv": jnp.stack(wqkv), "bqkv": jnp.stack(bqkv),
        "wo": jnp.stack(wo), "bo": jnp.stack(bo),
        "ln1_g": jnp.stack(ln1g), "ln1_b": jnp.stack(ln1b),
        "w1": jnp.stack(w1), "b1": jnp.stack(b1),
        "w2": jnp.stack(w2), "b2": jnp.stack(b2),
        "ln2_g": jnp.stack(ln2g), "ln2_b": jnp.stack(ln2b),
        "fc_w_pad": fc_w_pad, "fc_b_pad": fc_b_pad,
    }


# ---------------------------------------------------------------------------
# Full forward (embedding gather in JAX glue, everything else in ONE kernel)
# ---------------------------------------------------------------------------
def fake_news_forward(params, input_ids, attention_mask):
    # Embedding lookup + LayerNorm (glue: gather stays in XLA).
    x = params["tok_emb"][input_ids] + params["pos_emb"][None, :, :]
    x = _layer_norm(x, params["emb_ln_g"][None], params["emb_ln_b"][None])

    # Additive attention key-mask bias: 1 -> 0, 0 -> -1e9, shape (B, 1, S).
    mask_bias = ((1.0 - attention_mask.astype(jnp.float32)) * -1e9)[:, None, :]

    out = fused_forward(x, mask_bias, params)        # (B, S, 128)
    # CLS pooling = row 0; nn.Dropout(0.1) is identity at inference;
    # logits live in the first NUM_CLASSES lanes of the padded slab.
    return out[:, 0, :NUM_CLASSES]


if __name__ == "__main__":
    key = jax.random.PRNGKey(0)
    k_param, k_ids = jax.random.split(key)

    params = init_params(k_param)
    input_ids = jax.random.randint(k_ids, (BATCH, SEQ), 0, VOCAB, dtype=jnp.int32)
    attention_mask = jnp.ones((BATCH, SEQ), jnp.float32)
    attention_mask = attention_mask.at[1, -2:].set(0.0)   # some padding in ex. 1

    logits = fake_news_forward(params, input_ids, attention_mask)
    jax.block_until_ready(logits)
    assert logits.shape == (BATCH, NUM_CLASSES) and logits.dtype == jnp.float32
    print("KERNEL_OK")
</pallas_src>

<mosaic_0001>
module attributes {stable_mosaic.version = 11 : i64} {
  func.func @fused_forward_kernel(%arg0: i32, %arg1: memref<1x8x64xf32, #tpu.memory_space<vmem>>, %arg2: memref<1x1x8xf32, #tpu.memory_space<vmem>>, %arg3: memref<2x64x192xf32, #tpu.memory_space<vmem>>, %arg4: memref<2x1x192xf32, #tpu.memory_space<vmem>>, %arg5: memref<2x64x64xf32, #tpu.memory_space<vmem>>, %arg6: memref<2x1x64xf32, #tpu.memory_space<vmem>>, %arg7: memref<2x1x64xf32, #tpu.memory_space<vmem>>, %arg8: memref<2x1x64xf32, #tpu.memory_space<vmem>>, %arg9: memref<2x64x128xf32, #tpu.memory_space<vmem>>, %arg10: memref<2x1x128xf32, #tpu.memory_space<vmem>>, %arg11: memref<2x128x64xf32, #tpu.memory_space<vmem>>, %arg12: memref<2x1x64xf32, #tpu.memory_space<vmem>>, %arg13: memref<2x1x64xf32, #tpu.memory_space<vmem>>, %arg14: memref<2x1x64xf32, #tpu.memory_space<vmem>>, %arg15: memref<64x128xf32, #tpu.memory_space<vmem>>, %arg16: memref<1x128xf32, #tpu.memory_space<vmem>>, %arg17: memref<1x8x128xf32, #tpu.memory_space<vmem>>) attributes {dimension_semantics = [#tpu.dimension_semantics<parallel>], iteration_bounds = array<i64: 2>, scalar_prefetch = 0 : i64, scratch_operands = 0 : i64, tpu.core_type = #tpu.core_type<tc>, window_params = [{transform_indices = @transform_0, window_bounds = array<i64: 1, 8, 64>}, {transform_indices = @transform_1, window_bounds = array<i64: 1, 1, 8>}, {pipeline_mode = #tpu.pipeline_mode<synchronous>, transform_indices = @transform_2, window_bounds = array<i64: 2, 64, 192>}, {pipeline_mode = #tpu.pipeline_mode<synchronous>, transform_indices = @transform_3, window_bounds = array<i64: 2, 1, 192>}, {pipeline_mode = #tpu.pipeline_mode<synchronous>, transform_indices = @transform_4, window_bounds = array<i64: 2, 64, 64>}, {pipeline_mode = #tpu.pipeline_mode<synchronous>, transform_indices = @transform_5, window_bounds = array<i64: 2, 1, 64>}, {pipeline_mode = #tpu.pipeline_mode<synchronous>, transform_indices = @transform_6, window_bounds = array<i64: 2, 1, 64>}, {pipeline_mode = #tpu.pipeline_mode<synchronous>, transform_indices = @transform_7, window_bounds = array<i64: 2, 1, 64>}, {pipeline_mode = #tpu.pipeline_mode<synchronous>, transform_indices = @transform_8, window_bounds = array<i64: 2, 64, 128>}, {pipeline_mode = #tpu.pipeline_mode<synchronous>, transform_indices = @transform_9, window_bounds = array<i64: 2, 1, 128>}, {pipeline_mode = #tpu.pipeline_mode<synchronous>, transform_indices = @transform_10, window_bounds = array<i64: 2, 128, 64>}, {pipeline_mode = #tpu.pipeline_mode<synchronous>, transform_indices = @transform_11, window_bounds = array<i64: 2, 1, 64>}, {pipeline_mode = #tpu.pipeline_mode<synchronous>, transform_indices = @transform_12, window_bounds = array<i64: 2, 1, 64>}, {pipeline_mode = #tpu.pipeline_mode<synchronous>, transform_indices = @transform_13, window_bounds = array<i64: 2, 1, 64>}, {pipeline_mode = #tpu.pipeline_mode<synchronous>, transform_indices = @transform_14, window_bounds = array<i64: 64, 128>}, {pipeline_mode = #tpu.pipeline_mode<synchronous>, transform_indices = @transform_15, window_bounds = array<i64: 1, 128>}, {transform_indices = @transform_16, window_bounds = array<i64: 1, 8, 128>}]} {
    %c0 = arith.constant 0 : index
    %c0_0 = arith.constant 0 : index
    %c0_1 = arith.constant 0 : index
    %0 = vector.load %arg1[%c0, %c0_0, %c0_1] : memref<1x8x64xf32, #tpu.memory_space<vmem>>, vector<1x8x64xf32>
    %1 = vector.shape_cast %0 : vector<1x8x64xf32> to vector<8x64xf32>
    %c0_2 = arith.constant 0 : index
    %c0_3 = arith.constant 0 : index
    %c0_4 = arith.constant 0 : index
    %2 = vector.load %arg2[%c0_2, %c0_3, %c0_4] : memref<1x1x8xf32, #tpu.memory_space<vmem>>, vector<1x1x8xf32>
    %3 = vector.shape_cast %2 : vector<1x1x8xf32> to vector<1x8xf32>
    %c0_5 = arith.constant 0 : index
    %c0_6 = arith.constant 0 : index
    %c0_7 = arith.constant 0 : index
    %4 = vector.load %arg3[%c0_5, %c0_6, %c0_7] : memref<2x64x192xf32, #tpu.memory_space<vmem>>, vector<1x64x192xf32>
    %5 = vector.shape_cast %4 : vector<1x64x192xf32> to vector<64x192xf32>
    %cst = arith.constant dense<0.000000e+00> : vector<8x192xf32>
    %6 = tpu.matmul %1, %5, %cst {dimension_numbers = #tpu.dot_dimension_numbers<[1], [0], [0], [1], [0, 0, 1, 1], [], []>} : vector<8x64xf32>, vector<64x192xf32>, vector<8x192xf32> -> vector<8x192xf32>
    %c0_8 = arith.constant 0 : index
    %c0_9 = arith.constant 0 : index
    %c0_10 = arith.constant 0 : index
    %7 = vector.load %arg4[%c0_8, %c0_9, %c0_10] : memref<2x1x192xf32, #tpu.memory_space<vmem>>, vector<1x1x192xf32>
    %8 = vector.shape_cast %7 : vector<1x1x192xf32> to vector<1x192xf32>
    %9 = vector.broadcast %8 : vector<1x192xf32> to vector<8x192xf32>
    %10 = arith.addf %6, %9 : vector<8x192xf32>
    %c0_11 = arith.constant 0 : index
    %c0_12 = arith.constant 0 : index
    %c0_13 = arith.constant 0 : index
    %11 = vector.load %arg5[%c0_11, %c0_12, %c0_13] : memref<2x64x64xf32, #tpu.memory_space<vmem>>, vector<1x64x64xf32>
    %12 = vector.shape_cast %11 : vector<1x64x64xf32> to vector<64x64xf32>
    %13 = vector.extract_strided_slice %10 {offsets = [0, 0], sizes = [8, 32], strides = [1, 1]} : vector<8x192xf32> to vector<8x32xf32>
    %14 = vector.extract_strided_slice %10 {offsets = [0, 64], sizes = [8, 32], strides = [1, 1]} : vector<8x192xf32> to vector<8x32xf32>
    %15 = vector.extract_strided_slice %10 {offsets = [0, 128], sizes = [8, 32], strides = [1, 1]} : vector<8x192xf32> to vector<8x32xf32>
    %cst_14 = arith.constant dense<0.000000e+00> : vector<8x8xf32>
    %16 = tpu.matmul %13, %14, %cst_14 {dimension_numbers = #tpu.dot_dimension_numbers<[1], [1], [0], [0], [0, 0, 1, 0], [], []>} : vector<8x32xf32>, vector<8x32xf32>, vector<8x8xf32> -> vector<8x8xf32>
    %cst_15 = arith.constant 0.176776692 : f32
    %17 = vector.broadcast %cst_15 : f32 to vector<8x8xf32>
    %18 = arith.mulf %16, %17 : vector<8x8xf32>
    %19 = vector.broadcast %3 : vector<1x8xf32> to vector<8x8xf32>
    %20 = arith.addf %18, %19 : vector<8x8xf32>
    %cst_16 = arith.constant dense<0xFF800000> : vector<8xf32>
    %21 = vector.multi_reduction <maximumf>, %20, %cst_16 [1] : vector<8x8xf32> to vector<8xf32>
    %22 = vector.shape_cast %21 : vector<8xf32> to vector<8x1xf32>
    %23 = vector.broadcast %22 : vector<8x1xf32> to vector<8x8xf32>
    %24 = arith.subf %20, %23 : vector<8x8xf32>
    %25 = math.exp %24 : vector<8x8xf32>
    %cst_17 = arith.constant dense<0.000000e+00> : vector<8xf32>
    %26 = vector.multi_reduction <add>, %25, %cst_17 [1] : vector<8x8xf32> to vector<8xf32>
    %27 = vector.shape_cast %26 : vector<8xf32> to vector<8x1xf32>
    %28 = tpu.reciprocal %27 {approx = true} : vector<8x1xf32> -> vector<8x1xf32>
    %29 = vector.broadcast %28 : vector<8x1xf32> to vector<8x8xf32>
    %30 = arith.mulf %25, %29 : vector<8x8xf32>
    %cst_18 = arith.constant dense<0.000000e+00> : vector<8x32xf32>
    %31 = tpu.matmul %30, %15, %cst_18 {dimension_numbers = #tpu.dot_dimension_numbers<[1], [0], [0], [1], [0, 0, 1, 1], [], []>} : vector<8x8xf32>, vector<8x32xf32>, vector<8x32xf32> -> vector<8x32xf32>
    %32 = vector.extract_strided_slice %12 {offsets = [0, 0], sizes = [32, 64], strides = [1, 1]} : vector<64x64xf32> to vector<32x64xf32>
    %cst_19 = arith.constant dense<0.000000e+00> : vector<8x64xf32>
    %33 = tpu.matmul %31, %32, %cst_19 {dimension_numbers = #tpu.dot_dimension_numbers<[1], [0], [0], [1], [0, 0, 1, 1], [], []>} : vector<8x32xf32>, vector<32x64xf32>, vector<8x64xf32> -> vector<8x64xf32>
    %34 = vector.extract_strided_slice %10 {offsets = [0, 32], sizes = [8, 32], strides = [1, 1]} : vector<8x192xf32> to vector<8x32xf32>
    %35 = vector.extract_strided_slice %10 {offsets = [0, 96], sizes = [8, 32], strides = [1, 1]} : vector<8x192xf32> to vector<8x32xf32>
    %36 = vector.extract_strided_slice %10 {offsets = [0, 160], sizes = [8, 32], strides = [1, 1]} : vector<8x192xf32> to vector<8x32xf32>
    %cst_20 = arith.constant dense<0.000000e+00> : vector<8x8xf32>
    %37 = tpu.matmul %34, %35, %cst_20 {dimension_numbers = #tpu.dot_dimension_numbers<[1], [1], [0], [0], [0, 0, 1, 0], [], []>} : vector<8x32xf32>, vector<8x32xf32>, vector<8x8xf32> -> vector<8x8xf32>
    %cst_21 = arith.constant 0.176776692 : f32
    %38 = vector.broadcast %cst_21 : f32 to vector<8x8xf32>
    %39 = arith.mulf %37, %38 : vector<8x8xf32>
    %40 = vector.broadcast %3 : vector<1x8xf32> to vector<8x8xf32>
    %41 = arith.addf %39, %40 : vector<8x8xf32>
    %cst_22 = arith.constant dense<0xFF800000> : vector<8xf32>
    %42 = vector.multi_reduction <maximumf>, %41, %cst_22 [1] : vector<8x8xf32> to vector<8xf32>
    %43 = vector.shape_cast %42 : vector<8xf32> to vector<8x1xf32>
    %44 = vector.broadcast %43 : vector<8x1xf32> to vector<8x8xf32>
    %45 = arith.subf %41, %44 : vector<8x8xf32>
    %46 = math.exp %45 : vector<8x8xf32>
    %cst_23 = arith.constant dense<0.000000e+00> : vector<8xf32>
    %47 = vector.multi_reduction <add>, %46, %cst_23 [1] : vector<8x8xf32> to vector<8xf32>
    %48 = vector.shape_cast %47 : vector<8xf32> to vector<8x1xf32>
    %49 = tpu.reciprocal %48 {approx = true} : vector<8x1xf32> -> vector<8x1xf32>
    %50 = vector.broadcast %49 : vector<8x1xf32> to vector<8x8xf32>
    %51 = arith.mulf %46, %50 : vector<8x8xf32>
    %cst_24 = arith.constant dense<0.000000e+00> : vector<8x32xf32>
    %52 = tpu.matmul %51, %36, %cst_24 {dimension_numbers = #tpu.dot_dimension_numbers<[1], [0], [0], [1], [0, 0, 1, 1], [], []>} : vector<8x8xf32>, vector<8x32xf32>, vector<8x32xf32> -> vector<8x32xf32>
    %53 = vector.extract_strided_slice %12 {offsets = [32, 0], sizes = [32, 64], strides = [1, 1]} : vector<64x64xf32> to vector<32x64xf32>
    %cst_25 = arith.constant dense<0.000000e+00> : vector<8x64xf32>
    %54 = tpu.matmul %52, %53, %cst_25 {dimension_numbers = #tpu.dot_dimension_numbers<[1], [0], [0], [1], [0, 0, 1, 1], [], []>} : vector<8x32xf32>, vector<32x64xf32>, vector<8x64xf32> -> vector<8x64xf32>
    %55 = arith.addf %33, %54 : vector<8x64xf32>
    %c0_26 = arith.constant 0 : index
    %c0_27 = arith.constant 0 : index
    %c0_28 = arith.constant 0 : index
    %56 = vector.load %arg6[%c0_26, %c0_27, %c0_28] : memref<2x1x64xf32, #tpu.memory_space<vmem>>, vector<1x1x64xf32>
    %57 = vector.shape_cast %56 : vector<1x1x64xf32> to vector<1x64xf32>
    %58 = vector.broadcast %57 : vector<1x64xf32> to vector<8x64xf32>
    %59 = arith.addf %55, %58 : vector<8x64xf32>
    %60 = arith.addf %1, %59 : vector<8x64xf32>
    %c0_29 = arith.constant 0 : index
    %c0_30 = arith.constant 0 : index
    %c0_31 = arith.constant 0 : index
    %61 = vector.load %arg7[%c0_29, %c0_30, %c0_31] : memref<2x1x64xf32, #tpu.memory_space<vmem>>, vector<1x1x64xf32>
    %62 = vector.shape_cast %61 : vector<1x1x64xf32> to vector<1x64xf32>
    %c0_32 = arith.constant 0 : index
    %c0_33 = arith.constant 0 : index
    %c0_34 = arith.constant 0 : index
    %63 = vector.load %arg8[%c0_32, %c0_33, %c0_34] : memref<2x1x64xf32, #tpu.memory_space<vmem>>, vector<1x1x64xf32>
    %64 = vector.shape_cast %63 : vector<1x1x64xf32> to vector<1x64xf32>
    %cst_35 = arith.constant dense<0.000000e+00> : vector<8xf32>
    %65 = vector.multi_reduction <add>, %60, %cst_35 [1] : vector<8x64xf32> to vector<8xf32>
    %66 = vector.shape_cast %65 : vector<8xf32> to vector<8x1xf32>
    %cst_36 = arith.constant 6.400000e+01 : f32
    %67 = vector.broadcast %cst_36 : f32 to vector<8x1xf32>
    %68 = arith.divf %66, %67 : vector<8x1xf32>
    %69 = vector.broadcast %68 : vector<8x1xf32> to vector<8x64xf32>
    %70 = arith.subf %60, %69 : vector<8x64xf32>
    %71 = arith.mulf %70, %70 : vector<8x64xf32>
    %cst_37 = arith.constant dense<0.000000e+00> : vector<8xf32>
    %72 = vector.multi_reduction <add>, %71, %cst_37 [1] : vector<8x64xf32> to vector<8xf32>
    %73 = vector.shape_cast %72 : vector<8xf32> to vector<8x1xf32>
    %cst_38 = arith.constant 6.400000e+01 : f32
    %74 = vector.broadcast %cst_38 : f32 to vector<8x1xf32>
    %75 = arith.divf %73, %74 : vector<8x1xf32>
    %76 = vector.broadcast %68 : vector<8x1xf32> to vector<8x64xf32>
    %77 = arith.subf %60, %76 : vector<8x64xf32>
    %cst_39 = arith.constant 9.99999974E-6 : f32
    %78 = vector.broadcast %cst_39 : f32 to vector<8x1xf32>
    %79 = arith.addf %75, %78 : vector<8x1xf32>
    %80 = math.rsqrt %79 : vector<8x1xf32>
    %81 = vector.broadcast %80 : vector<8x1xf32> to vector<8x64xf32>
    %82 = arith.mulf %77, %81 : vector<8x64xf32>
    %83 = vector.broadcast %62 : vector<1x64xf32> to vector<8x64xf32>
    %84 = arith.mulf %82, %83 : vector<8x64xf32>
    %85 = vector.broadcast %64 : vector<1x64xf32> to vector<8x64xf32>
    %86 = arith.addf %84, %85 : vector<8x64xf32>
    %c0_40 = arith.constant 0 : index
    %c0_41 = arith.constant 0 : index
    %c0_42 = arith.constant 0 : index
    %87 = vector.load %arg9[%c0_40, %c0_41, %c0_42] : memref<2x64x128xf32, #tpu.memory_space<vmem>>, vector<1x64x128xf32>
    %88 = vector.shape_cast %87 : vector<1x64x128xf32> to vector<64x128xf32>
    %cst_43 = arith.constant dense<0.000000e+00> : vector<8x128xf32>
    %89 = tpu.matmul %86, %88, %cst_43 {dimension_numbers = #tpu.dot_dimension_numbers<[1], [0], [0], [1], [0, 0, 1, 1], [], []>} : vector<8x64xf32>, vector<64x128xf32>, vector<8x128xf32> -> vector<8x128xf32>
    %c0_44 = arith.constant 0 : index
    %c0_45 = arith.constant 0 : index
    %c0_46 = arith.constant 0 : index
    %90 = vector.load %arg10[%c0_44, %c0_45, %c0_46] : memref<2x1x128xf32, #tpu.memory_space<vmem>>, vector<1x1x128xf32>
    %91 = vector.shape_cast %90 : vector<1x1x128xf32> to vector<1x128xf32>
    %92 = vector.broadcast %91 : vector<1x128xf32> to vector<8x128xf32>
    %93 = arith.addf %89, %92 : vector<8x128xf32>
    %94 = arith.mulf %93, %93 : vector<8x128xf32>
    %95 = arith.mulf %93, %94 : vector<8x128xf32>
    %cst_47 = arith.constant 4.471500e-02 : f32
    %96 = vector.broadcast %cst_47 : f32 to vector<8x128xf32>
    %97 = arith.mulf %96, %95 : vector<8x128xf32>
    %98 = arith.addf %93, %97 : vector<8x128xf32>
    %cst_48 = arith.constant 0.797884583 : f32
    %99 = vector.broadcast %cst_48 : f32 to vector<8x128xf32>
    %100 = arith.mulf %99, %98 : vector<8x128xf32>
    %101 = math.tanh %100 : vector<8x128xf32>
    %cst_49 = arith.constant 1.000000e+00 : f32
    %102 = vector.broadcast %cst_49 : f32 to vector<8x128xf32>
    %103 = arith.addf %102, %101 : vector<8x128xf32>
    %cst_50 = arith.constant 5.000000e-01 : f32
    %104 = vector.broadcast %cst_50 : f32 to vector<8x128xf32>
    %105 = arith.mulf %104, %103 : vector<8x128xf32>
    %106 = arith.mulf %93, %105 : vector<8x128xf32>
    %c0_51 = arith.constant 0 : index
    %c0_52 = arith.constant 0 : index
    %c0_53 = arith.constant 0 : index
    %107 = vector.load %arg11[%c0_51, %c0_52, %c0_53] : memref<2x128x64xf32, #tpu.memory_space<vmem>>, vector<1x128x64xf32>
    %108 = vector.shape_cast %107 : vector<1x128x64xf32> to vector<128x64xf32>
    %cst_54 = arith.constant dense<0.000000e+00> : vector<8x64xf32>
    %109 = tpu.matmul %106, %108, %cst_54 {dimension_numbers = #tpu.dot_dimension_numbers<[1], [0], [0], [1], [0, 0, 1, 1], [], []>} : vector<8x128xf32>, vector<128x64xf32>, vector<8x64xf32> -> vector<8x64xf32>
    %c0_55 = arith.constant 0 : index
    %c0_56 = arith.constant 0 : index
    %c0_57 = arith.constant 0 : index
    %110 = vector.load %arg12[%c0_55, %c0_56, %c0_57] : memref<2x1x64xf32, #tpu.memory_space<vmem>>, vector<1x1x64xf32>
    %111 = vector.shape_cast %110 : vector<1x1x64xf32> to vector<1x64xf32>
    %112 = vector.broadcast %111 : vector<1x64xf32> to vector<8x64xf32>
    %113 = arith.addf %109, %112 : vector<8x64xf32>
    %114 = arith.addf %86, %113 : vector<8x64xf32>
    %c0_58 = arith.constant 0 : index
    %c0_59 = arith.constant 0 : index
    %c0_60 = arith.constant 0 : index
    %115 = vector.load %arg13[%c0_58, %c0_59, %c0_60] : memref<2x1x64xf32, #tpu.memory_space<vmem>>, vector<1x1x64xf32>
    %116 = vector.shape_cast %115 : vector<1x1x64xf32> to vector<1x64xf32>
    %c0_61 = arith.constant 0 : index
    %c0_62 = arith.constant 0 : index
    %c0_63 = arith.constant 0 : index
    %117 = vector.load %arg14[%c0_61, %c0_62, %c0_63] : memref<2x1x64xf32, #tpu.memory_space<vmem>>, vector<1x1x64xf32>
    %118 = vector.shape_cast %117 : vector<1x1x64xf32> to vector<1x64xf32>
    %cst_64 = arith.constant dense<0.000000e+00> : vector<8xf32>
    %119 = vector.multi_reduction <add>, %114, %cst_64 [1] : vector<8x64xf32> to vector<8xf32>
    %120 = vector.shape_cast %119 : vector<8xf32> to vector<8x1xf32>
    %cst_65 = arith.constant 6.400000e+01 : f32
    %121 = vector.broadcast %cst_65 : f32 to vector<8x1xf32>
    %122 = arith.divf %120, %121 : vector<8x1xf32>
    %123 = vector.broadcast %122 : vector<8x1xf32> to vector<8x64xf32>
    %124 = arith.subf %114, %123 : vector<8x64xf32>
    %125 = arith.mulf %124, %124 : vector<8x64xf32>
    %cst_66 = arith.constant dense<0.000000e+00> : vector<8xf32>
    %126 = vector.multi_reduction <add>, %125, %cst_66 [1] : vector<8x64xf32> to vector<8xf32>
    %127 = vector.shape_cast %126 : vector<8xf32> to vector<8x1xf32>
    %cst_67 = arith.constant 6.400000e+01 : f32
    %128 = vector.broadcast %cst_67 : f32 to vector<8x1xf32>
    %129 = arith.divf %127, %128 : vector<8x1xf32>
    %130 = vector.broadcast %122 : vector<8x1xf32> to vector<8x64xf32>
    %131 = arith.subf %114, %130 : vector<8x64xf32>
    %cst_68 = arith.constant 9.99999974E-6 : f32
    %132 = vector.broadcast %cst_68 : f32 to vector<8x1xf32>
    %133 = arith.addf %129, %132 : vector<8x1xf32>
    %134 = math.rsqrt %133 : vector<8x1xf32>
    %135 = vector.broadcast %134 : vector<8x1xf32> to vector<8x64xf32>
    %136 = arith.mulf %131, %135 : vector<8x64xf32>
    %137 = vector.broadcast %116 : vector<1x64xf32> to vector<8x64xf32>
    %138 = arith.mulf %136, %137 : vector<8x64xf32>
    %139 = vector.broadcast %118 : vector<1x64xf32> to vector<8x64xf32>
    %140 = arith.addf %138, %139 : vector<8x64xf32>
    %c1 = arith.constant 1 : index
    %c0_69 = arith.constant 0 : index
    %c0_70 = arith.constant 0 : index
    %141 = vector.load %arg3[%c1, %c0_69, %c0_70] : memref<2x64x192xf32, #tpu.memory_space<vmem>>, vector<1x64x192xf32>
    %142 = vector.shape_cast %141 : vector<1x64x192xf32> to vector<64x192xf32>
    %cst_71 = arith.constant dense<0.000000e+00> : vector<8x192xf32>
    %143 = tpu.matmul %140, %142, %cst_71 {dimension_numbers = #tpu.dot_dimension_numbers<[1], [0], [0], [1], [0, 0, 1, 1], [], []>} : vector<8x64xf32>, vector<64x192xf32>, vector<8x192xf32> -> vector<8x192xf32>
    %c1_72 = arith.constant 1 : index
    %c0_73 = arith.constant 0 : index
    %c0_74 = arith.constant 0 : index
    %144 = vector.load %arg4[%c1_72, %c0_73, %c0_74] : memref<2x1x192xf32, #tpu.memory_space<vmem>>, vector<1x1x192xf32>
    %145 = vector.shape_cast %144 : vector<1x1x192xf32> to vector<1x192xf32>
    %146 = vector.broadcast %145 : vector<1x192xf32> to vector<8x192xf32>
    %147 = arith.addf %143, %146 : vector<8x192xf32>
    %c1_75 = arith.constant 1 : index
    %c0_76 = arith.constant 0 : index
    %c0_77 = arith.constant 0 : index
    %148 = vector.load %arg5[%c1_75, %c0_76, %c0_77] : memref<2x64x64xf32, #tpu.memory_space<vmem>>, vector<1x64x64xf32>
    %149 = vector.shape_cast %148 : vector<1x64x64xf32> to vector<64x64xf32>
    %150 = vector.extract_strided_slice %147 {offsets = [0, 0], sizes = [8, 32], strides = [1, 1]} : vector<8x192xf32> to vector<8x32xf32>
    %151 = vector.extract_strided_slice %147 {offsets = [0, 64], sizes = [8, 32], strides = [1, 1]} : vector<8x192xf32> to vector<8x32xf32>
    %152 = vector.extract_strided_slice %147 {offsets = [0, 128], sizes = [8, 32], strides = [1, 1]} : vector<8x192xf32> to vector<8x32xf32>
    %cst_78 = arith.constant dense<0.000000e+00> : vector<8x8xf32>
    %153 = tpu.matmul %150, %151, %cst_78 {dimension_numbers = #tpu.dot_dimension_numbers<[1], [1], [0], [0], [0, 0, 1, 0], [], []>} : vector<8x32xf32>, vector<8x32xf32>, vector<8x8xf32> -> vector<8x8xf32>
    %cst_79 = arith.constant 0.176776692 : f32
    %154 = vector.broadcast %cst_79 : f32 to vector<8x8xf32>
    %155 = arith.mulf %153, %154 : vector<8x8xf32>
    %156 = vector.broadcast %3 : vector<1x8xf32> to vector<8x8xf32>
    %157 = arith.addf %155, %156 : vector<8x8xf32>
    %cst_80 = arith.constant dense<0xFF800000> : vector<8xf32>
    %158 = vector.multi_reduction <maximumf>, %157, %cst_80 [1] : vector<8x8xf32> to vector<8xf32>
    %159 = vector.shape_cast %158 : vector<8xf32> to vector<8x1xf32>
    %160 = vector.broadcast %159 : vector<8x1xf32> to vector<8x8xf32>
    %161 = arith.subf %157, %160 : vector<8x8xf32>
    %162 = math.exp %161 : vector<8x8xf32>
    %cst_81 = arith.constant dense<0.000000e+00> : vector<8xf32>
    %163 = vector.multi_reduction <add>, %162, %cst_81 [1] : vector<8x8xf32> to vector<8xf32>
    %164 = vector.shape_cast %163 : vector<8xf32> to vector<8x1xf32>
    %165 = tpu.reciprocal %164 {approx = true} : vector<8x1xf32> -> vector<8x1xf32>
    %166 = vector.broadcast %165 : vector<8x1xf32> to vector<8x8xf32>
    %167 = arith.mulf %162, %166 : vector<8x8xf32>
    %cst_82 = arith.constant dense<0.000000e+00> : vector<8x32xf32>
    %168 = tpu.matmul %167, %152, %cst_82 {dimension_numbers = #tpu.dot_dimension_numbers<[1], [0], [0], [1], [0, 0, 1, 1], [], []>} : vector<8x8xf32>, vector<8x32xf32>, vector<8x32xf32> -> vector<8x32xf32>
    %169 = vector.extract_strided_slice %149 {offsets = [0, 0], sizes = [32, 64], strides = [1, 1]} : vector<64x64xf32> to vector<32x64xf32>
    %cst_83 = arith.constant dense<0.000000e+00> : vector<8x64xf32>
    %170 = tpu.matmul %168, %169, %cst_83 {dimension_numbers = #tpu.dot_dimension_numbers<[1], [0], [0], [1], [0, 0, 1, 1], [], []>} : vector<8x32xf32>, vector<32x64xf32>, vector<8x64xf32> -> vector<8x64xf32>
    %171 = vector.extract_strided_slice %147 {offsets = [0, 32], sizes = [8, 32], strides = [1, 1]} : vector<8x192xf32> to vector<8x32xf32>
    %172 = vector.extract_strided_slice %147 {offsets = [0, 96], sizes = [8, 32], strides = [1, 1]} : vector<8x192xf32> to vector<8x32xf32>
    %173 = vector.extract_strided_slice %147 {offsets = [0, 160], sizes = [8, 32], strides = [1, 1]} : vector<8x192xf32> to vector<8x32xf32>
    %cst_84 = arith.constant dense<0.000000e+00> : vector<8x8xf32>
    %174 = tpu.matmul %171, %172, %cst_84 {dimension_numbers = #tpu.dot_dimension_numbers<[1], [1], [0], [0], [0, 0, 1, 0], [], []>} : vector<8x32xf32>, vector<8x32xf32>, vector<8x8xf32> -> vector<8x8xf32>
    %cst_85 = arith.constant 0.176776692 : f32
    %175 = vector.broadcast %cst_85 : f32 to vector<8x8xf32>
    %176 = arith.mulf %174, %175 : vector<8x8xf32>
    %177 = vector.broadcast %3 : vector<1x8xf32> to vector<8x8xf32>
    %178 = arith.addf %176, %177 : vector<8x8xf32>
    %cst_86 = arith.constant dense<0xFF800000> : vector<8xf32>
    %179 = vector.multi_reduction <maximumf>, %178, %cst_86 [1] : vector<8x8xf32> to vector<8xf32>
    %180 = vector.shape_cast %179 : vector<8xf32> to vector<8x1xf32>
    %181 = vector.broadcast %180 : vector<8x1xf32> to vector<8x8xf32>
    %182 = arith.subf %178, %181 : vector<8x8xf32>
    %183 = math.exp %182 : vector<8x8xf32>
    %cst_87 = arith.constant dense<0.000000e+00> : vector<8xf32>
    %184 = vector.multi_reduction <add>, %183, %cst_87 [1] : vector<8x8xf32> to vector<8xf32>
    %185 = vector.shape_cast %184 : vector<8xf32> to vector<8x1xf32>
    %186 = tpu.reciprocal %185 {approx = true} : vector<8x1xf32> -> vector<8x1xf32>
    %187 = vector.broadcast %186 : vector<8x1xf32> to vector<8x8xf32>
    %188 = arith.mulf %183, %187 : vector<8x8xf32>
    %cst_88 = arith.constant dense<0.000000e+00> : vector<8x32xf32>
    %189 = tpu.matmul %188, %173, %cst_88 {dimension_numbers = #tpu.dot_dimension_numbers<[1], [0], [0], [1], [0, 0, 1, 1], [], []>} : vector<8x8xf32>, vector<8x32xf32>, vector<8x32xf32> -> vector<8x32xf32>
    %190 = vector.extract_strided_slice %149 {offsets = [32, 0], sizes = [32, 64], strides = [1, 1]} : vector<64x64xf32> to vector<32x64xf32>
    %cst_89 = arith.constant dense<0.000000e+00> : vector<8x64xf32>
    %191 = tpu.matmul %189, %190, %cst_89 {dimension_numbers = #tpu.dot_dimension_numbers<[1], [0], [0], [1], [0, 0, 1, 1], [], []>} : vector<8x32xf32>, vector<32x64xf32>, vector<8x64xf32> -> vector<8x64xf32>
    %192 = arith.addf %170, %191 : vector<8x64xf32>
    %c1_90 = arith.constant 1 : index
    %c0_91 = arith.constant 0 : index
    %c0_92 = arith.constant 0 : index
    %193 = vector.load %arg6[%c1_90, %c0_91, %c0_92] : memref<2x1x64xf32, #tpu.memory_space<vmem>>, vector<1x1x64xf32>
    %194 = vector.shape_cast %193 : vector<1x1x64xf32> to vector<1x64xf32>
    %195 = vector.broadcast %194 : vector<1x64xf32> to vector<8x64xf32>
    %196 = arith.addf %192, %195 : vector<8x64xf32>
    %197 = arith.addf %140, %196 : vector<8x64xf32>
    %c1_93 = arith.constant 1 : index
    %c0_94 = arith.constant 0 : index
    %c0_95 = arith.constant 0 : index
    %198 = vector.load %arg7[%c1_93, %c0_94, %c0_95] : memref<2x1x64xf32, #tpu.memory_space<vmem>>, vector<1x1x64xf32>
    %199 = vector.shape_cast %198 : vector<1x1x64xf32> to vector<1x64xf32>
    %c1_96 = arith.constant 1 : index
    %c0_97 = arith.constant 0 : index
    %c0_98 = arith.constant 0 : index
    %200 = vector.load %arg8[%c1_96, %c0_97, %c0_98] : memref<2x1x64xf32, #tpu.memory_space<vmem>>, vector<1x1x64xf32>
    %201 = vector.shape_cast %200 : vector<1x1x64xf32> to vector<1x64xf32>
    %cst_99 = arith.constant dense<0.000000e+00> : vector<8xf32>
    %202 = vector.multi_reduction <add>, %197, %cst_99 [1] : vector<8x64xf32> to vector<8xf32>
    %203 = vector.shape_cast %202 : vector<8xf32> to vector<8x1xf32>
    %cst_100 = arith.constant 6.400000e+01 : f32
    %204 = vector.broadcast %cst_100 : f32 to vector<8x1xf32>
    %205 = arith.divf %203, %204 : vector<8x1xf32>
    %206 = vector.broadcast %205 : vector<8x1xf32> to vector<8x64xf32>
    %207 = arith.subf %197, %206 : vector<8x64xf32>
    %208 = arith.mulf %207, %207 : vector<8x64xf32>
    %cst_101 = arith.constant dense<0.000000e+00> : vector<8xf32>
    %209 = vector.multi_reduction <add>, %208, %cst_101 [1] : vector<8x64xf32> to vector<8xf32>
    %210 = vector.shape_cast %209 : vector<8xf32> to vector<8x1xf32>
    %cst_102 = arith.constant 6.400000e+01 : f32
    %211 = vector.broadcast %cst_102 : f32 to vector<8x1xf32>
    %212 = arith.divf %210, %211 : vector<8x1xf32>
    %213 = vector.broadcast %205 : vector<8x1xf32> to vector<8x64xf32>
    %214 = arith.subf %197, %213 : vector<8x64xf32>
    %cst_103 = arith.constant 9.99999974E-6 : f32
    %215 = vector.broadcast %cst_103 : f32 to vector<8x1xf32>
    %216 = arith.addf %212, %215 : vector<8x1xf32>
    %217 = math.rsqrt %216 : vector<8x1xf32>
    %218 = vector.broadcast %217 : vector<8x1xf32> to vector<8x64xf32>
    %219 = arith.mulf %214, %218 : vector<8x64xf32>
    %220 = vector.broadcast %199 : vector<1x64xf32> to vector<8x64xf32>
    %221 = arith.mulf %219, %220 : vector<8x64xf32>
    %222 = vector.broadcast %201 : vector<1x64xf32> to vector<8x64xf32>
    %223 = arith.addf %221, %222 : vector<8x64xf32>
    %c1_104 = arith.constant 1 : index
    %c0_105 = arith.constant 0 : index
    %c0_106 = arith.constant 0 : index
    %224 = vector.load %arg9[%c1_104, %c0_105, %c0_106] : memref<2x64x128xf32, #tpu.memory_space<vmem>>, vector<1x64x128xf32>
    %225 = vector.shape_cast %224 : vector<1x64x128xf32> to vector<64x128xf32>
    %cst_107 = arith.constant dense<0.000000e+00> : vector<8x128xf32>
    %226 = tpu.matmul %223, %225, %cst_107 {dimension_numbers = #tpu.dot_dimension_numbers<[1], [0], [0], [1], [0, 0, 1, 1], [], []>} : vector<8x64xf32>, vector<64x128xf32>, vector<8x128xf32> -> vector<8x128xf32>
    %c1_108 = arith.constant 1 : index
    %c0_109 = arith.constant 0 : index
    %c0_110 = arith.constant 0 : index
    %227 = vector.load %arg10[%c1_108, %c0_109, %c0_110] : memref<2x1x128xf32, #tpu.memory_space<vmem>>, vector<1x1x128xf32>
    %228 = vector.shape_cast %227 : vector<1x1x128xf32> to vector<1x128xf32>
    %229 = vector.broadcast %228 : vector<1x128xf32> to vector<8x128xf32>
    %230 = arith.addf %226, %229 : vector<8x128xf32>
    %231 = arith.mulf %230, %230 : vector<8x128xf32>
    %232 = arith.mulf %230, %231 : vector<8x128xf32>
    %cst_111 = arith.constant 4.471500e-02 : f32
    %233 = vector.broadcast %cst_111 : f32 to vector<8x128xf32>
    %234 = arith.mulf %233, %232 : vector<8x128xf32>
    %235 = arith.addf %230, %234 : vector<8x128xf32>
    %cst_112 = arith.constant 0.797884583 : f32
    %236 = vector.broadcast %cst_112 : f32 to vector<8x128xf32>
    %237 = arith.mulf %236, %235 : vector<8x128xf32>
    %238 = math.tanh %237 : vector<8x128xf32>
    %cst_113 = arith.constant 1.000000e+00 : f32
    %239 = vector.broadcast %cst_113 : f32 to vector<8x128xf32>
    %240 = arith.addf %239, %238 : vector<8x128xf32>
    %cst_114 = arith.constant 5.000000e-01 : f32
    %241 = vector.broadcast %cst_114 : f32 to vector<8x128xf32>
    %242 = arith.mulf %241, %240 : vector<8x128xf32>
    %243 = arith.mulf %230, %242 : vector<8x128xf32>
    %c1_115 = arith.constant 1 : index
    %c0_116 = arith.constant 0 : index
    %c0_117 = arith.constant 0 : index
    %244 = vector.load %arg11[%c1_115, %c0_116, %c0_117] : memref<2x128x64xf32, #tpu.memory_space<vmem>>, vector<1x128x64xf32>
    %245 = vector.shape_cast %244 : vector<1x128x64xf32> to vector<128x64xf32>
    %cst_118 = arith.constant dense<0.000000e+00> : vector<8x64xf32>
    %246 = tpu.matmul %243, %245, %cst_118 {dimension_numbers = #tpu.dot_dimension_numbers<[1], [0], [0], [1], [0, 0, 1, 1], [], []>} : vector<8x128xf32>, vector<128x64xf32>, vector<8x64xf32> -> vector<8x64xf32>
    %c1_119 = arith.constant 1 : index
    %c0_120 = arith.constant 0 : index
    %c0_121 = arith.constant 0 : index
    %247 = vector.load %arg12[%c1_119, %c0_120, %c0_121] : memref<2x1x64xf32, #tpu.memory_space<vmem>>, vector<1x1x64xf32>
    %248 = vector.shape_cast %247 : vector<1x1x64xf32> to vector<1x64xf32>
    %249 = vector.broadcast %248 : vector<1x64xf32> to vector<8x64xf32>
    %250 = arith.addf %246, %249 : vector<8x64xf32>
    %251 = arith.addf %223, %250 : vector<8x64xf32>
    %c1_122 = arith.constant 1 : index
    %c0_123 = arith.constant 0 : index
    %c0_124 = arith.constant 0 : index
    %252 = vector.load %arg13[%c1_122, %c0_123, %c0_124] : memref<2x1x64xf32, #tpu.memory_space<vmem>>, vector<1x1x64xf32>
    %253 = vector.shape_cast %252 : vector<1x1x64xf32> to vector<1x64xf32>
    %c1_125 = arith.constant 1 : index
    %c0_126 = arith.constant 0 : index
    %c0_127 = arith.constant 0 : index
    %254 = vector.load %arg14[%c1_125, %c0_126, %c0_127] : memref<2x1x64xf32, #tpu.memory_space<vmem>>, vector<1x1x64xf32>
    %255 = vector.shape_cast %254 : vector<1x1x64xf32> to vector<1x64xf32>
    %cst_128 = arith.constant dense<0.000000e+00> : vector<8xf32>
    %256 = vector.multi_reduction <add>, %251, %cst_128 [1] : vector<8x64xf32> to vector<8xf32>
    %257 = vector.shape_cast %256 : vector<8xf32> to vector<8x1xf32>
    %cst_129 = arith.constant 6.400000e+01 : f32
    %258 = vector.broadcast %cst_129 : f32 to vector<8x1xf32>
    %259 = arith.divf %257, %258 : vector<8x1xf32>
    %260 = vector.broadcast %259 : vector<8x1xf32> to vector<8x64xf32>
    %261 = arith.subf %251, %260 : vector<8x64xf32>
    %262 = arith.mulf %261, %261 : vector<8x64xf32>
    %cst_130 = arith.constant dense<0.000000e+00> : vector<8xf32>
    %263 = vector.multi_reduction <add>, %262, %cst_130 [1] : vector<8x64xf32> to vector<8xf32>
    %264 = vector.shape_cast %263 : vector<8xf32> to vector<8x1xf32>
    %cst_131 = arith.constant 6.400000e+01 : f32
    %265 = vector.broadcast %cst_131 : f32 to vector<8x1xf32>
    %266 = arith.divf %264, %265 : vector<8x1xf32>
    %267 = vector.broadcast %259 : vector<8x1xf32> to vector<8x64xf32>
    %268 = arith.subf %251, %267 : vector<8x64xf32>
    %cst_132 = arith.constant 9.99999974E-6 : f32
    %269 = vector.broadcast %cst_132 : f32 to vector<8x1xf32>
    %270 = arith.addf %266, %269 : vector<8x1xf32>
    %271 = math.rsqrt %270 : vector<8x1xf32>
    %272 = vector.broadcast %271 : vector<8x1xf32> to vector<8x64xf32>
    %273 = arith.mulf %268, %272 : vector<8x64xf32>
    %274 = vector.broadcast %253 : vector<1x64xf32> to vector<8x64xf32>
    %275 = arith.mulf %273, %274 : vector<8x64xf32>
    %276 = vector.broadcast %255 : vector<1x64xf32> to vector<8x64xf32>
    %277 = arith.addf %275, %276 : vector<8x64xf32>
    %c0_133 = arith.constant 0 : index
    %c0_134 = arith.constant 0 : index
    %278 = vector.load %arg15[%c0_133, %c0_134] : memref<64x128xf32, #tpu.memory_space<vmem>>, vector<64x128xf32>
    %cst_135 = arith.constant dense<0.000000e+00> : vector<8x128xf32>
    %279 = tpu.matmul %277, %278, %cst_135 {dimension_numbers = #tpu.dot_dimension_numbers<[1], [0], [0], [1], [0, 0, 1, 1], [], []>} : vector<8x64xf32>, vector<64x128xf32>, vector<8x128xf32> -> vector<8x128xf32>
    %c0_136 = arith.constant 0 : index
    %c0_137 = arith.constant 0 : index
    %280 = vector.load %arg16[%c0_136, %c0_137] : memref<1x128xf32, #tpu.memory_space<vmem>>, vector<1x128xf32>
    %281 = vector.broadcast %280 : vector<1x128xf32> to vector<8x128xf32>
    %282 = arith.addf %279, %281 : vector<8x128xf32>
    %c0_138 = arith.constant 0 : index
    %c0_139 = arith.constant 0 : index
    %c0_140 = arith.constant 0 : index
    %283 = vector.load %arg17[%c0_138, %c0_139, %c0_140] : memref<1x8x128xf32, #tpu.memory_space<vmem>>, vector<1x8x128xf32>
    %284 = vector.shape_cast %283 : vector<1x8x128xf32> to vector<8x128xf32>
    %285 = vector.shape_cast %282 : vector<8x128xf32> to vector<1x8x128xf32>
    tpu.vector_store %arg17[%c0_138, %c0_139, %c0_140], %285 {strides = array<i32>} : memref<1x8x128xf32, #tpu.memory_space<vmem>>, vector<1x8x128xf32>,
    return
  }
  func.func @transform_0(%arg0: i32) -> (i32, i32, i32) {
    %c0_i32 = arith.constant 0 : i32
    %c0_i32_0 = arith.constant 0 : i32
    %c0_i32_1 = arith.constant 0 : i32
    return %arg0, %c0_i32, %c0_i32_0 : i32, i32, i32
  }
  func.func @transform_1(%arg0: i32) -> (i32, i32, i32) {
    %c0_i32 = arith.constant 0 : i32
    %c0_i32_0 = arith.constant 0 : i32
    %c0_i32_1 = arith.constant 0 : i32
    return %arg0, %c0_i32, %c0_i32_0 : i32, i32, i32
  }
  func.func @transform_2(%arg0: i32) -> (i32, i32, i32) {
    %c0_i32 = arith.constant 0 : i32
    %c0_i32_0 = arith.constant 0 : i32
    %c0_i32_1 = arith.constant 0 : i32
    %c0_i32_2 = arith.constant 0 : i32
    return %c0_i32, %c0_i32_0, %c0_i32_1 : i32, i32, i32
  }
  func.func @transform_3(%arg0: i32) -> (i32, i32, i32) {
    %c0_i32 = arith.constant 0 : i32
    %c0_i32_0 = arith.constant 0 : i32
    %c0_i32_1 = arith.constant 0 : i32
    %c0_i32_2 = arith.constant 0 : i32
    return %c0_i32, %c0_i32_0, %c0_i32_1 : i32, i32, i32
  }
  func.func @transform_4(%arg0: i32) -> (i32, i32, i32) {
    %c0_i32 = arith.constant 0 : i32
    %c0_i32_0 = arith.constant 0 : i32
    %c0_i32_1 = arith.constant 0 : i32
    %c0_i32_2 = arith.constant 0 : i32
    return %c0_i32, %c0_i32_0, %c0_i32_1 : i32, i32, i32
  }
  func.func @transform_5(%arg0: i32) -> (i32, i32, i32) {
    %c0_i32 = arith.constant 0 : i32
    %c0_i32_0 = arith.constant 0 : i32
    %c0_i32_1 = arith.constant 0 : i32
    %c0_i32_2 = arith.constant 0 : i32
    return %c0_i32, %c0_i32_0, %c0_i32_1 : i32, i32, i32
  }
  func.func @transform_6(%arg0: i32) -> (i32, i32, i32) {
    %c0_i32 = arith.constant 0 : i32
    %c0_i32_0 = arith.constant 0 : i32
    %c0_i32_1 = arith.constant 0 : i32
    %c0_i32_2 = arith.constant 0 : i32
    return %c0_i32, %c0_i32_0, %c0_i32_1 : i32, i32, i32
  }
  func.func @transform_7(%arg0: i32) -> (i32, i32, i32) {
    %c0_i32 = arith.constant 0 : i32
    %c0_i32_0 = arith.constant 0 : i32
    %c0_i32_1 = arith.constant 0 : i32
    %c0_i32_2 = arith.constant 0 : i32
    return %c0_i32, %c0_i32_0, %c0_i32_1 : i32, i32, i32
  }
  func.func @transform_8(%arg0: i32) -> (i32, i32, i32) {
    %c0_i32 = arith.constant 0 : i32
    %c0_i32_0 = arith.constant 0 : i32
    %c0_i32_1 = arith.constant 0 : i32
    %c0_i32_2 = arith.constant 0 : i32
    return %c0_i32, %c0_i32_0, %c0_i32_1 : i32, i32, i32
  }
  func.func @transform_9(%arg0: i32) -> (i32, i32, i32) {
    %c0_i32 = arith.constant 0 : i32
    %c0_i32_0 = arith.constant 0 : i32
    %c0_i32_1 = arith.constant 0 : i32
    %c0_i32_2 = arith.constant 0 : i32
    return %c0_i32, %c0_i32_0, %c0_i32_1 : i32, i32, i32
  }
  func.func @transform_10(%arg0: i32) -> (i32, i32, i32) {
    %c0_i32 = arith.constant 0 : i32
    %c0_i32_0 = arith.constant 0 : i32
    %c0_i32_1 = arith.constant 0 : i32
    %c0_i32_2 = arith.constant 0 : i32
    return %c0_i32, %c0_i32_0, %c0_i32_1 : i32, i32, i32
  }
  func.func @transform_11(%arg0: i32) -> (i32, i32, i32) {
    %c0_i32 = arith.constant 0 : i32
    %c0_i32_0 = arith.constant 0 : i32
    %c0_i32_1 = arith.constant 0 : i32
    %c0_i32_2 = arith.constant 0 : i32
    return %c0_i32, %c0_i32_0, %c0_i32_1 : i32, i32, i32
  }
  func.func @transform_12(%arg0: i32) -> (i32, i32, i32) {
    %c0_i32 = arith.constant 0 : i32
    %c0_i32_0 = arith.constant 0 : i32
    %c0_i32_1 = arith.constant 0 : i32
    %c0_i32_2 = arith.constant 0 : i32
    return %c0_i32, %c0_i32_0, %c0_i32_1 : i32, i32, i32
  }
  func.func @transform_13(%arg0: i32) -> (i32, i32, i32) {
    %c0_i32 = arith.constant 0 : i32
    %c0_i32_0 = arith.constant 0 : i32
    %c0_i32_1 = arith.constant 0 : i32
    %c0_i32_2 = arith.constant 0 : i32
    return %c0_i32, %c0_i32_0, %c0_i32_1 : i32, i32, i32
  }
  func.func @transform_14(%arg0: i32) -> (i32, i32) {
    %c0_i32 = arith.constant 0 : i32
    %c0_i32_0 = arith.constant 0 : i32
    %c0_i32_1 = arith.constant 0 : i32
    return %c0_i32, %c0_i32_0 : i32, i32
  }
  func.func @transform_15(%arg0: i32) -> (i32, i32) {
    %c0_i32 = arith.constant 0 : i32
    %c0_i32_0 = arith.constant 0 : i32
    %c0_i32_1 = arith.constant 0 : i32
    return %c0_i32, %c0_i32_0 : i32, i32
  }
  func.func @transform_16(%arg0: i32) -> (i32, i32, i32) {
    %c0_i32 = arith.constant 0 : i32
    %c0_i32_0 = arith.constant 0 : i32
    %c0_i32_1 = arith.constant 0 : i32
    return %arg0, %c0_i32, %c0_i32_0 : i32, i32, i32
  }
}

</mosaic_0001>

<llo_original>
// kernel: tpu_custom_call.1
$region0: #{tpu_custom_call.1}
  #allocation0 [shape = 'u32[]', space=smem, size = 0x4, offset = 0x4, fixed_abs, tag = 'smem constant byte address 0x4 - core index']
  #allocation1 [shape = 'u32[144,128]{1,0:T(1,128)}', space=vmem, size = 0x12000, scoped, tag = 'internal scratch']
  %s0 = inlined_call_operand.hbm [shape: f32[2,8,64], index: 0, kind: input, shape index: {}]
  %s1 = inlined_call_operand.vmem [shape: f32[2,1,8], index: 1, kind: input, shape index: {}]
  %s2 = inlined_call_operand.vmem [shape: f32[2,64,192], index: 2, kind: input, shape index: {}]
  %s3 = inlined_call_operand.vmem [shape: f32[2,1,192], index: 3, kind: input, shape index: {}]
  %s4 = inlined_call_operand.vmem [shape: f32[2,64,64], index: 4, kind: input, shape index: {}]
  %s5 = inlined_call_operand.vmem [shape: f32[2,1,64], index: 5, kind: input, shape index: {}]
  %s6 = inlined_call_operand.vmem [shape: f32[2,1,64], index: 6, kind: input, shape index: {}]
  %s7 = inlined_call_operand.vmem [shape: f32[2,1,64], index: 7, kind: input, shape index: {}]
  %s8 = inlined_call_operand.hbm [shape: f32[2,64,128], index: 8, kind: input, shape index: {}]
  %s9 = inlined_call_operand.vmem [shape: f32[2,1,128], index: 9, kind: input, shape index: {}]
  %s10 = inlined_call_operand.vmem [shape: f32[2,128,64], index: 10, kind: input, shape index: {}]
  %s11 = inlined_call_operand.vmem [shape: f32[2,1,64], index: 11, kind: input, shape index: {}]
  %s12 = inlined_call_operand.vmem [shape: f32[2,1,64], index: 12, kind: input, shape index: {}]
  %s13 = inlined_call_operand.vmem [shape: f32[2,1,64], index: 13, kind: input, shape index: {}]
  %s14 = inlined_call_operand.hbm [shape: f32[64,128], index: 14, kind: input, shape index: {}]
  %s15 = inlined_call_operand.vmem [shape: f32[1,128], index: 15, kind: input, shape index: {}]
  %s16 = inlined_call_operand.hbm [shape: f32[2,8,128], index: 16, kind: output, shape index: {}]
  %s17 = sld [smem:[#allocation0]]
  $region109: #{tpu_custom_call.1} parent=0
    _
  %s19 = ssub.s32 1, %s17
  %s20 = scalar_select 0, %s19, %s17
  $region1: #{tpu_custom_call.1} parent=0
    #allocation2 [shape = 'u8[8192]{0}', space=vmem, size = 0x2000, scoped, tag = 'input window, operand 0']
    #allocation3 [shape = 's32[2]{0}', space=sflag, size = 0x8, scoped, tag = 'scoped memory for tpu_custom_call.1']
    #allocation4 [shape = 's32[2]{0}', space=sflag, size = 0x8, scoped, tag = 'scoped memory for tpu_custom_call.1']
    #allocation5 [shape = 'u8[65536]{0}', space=vmem, size = 0x10000, scoped, tag = 'input window, operand 8, single buffered']
    #allocation6 [shape = 's32[1]{0}', space=sflag, size = 0x4, scoped, tag = 'scoped memory for tpu_custom_call.1']
    #allocation7 [shape = 'u8[32768]{0}', space=vmem, size = 0x8000, scoped, tag = 'input window, operand 14, single buffered']
    #allocation8 [shape = 'u8[8192]{0}', space=vmem, size = 0x2000, scoped, tag = 'output window, operand 0']
    %21 = vsyncpa [#allocation3], 0
    %s22 = scalar_lea.sflag [#allocation3], 1
    %23 = vsyncpa %s22, 0
    %24 = vsyncpa [#allocation6], 0
    %25 = vsyncpa [#allocation4], 0
    %s26 = scalar_lea.sflag [#allocation4], 1
    %27 = vsyncpa %s26, 0
    loop: start=0, step=1, limit=4
    $region2: #{tpu_custom_call.1} parent=1 // loop_pre_header
      _
    $region3: #{tpu_custom_call.1} parent=1 // loop_header
      %s29 = sphi 0, %s33
      %p30 = scmp.ge.s32.totalorder %s29, 4
      %s39 = sphi 0, %s41
      %s42 = sphi 0, %s39
      %s43 = sphi 0, %s42
      %s59 = sphi 0, %s43
      %s65 = sphi 0, %s67
      %s68 = sphi 0, %s65
      %s69 = sphi 0, %s68
      %s85 = sphi 0, %s69
      %s89 = sphi 0, %s89
      %s91 = sphi 0, %s89
      %s92 = sphi 0, %s91
      %s106 = sphi 0, %s92
      %s110 = sphi 0, %s110
      %s112 = sphi 0, %s110
      %s113 = sphi 0, %s112
      %s127 = sphi 0, %s113
      %s131 = sphi 0, %s131
      %s133 = sphi 0, %s131
      %s134 = sphi 0, %s133
      %s148 = sphi 0, %s134
      %s152 = sphi 0, %s152
      %s154 = sphi 0, %s152
      %s155 = sphi 0, %s154
      %s169 = sphi 0, %s155
      %s173 = sphi 0, %s173
      %s175 = sphi 0, %s173
      %s176 = sphi 0, %s175
      %s190 = sphi 0, %s176
      %s194 = sphi 0, %s194
      %s196 = sphi 0, %s194
      %s197 = sphi 0, %s196
      %s211 = sphi 0, %s197
      %s215 = sphi 0, %s215
      %s217 = sphi 0, %s215
      %s218 = sphi 0, %s217
      %s232 = sphi 0, %s218
      %s236 = sphi 0, %s236
      %s238 = sphi 0, %s236
      %s239 = sphi 0, %s238
      %s253 = sphi 0, %s239
      %s257 = sphi 0, %s257
      %s259 = sphi 0, %s257
      %s260 = sphi 0, %s259
      %s274 = sphi 0, %s260
      %s278 = sphi 0, %s278
      %s280 = sphi 0, %s278
      %s281 = sphi 0, %s280
      %s295 = sphi 0, %s281
      %s299 = sphi 0, %s299
      %s301 = sphi 0, %s299
      %s302 = sphi 0, %s301
      %s316 = sphi 0, %s302
      %s320 = sphi 0, %s320
      %s322 = sphi 0, %s320
      %s323 = sphi 0, %s322
      %s337 = sphi 0, %s323
      %s341 = sphi 0, %s341
      %s343 = sphi 0, %s341
      %s344 = sphi 0, %s343
      %s358 = sphi 0, %s344
      %s362 = sphi 0, %s362
      %s364 = sphi 0, %s362
      %s365 = sphi 0, %s364
      %s379 = sphi 0, %s365
      %s385 = sphi 0, %s387
      %s388 = sphi 0, %s385
      %s389 = sphi 0, %s388
      %s405 = sphi 0, %s389
    $region4: #{tpu_custom_call.1} parent=1 // loop_header_branch
      %32 = sbr.rel (%p30) target = $region8
    $region5: #{tpu_custom_call.1} parent=1 // loop_body
      %s34 = ssub.s32 %s29, 1
      %s35 = ssub.s32 %s29, 2
      %s36 = sadd.s32 %s29, 1
      %s37 = ssub.s32 %s29, %s36
      %p38 = scmp.eq.s32.totalorder %s37, 0
      %s40 = sadd.s32 %s39, 1
      %s41 = scalar_select %p38, %s39, %s40
      %p44 = pneg %p38
      %p45 = scmp.eq.s32.totalorder %s29, 1
      %p46 = por %p44, %p45
      %p47 = scmp.ne.s32.totalorder %s39, %s42
      %p48 = scmp.eq.s32.totalorder %s29, 0
      %p49 = por %p47, %p48
      %p50 = scmp.ne.s32.totalorder %s39, %s42
      %p51 = scmp.eq.s32.totalorder %s34, 1
      %p52 = por %p50, %p51
      %p53 = scmp.ne.s32.totalorder %s42, %s43
      %p54 = scmp.eq.s32.totalorder %s34, 0
      %p55 = por %p53, %p54
      %p56 = scmp.ne.s32.totalorder %s42, %s43
      %p57 = scmp.eq.s32.totalorder %s35, 1
      %p58 = por %p56, %p57
      %p60 = scmp.ne.s32.totalorder %s43, %s59
      %p61 = scmp.eq.s32.totalorder %s35, 0
      %p62 = por %p60, %p61
      %s63 = ssub.s32 %s29, %s36
      %p64 = scmp.eq.s32.totalorder %s63, 0
      %s66 = sadd.s32 %s65, 1
      %s67 = scalar_select %p64, %s65, %s66
      %p70 = pneg %p64
      %p71 = scmp.eq.s32.totalorder %s29, 1
      %p72 = por %p70, %p71
      %p73 = scmp.ne.s32.totalorder %s65, %s68
      %p74 = scmp.eq.s32.totalorder %s29, 0
      %p75 = por %p73, %p74
      %p76 = scmp.ne.s32.totalorder %s65, %s68
      %p77 = scmp.eq.s32.totalorder %s34, 1
      %p78 = por %p76, %p77
      %p79 = scmp.ne.s32.totalorder %s68, %s69
      %p80 = scmp.eq.s32.totalorder %s34, 0
      %p81 = por %p79, %p80
      %p82 = scmp.ne.s32.totalorder %s68, %s69
      %p83 = scmp.eq.s32.totalorder %s35, 1
      %p84 = por %p82, %p83
      %p86 = scmp.ne.s32.totalorder %s69, %s85
      %p87 = scmp.eq.s32.totalorder %s35, 0
      %p88 = por %p86, %p87
      %s90 = sadd.s32 %s89, 1
      %p93 = scmp.eq.s32.totalorder %s29, 1
      %p94 = scmp.ne.s32.totalorder %s89, %s91
      %p95 = scmp.eq.s32.totalorder %s29, 0
      %p96 = por %p94, %p95
      %p97 = scmp.ne.s32.totalorder %s89, %s91
      %p98 = scmp.eq.s32.totalorder %s34, 1
      %p99 = por %p97, %p98
      %p100 = scmp.ne.s32.totalorder %s91, %s92
      %p101 = scmp.eq.s32.totalorder %s34, 0
      %p102 = por %p100, %p101
      %p103 = scmp.ne.s32.totalorder %s91, %s92
      %p104 = scmp.eq.s32.totalorder %s35, 1
      %p105 = por %p103, %p104
      %p107 = scmp.ne.s32.totalorder %s92, %s106
      %p108 = scmp.eq.s32.totalorder %s35, 0
      %p109 = por %p107, %p108
      %s111 = sadd.s32 %s110, 1
      %p114 = scmp.eq.s32.totalorder %s29, 1
      %p115 = scmp.ne.s32.totalorder %s110, %s112
      %p116 = scmp.eq.s32.totalorder %s29, 0
      %p117 = por %p115, %p116
      %p118 = scmp.ne.s32.totalorder %s110, %s112
      %p119 = scmp.eq.s32.totalorder %s34, 1
      %p120 = por %p118, %p119
      %p121 = scmp.ne.s32.totalorder %s112, %s113
      %p122 = scmp.eq.s32.totalorder %s34, 0
      %p123 = por %p121, %p122
      %p124 = scmp.ne.s32.totalorder %s112, %s113
      %p125 = scmp.eq.s32.totalorder %s35, 1
      %p126 = por %p124, %p125
      %p128 = scmp.ne.s32.totalorder %s113, %s127
      %p129 = scmp.eq.s32.totalorder %s35, 0
      %p130 = por %p128, %p129
      %s132 = sadd.s32 %s131, 1
      %p135 = scmp.eq.s32.totalorder %s29, 1
      %p136 = scmp.ne.s32.totalorder %s131, %s133
      %p137 = scmp.eq.s32.totalorder %s29, 0
      %p138 = por %p136, %p137
      %p139 = scmp.ne.s32.totalorder %s131, %s133
      %p140 = scmp.eq.s32.totalorder %s34, 1
      %p141 = por %p139, %p140
      %p142 = scmp.ne.s32.totalorder %s133, %s134
      %p143 = scmp.eq.s32.totalorder %s34, 0
      %p144 = por %p142, %p143
      %p145 = scmp.ne.s32.totalorder %s133, %s134
      %p146 = scmp.eq.s32.totalorder %s35, 1
      %p147 = por %p145, %p146
      %p149 = scmp.ne.s32.totalorder %s134, %s148
      %p150 = scmp.eq.s32.totalorder %s35, 0
      %p151 = por %p149, %p150
      %s153 = sadd.s32 %s152, 1
      %p156 = scmp.eq.s32.totalorder %s29, 1
      %p157 = scmp.ne.s32.totalorder %s152, %s154
      %p158 = scmp.eq.s32.totalorder %s29, 0
      %p159 = por %p157, %p158
      %p160 = scmp.ne.s32.totalorder %s152, %s154
      %p161 = scmp.eq.s32.totalorder %s34, 1
      %p162 = por %p160, %p161
      %p163 = scmp.ne.s32.totalorder %s154, %s155
      %p164 = scmp.eq.s32.totalorder %s34, 0
      %p165 = por %p163, %p164
      %p166 = scmp.ne.s32.totalorder %s154, %s155
      %p167 = scmp.eq.s32.totalorder %s35, 1
      %p168 = por %p166, %p167
      %p170 = scmp.ne.s32.totalorder %s155, %s169
      %p171 = scmp.eq.s32.totalorder %s35, 0
      %p172 = por %p170, %p171
      %s174 = sadd.s32 %s173, 1
      %p177 = scmp.eq.s32.totalorder %s29, 1
      %p178 = scmp.ne.s32.totalorder %s173, %s175
      %p179 = scmp.eq.s32.totalorder %s29, 0
      %p180 = por %p178, %p179
      %p181 = scmp.ne.s32.totalorder %s173, %s175
      %p182 = scmp.eq.s32.totalorder %s34, 1
      %p183 = por %p181, %p182
      %p184 = scmp.ne.s32.totalorder %s175, %s176
      %p185 = scmp.eq.s32.totalorder %s34, 0
      %p186 = por %p184, %p185
      %p187 = scmp.ne.s32.totalorder %s175, %s176
      %p188 = scmp.eq.s32.totalorder %s35, 1
      %p189 = por %p187, %p188
      %p191 = scmp.ne.s32.totalorder %s176, %s190
      %p192 = scmp.eq.s32.totalorder %s35, 0
      %p193 = por %p191, %p192
      %s195 = sadd.s32 %s194, 1
      %p198 = scmp.eq.s32.totalorder %s29, 1
      %p199 = scmp.ne.s32.totalorder %s194, %s196
      %p200 = scmp.eq.s32.totalorder %s29, 0
      %p201 = por %p199, %p200
      %p202 = scmp.ne.s32.totalorder %s194, %s196
      %p203 = scmp.eq.s32.totalorder %s34, 1
      %p204 = por %p202, %p203
      %p205 = scmp.ne.s32.totalorder %s196, %s197
      %p206 = scmp.eq.s32.totalorder %s34, 0
      %p207 = por %p205, %p206
      %p208 = scmp.ne.s32.totalorder %s196, %s197
      %p209 = scmp.eq.s32.totalorder %s35, 1
      %p210 = por %p208, %p209
      %p212 = scmp.ne.s32.totalorder %s197, %s211
      %p213 = scmp.eq.s32.totalorder %s35, 0
      %p214 = por %p212, %p213
      %s216 = sadd.s32 %s215, 1
      %p219 = scmp.eq.s32.totalorder %s29, 1
      %p220 = scmp.ne.s32.totalorder %s215, %s217
      %p221 = scmp.eq.s32.totalorder %s29, 0
      %p222 = por %p220, %p221
      %p223 = scmp.ne.s32.totalorder %s215, %s217
      %p224 = scmp.eq.s32.totalorder %s34, 1
      %p225 = por %p223, %p224
      %p226 = scmp.ne.s32.totalorder %s217, %s218
      %p227 = scmp.eq.s32.totalorder %s34, 0
      %p228 = por %p226, %p227
      %p229 = scmp.ne.s32.totalorder %s217, %s218
      %p230 = scmp.eq.s32.totalorder %s35, 1
      %p231 = por %p229, %p230
      %p233 = scmp.ne.s32.totalorder %s218, %s232
      %p234 = scmp.eq.s32.totalorder %s35, 0
      %p235 = por %p233, %p234
      %s237 = sadd.s32 %s236, 1
      %p240 = scmp.eq.s32.totalorder %s29, 1
      %p241 = scmp.ne.s32.totalorder %s236, %s238
      %p242 = scmp.eq.s32.totalorder %s29, 0
      %p243 = por %p241, %p242
      %p244 = scmp.ne.s32.totalorder %s236, %s238
      %p245 = scmp.eq.s32.totalorder %s34, 1
      %p246 = por %p244, %p245
      %p247 = scmp.ne.s32.totalorder %s238, %s239
      %p248 = scmp.eq.s32.totalorder %s34, 0
      %p249 = por %p247, %p248
      %p250 = scmp.ne.s32.totalorder %s238, %s239
      %p251 = scmp.eq.s32.totalorder %s35, 1
      %p252 = por %p250, %p251
      %p254 = scmp.ne.s32.totalorder %s239, %s253
      %p255 = scmp.eq.s32.totalorder %s35, 0
      %p256 = por %p254, %p255
      %s258 = sadd.s32 %s257, 1
      %p261 = scmp.eq.s32.totalorder %s29, 1
      %p262 = scmp.ne.s32.totalorder %s257, %s259
      %p263 = scmp.eq.s32.totalorder %s29, 0
      %p264 = por %p262, %p263
      %p265 = scmp.ne.s32.totalorder %s257, %s259
      %p266 = scmp.eq.s32.totalorder %s34, 1
      %p267 = por %p265, %p266
      %p268 = scmp.ne.s32.totalorder %s259, %s260
      %p269 = scmp.eq.s32.totalorder %s34, 0
      %p270 = por %p268, %p269
      %p271 = scmp.ne.s32.totalorder %s259, %s260
      %p272 = scmp.eq.s32.totalorder %s35, 1
      %p273 = por %p271, %p272
      %p275 = scmp.ne.s32.totalorder %s260, %s274
      %p276 = scmp.eq.s32.totalorder %s35, 0
      %p277 = por %p275, %p276
      %s279 = sadd.s32 %s278, 1
      %p282 = scmp.eq.s32.totalorder %s29, 1
      %p283 = scmp.ne.s32.totalorder %s278, %s280
      %p284 = scmp.eq.s32.totalorder %s29, 0
      %p285 = por %p283, %p284
      %p286 = scmp.ne.s32.totalorder %s278, %s280
      %p287 = scmp.eq.s32.totalorder %s34, 1
      %p288 = por %p286, %p287
      %p289 = scmp.ne.s32.totalorder %s280, %s281
      %p290 = scmp.eq.s32.totalorder %s34, 0
      %p291 = por %p289, %p290
      %p292 = scmp.ne.s32.totalorder %s280, %s281
      %p293 = scmp.eq.s32.totalorder %s35, 1
      %p294 = por %p292, %p293
      %p296 = scmp.ne.s32.totalorder %s281, %s295
      %p297 = scmp.eq.s32.totalorder %s35, 0
      %p298 = por %p296, %p297
      %s300 = sadd.s32 %s299, 1
      %p303 = scmp.eq.s32.totalorder %s29, 1
      %p304 = scmp.ne.s32.totalorder %s299, %s301
      %p305 = scmp.eq.s32.totalorder %s29, 0
      %p306 = por %p304, %p305
      %p307 = scmp.ne.s32.totalorder %s299, %s301
      %p308 = scmp.eq.s32.totalorder %s34, 1
      %p309 = por %p307, %p308
      %p310 = scmp.ne.s32.totalorder %s301, %s302
      %p311 = scmp.eq.s32.totalorder %s34, 0
      %p312 = por %p310, %p311
      %p313 = scmp.ne.s32.totalorder %s301, %s302
      %p314 = scmp.eq.s32.totalorder %s35, 1
      %p315 = por %p313, %p314
      %p317 = scmp.ne.s32.totalorder %s302, %s316
      %p318 = scmp.eq.s32.totalorder %s35, 0
      %p319 = por %p317, %p318
      %s321 = sadd.s32 %s320, 1
      %p324 = scmp.eq.s32.totalorder %s29, 1
      %p325 = scmp.ne.s32.totalorder %s320, %s322
      %p326 = scmp.eq.s32.totalorder %s29, 0
      %p327 = por %p325, %p326
      %p328 = scmp.ne.s32.totalorder %s320, %s322
      %p329 = scmp.eq.s32.totalorder %s34, 1
      %p330 = por %p328, %p329
      %p331 = scmp.ne.s32.totalorder %s322, %s323
      %p332 = scmp.eq.s32.totalorder %s34, 0
      %p333 = por %p331, %p332
      %p334 = scmp.ne.s32.totalorder %s322, %s323
      %p335 = scmp.eq.s32.totalorder %s35, 1
      %p336 = por %p334, %p335
      %p338 = scmp.ne.s32.totalorder %s323, %s337
      %p339 = scmp.eq.s32.totalorder %s35, 0
      %p340 = por %p338, %p339
      %s342 = sadd.s32 %s341, 1
      %p345 = scmp.eq.s32.totalorder %s29, 1
      %p346 = scmp.ne.s32.totalorder %s341, %s343
      %p347 = scmp.eq.s32.totalorder %s29, 0
      %p348 = por %p346, %p347
      %p349 = scmp.ne.s32.totalorder %s341, %s343
      %p350 = scmp.eq.s32.totalorder %s34, 1
      %p351 = por %p349, %p350
      %p352 = scmp.ne.s32.totalorder %s343, %s344
      %p353 = scmp.eq.s32.totalorder %s34, 0
      %p354 = por %p352, %p353
      %p355 = scmp.ne.s32.totalorder %s343, %s344
      %p356 = scmp.eq.s32.totalorder %s35, 1
      %p357 = por %p355, %p356
      %p359 = scmp.ne.s32.totalorder %s344, %s358
      %p360 = scmp.eq.s32.totalorder %s35, 0
      %p361 = por %p359, %p360
      %s363 = sadd.s32 %s362, 1
      %p366 = scmp.eq.s32.totalorder %s29, 1
      %p367 = scmp.ne.s32.totalorder %s362, %s364
      %p368 = scmp.eq.s32.totalorder %s29, 0
      %p369 = por %p367, %p368
      %p370 = scmp.ne.s32.totalorder %s362, %s364
      %p371 = scmp.eq.s32.totalorder %s34, 1
      %p372 = por %p370, %p371
      %p373 = scmp.ne.s32.totalorder %s364, %s365
      %p374 = scmp.eq.s32.totalorder %s34, 0
      %p375 = por %p373, %p374
      %p376 = scmp.ne.s32.totalorder %s364, %s365
      %p377 = scmp.eq.s32.totalorder %s35, 1
      %p378 = por %p376, %p377
      %p380 = scmp.ne.s32.totalorder %s365, %s379
      %p381 = scmp.eq.s32.totalorder %s35, 0
      %p382 = por %p380, %p381
      %s383 = ssub.s32 %s29, %s36
      %p384 = scmp.eq.s32.totalorder %s383, 0
      %s386 = sadd.s32 %s385, 1
      %s387 = scalar_select %p384, %s385, %s386
      %p390 = pneg %p384
      %p391 = scmp.eq.s32.totalorder %s29, 1
      %p392 = por %p390, %p391
      %p393 = scmp.ne.s32.totalorder %s385, %s388
      %p394 = scmp.eq.s32.totalorder %s29, 0
      %p395 = por %p393, %p394
      %p396 = scmp.ne.s32.totalorder %s385, %s388
      %p397 = scmp.eq.s32.totalorder %s34, 1
      %p398 = por %p396, %p397
      %p399 = scmp.ne.s32.totalorder %s388, %s389
      %p400 = scmp.eq.s32.totalorder %s34, 0
      %p401 = por %p399, %p400
      %p402 = scmp.ne.s32.totalorder %s388, %s389
      %p403 = scmp.eq.s32.totalorder %s35, 1
      %p404 = por %p402, %p403
      %p406 = scmp.ne.s32.totalorder %s389, %s405
      %p407 = scmp.eq.s32.totalorder %s35, 0
      %p408 = por %p406, %p407
      %p409 = scmp.le.s32.totalorder 1, %s29
      %p410 = scmp.lt.s32.totalorder %s29, 3
      %p411 = pnand %p409, %p410
      %p412 = pneg %p411
      // Predicated region
      $region9: #{tpu_custom_call.1} parent=5 // pred_check
        _
      $region10: #{tpu_custom_call.1} parent=5 // pred_check_branch
        %414 = sbr.rel (%p411) target = $region12
      $region11: #{tpu_custom_call.1} parent=5 // pred_region
        %s415 = ssub.s32 %s29, 1
        // Predicated region
        $region13: #{tpu_custom_call.1} parent=11 // pred_check
          %p416 = pneg %p102
        $region14: #{tpu_custom_call.1} parent=11 // pred_check_branch
          %418 = sbr.rel (%p416) target = $region16
        $region15: #{tpu_custom_call.1} parent=11 // pred_region
          _
        $region16: #{tpu_custom_call.1} parent=11 // pred_fallthru
          _
        // Predicated region
        $region17: #{tpu_custom_call.1} parent=11 // pred_check
          %p419 = pneg %p123
        $region18: #{tpu_custom_call.1} parent=11 // pred_check_branch
          %421 = sbr.rel (%p419) target = $region20
        $region19: #{tpu_custom_call.1} parent=11 // pred_region
          _
        $region20: #{tpu_custom_call.1} parent=11 // pred_fallthru
          _
        // Predicated region
        $region21: #{tpu_custom_call.1} parent=11 // pred_check
          %p422 = pneg %p144
        $region22: #{tpu_custom_call.1} parent=11 // pred_check_branch
          %424 = sbr.rel (%p422) target = $region24
        $region23: #{tpu_custom_call.1} parent=11 // pred_region
          _
        $region24: #{tpu_custom_call.1} parent=11 // pred_fallthru
          _
        // Predicated region
        $region25: #{tpu_custom_call.1} parent=11 // pred_check
          %p425 = pneg %p165
        $region26: #{tpu_custom_call.1} parent=11 // pred_check_branch
          %427 = sbr.rel (%p425) target = $region28
        $region27: #{tpu_custom_call.1} parent=11 // pred_region
          _
        $region28: #{tpu_custom_call.1} parent=11 // pred_fallthru
          _
        // Predicated region
        $region29: #{tpu_custom_call.1} parent=11 // pred_check
          %p428 = pneg %p186
        $region30: #{tpu_custom_call.1} parent=11 // pred_check_branch
          %430 = sbr.rel (%p428) target = $region32
        $region31: #{tpu_custom_call.1} parent=11 // pred_region
          _
        $region32: #{tpu_custom_call.1} parent=11 // pred_fallthru
          _
        // Predicated region
        $region33: #{tpu_custom_call.1} parent=11 // pred_check
          %p431 = pneg %p207
        $region34: #{tpu_custom_call.1} parent=11 // pred_check_branch
          %433 = sbr.rel (%p431) target = $region36
        $region35: #{tpu_custom_call.1} parent=11 // pred_region
          _
        $region36: #{tpu_custom_call.1} parent=11 // pred_fallthru
          _
        // Predicated region
        $region37: #{tpu_custom_call.1} parent=11 // pred_check
          %p434 = pneg %p228
        $region38: #{tpu_custom_call.1} parent=11 // pred_check_branch
          %436 = sbr.rel (%p434) target = $region40
        $region39: #{tpu_custom_call.1} parent=11 // pred_region
          %s438 = ssub.s32 2048, 2048
          %439 = vsyncadd [#allocation6], %s438
          %s440 = sshll.u32 [#allocation5], 4
          %s441 = int_to_ptr.vmem [resolvable:$true] %s440
          %446 = dma.hbm_to_vmem [thread:$0]  %s8, 2048, %s441, [#allocation6], 128, 128, 8
        $region40: #{tpu_custom_call.1} parent=11 // pred_fallthru
          _
        // Predicated region
        $region41: #{tpu_custom_call.1} parent=11 // pred_check
          %p447 = pneg %p249
        $region42: #{tpu_custom_call.1} parent=11 // pred_check_branch
          %449 = sbr.rel (%p447) target = $region44
        $region43: #{tpu_custom_call.1} parent=11 // pred_region
          _
        $region44: #{tpu_custom_call.1} parent=11 // pred_fallthru
          _
        // Predicated region
        $region45: #{tpu_custom_call.1} parent=11 // pred_check
          %p450 = pneg %p270
        $region46: #{tpu_custom_call.1} parent=11 // pred_check_branch
          %452 = sbr.rel (%p450) target = $region48
        $region47: #{tpu_custom_call.1} parent=11 // pred_region
          _
        $region48: #{tpu_custom_call.1} parent=11 // pred_fallthru
          _
        // Predicated region
        $region49: #{tpu_custom_call.1} parent=11 // pred_check
          %p453 = pneg %p291
        $region50: #{tpu_custom_call.1} parent=11 // pred_check_branch
          %455 = sbr.rel (%p453) target = $region52
        $region51: #{tpu_custom_call.1} parent=11 // pred_region
          _
        $region52: #{tpu_custom_call.1} parent=11 // pred_fallthru
          _
        // Predicated region
        $region53: #{tpu_custom_call.1} parent=11 // pred_check
          %p456 = pneg %p312
        $region54: #{tpu_custom_call.1} parent=11 // pred_check_branch
          %458 = sbr.rel (%p456) target = $region56
        $region55: #{tpu_custom_call.1} parent=11 // pred_region
          _
        $region56: #{tpu_custom_call.1} parent=11 // pred_fallthru
          _
        // Predicated region
        $region57: #{tpu_custom_call.1} parent=11 // pred_check
          %p459 = pneg %p333
        $region58: #{tpu_custom_call.1} parent=11 // pred_check_branch
          %461 = sbr.rel (%p459) target = $region60
        $region59: #{tpu_custom_call.1} parent=11 // pred_region
          _
        $region60: #{tpu_custom_call.1} parent=11 // pred_fallthru
          _
        // Predicated region
        $region61: #{tpu_custom_call.1} parent=11 // pred_check
          %p462 = pneg %p354
        $region62: #{tpu_custom_call.1} parent=11 // pred_check_branch
          %464 = sbr.rel (%p462) target = $region64
        $region63: #{tpu_custom_call.1} parent=11 // pred_region
          %s466 = ssub.s32 1024, 1024
          %467 = vsyncadd [#allocation6], %s466
          %s468 = sshll.u32 [#allocation7], 4
          %s469 = int_to_ptr.vmem [resolvable:$true] %s468
          %474 = dma.hbm_to_vmem [thread:$0]  %s14, 1024, %s469, [#allocation6], 128, 128, 8
        $region64: #{tpu_custom_call.1} parent=11 // pred_fallthru
          _
        // Predicated region
        $region65: #{tpu_custom_call.1} parent=11 // pred_check
          %p475 = pneg %p375
        $region66: #{tpu_custom_call.1} parent=11 // pred_check_branch
          %477 = sbr.rel (%p475) target = $region68
        $region67: #{tpu_custom_call.1} parent=11 // pred_region
          _
        $region68: #{tpu_custom_call.1} parent=11 // pred_fallthru
          _
      $region12: #{tpu_custom_call.1} parent=5 // pred_fallthru
        _
      %p478 = scmp.lt.s32.totalorder %s29, 2
      // Predicated region
      $region69: #{tpu_custom_call.1} parent=5 // pred_check
        %p479 = pneg %p478
      $region70: #{tpu_custom_call.1} parent=5 // pred_check_branch
        %481 = sbr.rel (%p479) target = $region72
      $region71: #{tpu_custom_call.1} parent=5 // pred_region
        // Predicated region
        $region73: #{tpu_custom_call.1} parent=71 // pred_check
          %p482 = pneg %p49
        $region74: #{tpu_custom_call.1} parent=71 // pred_check_branch
          %484 = sbr.rel (%p482) target = $region76
        $region75: #{tpu_custom_call.1} parent=71 // pred_region
          %s485 = sand.u32 %s39, 1
          %s486 = scalar_lea.sflag [#allocation3], %s485
          %s487 = sand.u32 %s39, 1
          %s488 = smul.addr %s487, 8
          %s489 = scalar_lea.vmem [#allocation2], %s488
          %s491 = ssub.s32 128, 128
          %492 = vsyncadd %s486, %s491
          %s493 = smul.addr %s29, 128
          %s494 = scalar_lea.hbm %s0, %s493
          %s496 = sshll.u32 %s489, 4
          %s497 = int_to_ptr.vmem [resolvable:$true] %s496
          %499 = dma.hbm_to_vmem [thread:$0]  %s494, 128, %s497, %s486
        $region76: #{tpu_custom_call.1} parent=71 // pred_fallthru
          _
        // Predicated region
        $region77: #{tpu_custom_call.1} parent=71 // pred_check
          %p500 = pneg %p75
        $region78: #{tpu_custom_call.1} parent=71 // pred_check_branch
          %502 = sbr.rel (%p500) target = $region80
        $region79: #{tpu_custom_call.1} parent=71 // pred_region
          %p503 = scmp.lt.s32.totalorder %s29, 1
          %s504 = scalar_select %p503, %s29, 1
          %s505 = scalar_lea.vmem %s1, %s504
        $region80: #{tpu_custom_call.1} parent=71 // pred_fallthru
          _
      $region72: #{tpu_custom_call.1} parent=5 // pred_fallthru
        _
      %p506 = scmp.le.s32.totalorder 1, %s29
      %p507 = scmp.lt.s32.totalorder %s29, 3
      %p508 = pnand %p506, %p507
      %p509 = pneg %p508
      // Predicated region
      $region81: #{tpu_custom_call.1} parent=5 // pred_check
        _
      $region82: #{tpu_custom_call.1} parent=5 // pred_check_branch
        %511 = sbr.rel (%p508) target = $region84
      $region83: #{tpu_custom_call.1} parent=5 // pred_region
        %s512 = ssub.s32 %s29, 1
        %s513 = sand.u32 %s42, 1
        %s514 = scalar_lea.sflag [#allocation3], %s513
        %s515 = sand.u32 %s42, 1
        %s516 = smul.addr %s515, 8
        %s517 = scalar_lea.vmem [#allocation2], %s516
        // Predicated region
        $region85: #{tpu_custom_call.1} parent=83 // pred_check
          %p518 = pneg %p55
        $region86: #{tpu_custom_call.1} parent=83 // pred_check_branch
          %520 = sbr.rel (%p518) target = $region88
        $region87: #{tpu_custom_call.1} parent=83 // pred_region
          %521 = dma.done %s514, 128
        $region88: #{tpu_custom_call.1} parent=83 // pred_fallthru
          _
        // Predicated region
        $region89: #{tpu_custom_call.1} parent=83 // pred_check
          %p522 = pneg %p228
        $region90: #{tpu_custom_call.1} parent=83 // pred_check_branch
          %524 = sbr.rel (%p522) target = $region92
        $region91: #{tpu_custom_call.1} parent=83 // pred_region
          %525 = dma.done [#allocation6], 2048
        $region92: #{tpu_custom_call.1} parent=83 // pred_fallthru
          _
        // Predicated region
        $region93: #{tpu_custom_call.1} parent=83 // pred_check
          %p526 = pneg %p354
        $region94: #{tpu_custom_call.1} parent=83 // pred_check_branch
          %528 = sbr.rel (%p526) target = $region96
        $region95: #{tpu_custom_call.1} parent=83 // pred_region
          %529 = dma.done [#allocation6], 1024
        $region96: #{tpu_custom_call.1} parent=83 // pred_fallthru
          _
        %s530 = sand.u32 %s42, 1
        %s531 = scalar_lea.sflag [#allocation3], %s530
        %s532 = sand.u32 %s42, 1
        %s533 = smul.addr %s532, 8
        %s534 = scalar_lea.vmem [#allocation2], %s533
        %p535 = pneg %p55
        %p536 = pneg %p52
        %p537 = scmp.lt.s32.totalorder %s34, 1
        %s538 = scalar_select %p537, %s34, 1
        %s539 = scalar_lea.vmem %s1, %s538
        %p540 = pneg %p81
        %p541 = pneg %p78
        %p542 = pneg %p102
        %p543 = pneg %p99
        %p544 = pneg %p123
        %p545 = pneg %p120
        %p546 = pneg %p144
        %p547 = pneg %p141
        %p548 = pneg %p165
        %p549 = pneg %p162
        %p550 = pneg %p186
        %p551 = pneg %p183
        %p552 = pneg %p207
        %p553 = pneg %p204
        %p554 = pneg %p228
        %p555 = pneg %p225
        %p556 = pneg %p249
        %p557 = pneg %p246
        %p558 = pneg %p270
        %p559 = pneg %p267
        %p560 = pneg %p291
        %p561 = pneg %p288
        %p562 = pneg %p312
        %p563 = pneg %p309
        %p564 = pneg %p333
        %p565 = pneg %p330
        %p566 = pneg %p354
        %p567 = pneg %p351
        %p568 = pneg %p375
        %p569 = pneg %p372
        %p570 = pneg %p401
        %p571 = pneg %p398
        %s572 = sand.u32 %s388, 1
        %s573 = scalar_lea.sflag [#allocation4], %s572
        %s574 = sand.u32 %s388, 1
        %s575 = smul.addr %s574, 8
        %s576 = scalar_lea.vmem [#allocation8], %s575
        %p577 = scmp.lt.s32.totalorder %s34, 1
        %s578 = scalar_select %p577, %s34, 1
        %s579 = scalar_lea.vmem %s1, %s578
        %v580 = vld [vmem:[%s517] sm:$0xff]
        %v581 = vld [vmem:[%s579] sm:$0x1]
        %v582 = vld [vmem:[%s2] sm:$0xff]
        %v583 = vld [vmem:[%s2 + $0x8] sm:$0xff]
        %v584 = vld [vmem:[%s2 + $0x10] sm:$0xff]
        %v585 = vld [vmem:[%s2 + $0x18] sm:$0xff]
        %v586 = vld [vmem:[%s2 + $0x20] sm:$0xff]
        %v587 = vld [vmem:[%s2 + $0x28] sm:$0xff]
        %v588 = vld [vmem:[%s2 + $0x30] sm:$0xff]
        %v589 = vld [vmem:[%s2 + $0x38] sm:$0xff]
        %v590 = vld [vmem:[%s2 + $0x40] sm:$0xff]
        %v591 = vld [vmem:[%s2 + $0x48] sm:$0xff]
        %v592 = vld [vmem:[%s2 + $0x50] sm:$0xff]
        %v593 = vld [vmem:[%s2 + $0x58] sm:$0xff]
        %v594 = vld [vmem:[%s2 + $0x60] sm:$0xff]
        %v595 = vld [vmem:[%s2 + $0x68] sm:$0xff]
        %v596 = vld [vmem:[%s2 + $0x70] sm:$0xff]
        %v597 = vld [vmem:[%s2 + $0x78] sm:$0xff]
        %v598 = vld [vmem:[%s3] sm:$0x3]
        %v600 = vlaneseq
        %v601 = vshrl.u32 %v600, 7
        %v602 = vsub.s32 0, %v601
        %v603 = vrot.slane %v598, %v602
        %v604 = vlaneseq
        %v605 = vshrl.u32 %v604, 7
        %v606 = vsub.s32 1, %v605
        %v607 = vrot.slane %v598, %v606
        %vm610 = vcmask 523264
        %v612 = vsel %vm610, %v580, 0
        %614 = vmatprep.subr.mxu0 %v583
        %615 = vmatpush1.msra.mxu0 %v582
        %616 = vmatprep.subr.mxu0 %v585
        %617 = vmatpush1.msra.mxu0 %v584
        %618 = vmatprep.subr.mxu0 %v587
        %619 = vmatpush1.msra.mxu0 %v586
        %620 = vmatprep.subr.mxu0 %v589
        %621 = vmatpush1.msra.mxu0 %v588
        %622 = vmatprep.subr.mxu0 %v591
        %623 = vmatpush1.msra.mxu0 %v590
        %624 = vmatprep.subr.mxu0 %v593
        %625 = vmatpush1.msra.mxu0 %v592
        %626 = vmatprep.subr.mxu0 %v595
        %627 = vmatpush1.msra.mxu0 %v594
        %628 = vmatprep.subr.mxu0 %v597
        %629 = vmatpush1.msra.mxu0 %v596
        %630 = vmatprep.subr.mxu0 0.0
        %631 = vmatpush1.msra.mxu0 0.0
        %632 = vmatprep.subr.mxu0 0.0
        %633 = vmatpush1.msra.mxu0 0.0
        %634 = vmatprep.subr.mxu0 0.0
        %635 = vmatpush1.msra.mxu0 0.0
        %636 = vmatprep.subr.mxu0 0.0
        %637 = vmatpush1.msra.mxu0 0.0
        %638 = vmatprep.subr.mxu0 0.0
        %639 = vmatpush1.msra.mxu0 0.0
        %640 = vmatprep.subr.mxu0 0.0
        %641 = vmatpush1.msra.mxu0 0.0
        %642 = vmatprep.subr.mxu0 0.0
        %643 = vmatpush1.msra.mxu0 0.0
        %644 = vmatprep.subr.mxu0 0.0
        %645 = vmatpush1.msra.mxu0 0.0
        %646 = vmatprep.subr.mxu0 0.0
        %647 = vmatpush1.msra.mxu0 0.0
        %648 = vmatprep.subr.mxu0 0.0
        %649 = vmatpush1.msra.mxu0 0.0
        %650 = vmatprep.subr.mxu0 0.0
        %651 = vmatpush1.msra.mxu0 0.0
        %652 = vmatprep.subr.mxu0 0.0
        %653 = vmatpush1.msra.mxu0 0.0
        %654 = vmatprep.subr.mxu0 0.0
        %655 = vmatpush1.msra.mxu0 0.0
        %656 = vmatprep.subr.mxu0 0.0
        %657 = vmatpush1.msra.mxu0 0.0
        %658 = vmatprep.subr.mxu0 0.0
        %659 = vmatpush1.msra.mxu0 0.0
        %660 = vmatprep.subr.mxu0 0.0
        %661 = vmatpush1.msra.mxu0 0.0
        %662 = vmatprep.subr.mxu0 0.0
        %663 = vmatpush1.msra.mxu0 0.0
        %664 = vmatprep.subr.mxu0 0.0
        %665 = vmatpush1.msra.mxu0 0.0
        %666 = vmatprep.subr.mxu0 0.0
        %667 = vmatpush1.msra.mxu0 0.0
        %668 = vmatprep.subr.mxu0 0.0
        %669 = vmatpush1.msra.mxu0 0.0
        %670 = vmatprep.subr.mxu0 0.0
        %671 = vmatpush1.msra.mxu0 0.0
        %672 = vmatprep.subr.mxu0 0.0
        %673 = vmatpush1.msra.mxu0 0.0
        %674 = vmatprep.subr.mxu0 0.0
        %675 = vmatpush1.msra.mxu0 0.0
        %676 = vmatprep.subr.mxu0 0.0
        %677 = vmatpush1.msra.mxu0 0.0
        %678 = vmatprep.mubr.f32.mxu0 0.0
        %679 = vmatmul.mubr.f32.gmra.mrb[0].mxu0 %v612
        %v680 = vpop.f32.mrb[0].mxu0
        %v681 = vadd.f32 %v603, %v680
        %v682 = vpop.f32.mrb[0].mxu0
        %v683 = vadd.f32 %v607, %v682
        %684 = vdwg.mxu0
        %v685 = vld [vmem:[%s4] sm:$0xff]
        %v686 = vld [vmem:[%s4 + $0x8] sm:$0xff]
        %v687 = vld [vmem:[%s4 + $0x10] sm:$0xff]
        %v688 = vld [vmem:[%s4 + $0x18] sm:$0xff]
        %v689 = vld [vmem:[%s4 + $0x20] sm:$0xff]
        %v690 = vld [vmem:[%s4 + $0x28] sm:$0xff]
        %v691 = vld [vmem:[%s4 + $0x30] sm:$0xff]
        %v692 = vld [vmem:[%s4 + $0x38] sm:$0xff]
        %694 = vrot.lane.b32.xlu0 %v681, 64
        %v695 = vpop.permute.xlu0 %694
        %vm696 = vcmask 261120
        %v697 = vsel %vm696, %v681, 0
        %v699 = vsel %vm696, %v695, 0
        %701 = vmatprep.subr.mxu0 0.0
        %702 = vmatpush1.xpose.msra.mxu0 %v699
        %703 = vmatprep.subr.mxu0 0.0
        %704 = vmatpush1.xpose.msra.mxu0 0.0
        %705 = vmatprep.subr.mxu0 0.0
        %706 = vmatpush1.xpose.msra.mxu0 0.0
        %707 = vmatprep.subr.mxu0 0.0
        %708 = vmatpush1.xpose.msra.mxu0 0.0
        %709 = vmatprep.subr.mxu0 0.0
        %710 = vmatpush1.xpose.msra.mxu0 0.0
        %711 = vmatprep.subr.mxu0 0.0
        %712 = vmatpush1.xpose.msra.mxu0 0.0
        %713 = vmatprep.subr.mxu0 0.0
        %714 = vmatpush1.xpose.msra.mxu0 0.0
        %715 = vmatprep.subr.mxu0 0.0
        %716 = vmatpush1.xpose.msra.mxu0 0.0
        %717 = vmatprep.subr.mxu0 0.0
        %718 = vmatpush1.xpose.msra.mxu0 0.0
        %719 = vmatprep.subr.mxu0 0.0
        %720 = vmatpush1.xpose.msra.mxu0 0.0
        %721 = vmatprep.subr.mxu0 0.0
        %722 = vmatpush1.xpose.msra.mxu0 0.0
        %723 = vmatprep.subr.mxu0 0.0
        %724 = vmatpush1.xpose.msra.mxu0 0.0
        %725 = vmatprep.subr.mxu0 0.0
        %726 = vmatpush1.xpose.msra.mxu0 0.0
        %727 = vmatprep.subr.mxu0 0.0
        %728 = vmatpush1.xpose.msra.mxu0 0.0
        %729 = vmatprep.subr.mxu0 0.0
        %730 = vmatpush1.xpose.msra.mxu0 0.0
        %731 = vmatprep.subr.mxu0 0.0
        %732 = vmatpush1.xpose.msra.mxu0 0.0
        %733 = vmatprep.subr.mxu0 0.0
        %734 = vmatpush1.xpose.msra.mxu0 0.0
        %735 = vmatprep.subr.mxu0 0.0
        %736 = vmatpush1.xpose.msra.mxu0 0.0
        %737 = vmatprep.subr.mxu0 0.0
        %738 = vmatpush1.xpose.msra.mxu0 0.0
        %739 = vmatprep.subr.mxu0 0.0
        %740 = vmatpush1.xpose.msra.mxu0 0.0
        %741 = vmatprep.subr.mxu0 0.0
        %742 = vmatpush1.xpose.msra.mxu0 0.0
        %743 = vmatprep.subr.mxu0 0.0
        %744 = vmatpush1.xpose.msra.mxu0 0.0
        %745 = vmatprep.subr.mxu0 0.0
        %746 = vmatpush1.xpose.msra.mxu0 0.0
        %747 = vmatprep.subr.mxu0 0.0
        %748 = vmatpush1.xpose.msra.mxu0 0.0
        %749 = vmatprep.subr.mxu0 0.0
        %750 = vmatpush1.xpose.msra.mxu0 0.0
        %751 = vmatprep.subr.mxu0 0.0
        %752 = vmatpush1.xpose.msra.mxu0 0.0
        %753 = vmatprep.subr.mxu0 0.0
        %754 = vmatpush1.xpose.msra.mxu0 0.0
        %755 = vmatprep.subr.mxu0 0.0
        %756 = vmatpush1.xpose.msra.mxu0 0.0
        %757 = vmatprep.subr.mxu0 0.0
        %758 = vmatpush1.xpose.msra.mxu0 0.0
        %759 = vmatprep.subr.mxu0 0.0
        %760 = vmatpush1.xpose.msra.mxu0 0.0
        %761 = vmatprep.subr.mxu0 0.0
        %762 = vmatpush1.xpose.msra.mxu0 0.0
        %763 = vmatprep.subr.mxu0 0.0
        %764 = vmatpush1.xpose.msra.mxu0 0.0
        %765 = vmatprep.mubr.f32.mxu0 0.0
        %766 = vmatmul.mubr.f32.gmra.mrb[0].mxu0 %v697
        %v767 = vpop.f32.mrb[0].mxu0
        %v768 = vadd.f32 0.0, %v767
        %v769 = vpop.f32.mrb[0].mxu0
        %770 = vdwg.mxu0
        %v771 = vmul.f32 %v768, 0.17677669
        %v773 = vlaneseq
        %v774 = vshrl.u32 %v773, 7
        %v775 = vsub.s32 0, %v774
        %v776 = vrot.slane %v581, %v775
        %v778 = vadd.f32 %v771, %v776
        %vm779 = vcmask 64512
        %v780 = vsel %vm779, %v778, -inf
        %781 = vmax.xlane.f32.xlu0 %v780
        %v782 = vpop.xlane.xlu0 %781
        %v783 = vsub.f32 %v778, %v782
        %v784 = vmul.f32 %v783, 1.442695
        %v785 = vpow.pop %v784
        %v786 = vsel %vm779, %v785, 0.0
        %787 = vadd.xlane.f32.xlu0 %v786
        %v788 = vpop.xlane.xlu0 %787
        %v789 = vrcp.pop %v788
        %v790 = vmul.f32 %v785, %v789
        %v792 = vsel %vm779, %v790, 0
        %794 = vmatprep.subr.mxu0 0.0
        %795 = vmatpush1.msra.mxu0 %v683
        %796 = vmatprep.subr.mxu0 0.0
        %797 = vmatpush1.msra.mxu0 0.0
        %798 = vmatprep.subr.mxu0 0.0
        %799 = vmatpush1.msra.mxu0 0.0
        %800 = vmatprep.subr.mxu0 0.0
        %801 = vmatpush1.msra.mxu0 0.0
        %802 = vmatprep.subr.mxu0 0.0
        %803 = vmatpush1.msra.mxu0 0.0
        %804 = vmatprep.subr.mxu0 0.0
        %805 = vmatpush1.msra.mxu0 0.0
        %806 = vmatprep.subr.mxu0 0.0
        %807 = vmatpush1.msra.mxu0 0.0
        %808 = vmatprep.subr.mxu0 0.0
        %809 = vmatpush1.msra.mxu0 0.0
        %810 = vmatprep.subr.mxu0 0.0
        %811 = vmatpush1.msra.mxu0 0.0
        %812 = vmatprep.subr.mxu0 0.0
        %813 = vmatpush1.msra.mxu0 0.0
        %814 = vmatprep.subr.mxu0 0.0
        %815 = vmatpush1.msra.mxu0 0.0
        %816 = vmatprep.subr.mxu0 0.0
        %817 = vmatpush1.msra.mxu0 0.0
        %818 = vmatprep.subr.mxu0 0.0
        %819 = vmatpush1.msra.mxu0 0.0
        %820 = vmatprep.subr.mxu0 0.0
        %821 = vmatpush1.msra.mxu0 0.0
        %822 = vmatprep.subr.mxu0 0.0
        %823 = vmatpush1.msra.mxu0 0.0
        %824 = vmatprep.subr.mxu0 0.0
        %825 = vmatpush1.msra.mxu0 0.0
        %826 = vmatprep.subr.mxu0 0.0
        %827 = vmatpush1.msra.mxu0 0.0
        %828 = vmatprep.subr.mxu0 0.0
        %829 = vmatpush1.msra.mxu0 0.0
        %830 = vmatprep.subr.mxu0 0.0
        %831 = vmatpush1.msra.mxu0 0.0
        %832 = vmatprep.subr.mxu0 0.0
        %833 = vmatpush1.msra.mxu0 0.0
        %834 = vmatprep.subr.mxu0 0.0
        %835 = vmatpush1.msra.mxu0 0.0
        %836 = vmatprep.subr.mxu0 0.0
        %837 = vmatpush1.msra.mxu0 0.0
        %838 = vmatprep.subr.mxu0 0.0
        %839 = vmatpush1.msra.mxu0 0.0
        %840 = vmatprep.subr.mxu0 0.0
        %841 = vmatpush1.msra.mxu0 0.0
        %842 = vmatprep.subr.mxu0 0.0
        %843 = vmatpush1.msra.mxu0 0.0
        %844 = vmatprep.subr.mxu0 0.0
        %845 = vmatpush1.msra.mxu0 0.0
        %846 = vmatprep.subr.mxu0 0.0
        %847 = vmatpush1.msra.mxu0 0.0
        %848 = vmatprep.subr.mxu0 0.0
        %849 = vmatpush1.msra.mxu0 0.0
        %850 = vmatprep.subr.mxu0 0.0
        %851 = vmatpush1.msra.mxu0 0.0
        %852 = vmatprep.subr.mxu0 0.0
        %853 = vmatpush1.msra.mxu0 0.0
        %854 = vmatprep.subr.mxu0 0.0
        %855 = vmatpush1.msra.mxu0 0.0
        %856 = vmatprep.subr.mxu0 0.0
        %857 = vmatpush1.msra.mxu0 0.0
        %858 = vmatprep.mubr.f32.mxu0 0.0
        %859 = vmatmul.mubr.f32.gmra.mrb[0].mxu0 %v792
        %v860 = vpop.f32.mrb[0].mxu0
        %v861 = vadd.f32 0.0, %v860
        %v862 = vpop.f32.mrb[0].mxu0
        %863 = vdwg.mxu0
        %864 = vrot.lane.b32.xlu0 %v681, 96
        %v865 = vpop.permute.xlu0 %864
        %866 = vrot.lane.b32.xlu0 %v681, 32
        %v867 = vpop.permute.xlu0 %866
        %v868 = vsel %vm696, %v865, 0
        %v870 = vsel %vm696, %v867, 0
        %872 = vmatprep.subr.mxu0 0.0
        %873 = vmatpush1.xpose.msra.mxu0 %v870
        %874 = vmatprep.subr.mxu0 0.0
        %875 = vmatpush1.xpose.msra.mxu0 0.0
        %876 = vmatprep.subr.mxu0 0.0
        %877 = vmatpush1.xpose.msra.mxu0 0.0
        %878 = vmatprep.subr.mxu0 0.0
        %879 = vmatpush1.xpose.msra.mxu0 0.0
        %880 = vmatprep.subr.mxu0 0.0
        %881 = vmatpush1.xpose.msra.mxu0 0.0
        %882 = vmatprep.subr.mxu0 0.0
        %883 = vmatpush1.xpose.msra.mxu0 0.0
        %884 = vmatprep.subr.mxu0 0.0
        %885 = vmatpush1.xpose.msra.mxu0 0.0
        %886 = vmatprep.subr.mxu0 0.0
        %887 = vmatpush1.xpose.msra.mxu0 0.0
        %888 = vmatprep.subr.mxu0 0.0
        %889 = vmatpush1.xpose.msra.mxu0 0.0
        %890 = vmatprep.subr.mxu0 0.0
        %891 = vmatpush1.xpose.msra.mxu0 0.0
        %892 = vmatprep.subr.mxu0 0.0
        %893 = vmatpush1.xpose.msra.mxu0 0.0
        %894 = vmatprep.subr.mxu0 0.0
        %895 = vmatpush1.xpose.msra.mxu0 0.0
        %896 = vmatprep.subr.mxu0 0.0
        %897 = vmatpush1.xpose.msra.mxu0 0.0
        %898 = vmatprep.subr.mxu0 0.0
        %899 = vmatpush1.xpose.msra.mxu0 0.0
        %900 = vmatprep.subr.mxu0 0.0
        %901 = vmatpush1.xpose.msra.mxu0 0.0
        %902 = vmatprep.subr.mxu0 0.0
        %903 = vmatpush1.xpose.msra.mxu0 0.0
        %904 = vmatprep.subr.mxu0 0.0
        %905 = vmatpush1.xpose.msra.mxu0 0.0
        %906 = vmatprep.subr.mxu0 0.0
        %907 = vmatpush1.xpose.msra.mxu0 0.0
        %908 = vmatprep.subr.mxu0 0.0
        %909 = vmatpush1.xpose.msra.mxu0 0.0
        %910 = vmatprep.subr.mxu0 0.0
        %911 = vmatpush1.xpose.msra.mxu0 0.0
        %912 = vmatprep.subr.mxu0 0.0
        %913 = vmatpush1.xpose.msra.mxu0 0.0
        %914 = vmatprep.subr.mxu0 0.0
        %915 = vmatpush1.xpose.msra.mxu0 0.0
        %916 = vmatprep.subr.mxu0 0.0
        %917 = vmatpush1.xpose.msra.mxu0 0.0
        %918 = vmatprep.subr.mxu0 0.0
        %919 = vmatpush1.xpose.msra.mxu0 0.0
        %920 = vmatprep.subr.mxu0 0.0
        %921 = vmatpush1.xpose.msra.mxu0 0.0
        %922 = vmatprep.subr.mxu0 0.0
        %923 = vmatpush1.xpose.msra.mxu0 0.0
        %924 = vmatprep.subr.mxu0 0.0
        %925 = vmatpush1.xpose.msra.mxu0 0.0
        %926 = vmatprep.subr.mxu0 0.0
        %927 = vmatpush1.xpose.msra.mxu0 0.0
        %928 = vmatprep.subr.mxu0 0.0
        %929 = vmatpush1.xpose.msra.mxu0 0.0
        %930 = vmatprep.subr.mxu0 0.0
        %931 = vmatpush1.xpose.msra.mxu0 0.0
        %932 = vmatprep.subr.mxu0 0.0
        %933 = vmatpush1.xpose.msra.mxu0 0.0
        %934 = vmatprep.subr.mxu0 0.0
        %935 = vmatpush1.xpose.msra.mxu0 0.0
        %936 = vmatprep.mubr.f32.mxu0 0.0
        %937 = vmatmul.mubr.f32.gmra.mrb[0].mxu0 %v868
        %v938 = vpop.f32.mrb[0].mxu0
        %v939 = vadd.f32 0.0, %v938
        %v940 = vpop.f32.mrb[0].mxu0
        %941 = vdwg.mxu0
        %v942 = vmul.f32 %v939, 0.17677669
        %v943 = vadd.f32 %v942, %v776
        %v944 = vsel %vm779, %v943, -inf
        %945 = vmax.xlane.f32.xlu0 %v944
        %v946 = vpop.xlane.xlu0 %945
        %v947 = vsub.f32 %v943, %v946
        %v948 = vmul.f32 %v947, 1.442695
        %v949 = vpow.pop %v948
        %v950 = vsel %vm779, %v949, 0.0
        %951 = vadd.xlane.f32.xlu0 %v950
        %v952 = vpop.xlane.xlu0 %951
        %v953 = vrcp.pop %v952
        %v954 = vmul.f32 %v949, %v953
        %956 = vrot.lane.b32.xlu0 %v683, 96
        %v957 = vpop.permute.xlu0 %956
        %v960 = vsel %vm779, %v954, 0
        %962 = vmatprep.subr.mxu0 0.0
        %963 = vmatpush1.msra.mxu0 %v957
        %964 = vmatprep.subr.mxu0 0.0
        %965 = vmatpush1.msra.mxu0 0.0
        %966 = vmatprep.subr.mxu0 0.0
        %967 = vmatpush1.msra.mxu0 0.0
        %968 = vmatprep.subr.mxu0 0.0
        %969 = vmatpush1.msra.mxu0 0.0
        %970 = vmatprep.subr.mxu0 0.0
        %971 = vmatpush1.msra.mxu0 0.0
        %972 = vmatprep.subr.mxu0 0.0
        %973 = vmatpush1.msra.mxu0 0.0
        %974 = vmatprep.subr.mxu0 0.0
        %975 = vmatpush1.msra.mxu0 0.0
        %976 = vmatprep.subr.mxu0 0.0
        %977 = vmatpush1.msra.mxu0 0.0
        %978 = vmatprep.subr.mxu0 0.0
        %979 = vmatpush1.msra.mxu0 0.0
        %980 = vmatprep.subr.mxu0 0.0
        %981 = vmatpush1.msra.mxu0 0.0
        %982 = vmatprep.subr.mxu0 0.0
        %983 = vmatpush1.msra.mxu0 0.0
        %984 = vmatprep.subr.mxu0 0.0
        %985 = vmatpush1.msra.mxu0 0.0
        %986 = vmatprep.subr.mxu0 0.0
        %987 = vmatpush1.msra.mxu0 0.0
        %988 = vmatprep.subr.mxu0 0.0
        %989 = vmatpush1.msra.mxu0 0.0
        %990 = vmatprep.subr.mxu0 0.0
        %991 = vmatpush1.msra.mxu0 0.0
        %992 = vmatprep.subr.mxu0 0.0
        %993 = vmatpush1.msra.mxu0 0.0
        %994 = vmatprep.subr.mxu0 0.0
        %995 = vmatpush1.msra.mxu0 0.0
        %996 = vmatprep.subr.mxu0 0.0
        %997 = vmatpush1.msra.mxu0 0.0
        %998 = vmatprep.subr.mxu0 0.0
        %999 = vmatpush1.msra.mxu0 0.0
        %1000 = vmatprep.subr.mxu0 0.0
        %1001 = vmatpush1.msra.mxu0 0.0
        %1002 = vmatprep.subr.mxu0 0.0
        %1003 = vmatpush1.msra.mxu0 0.0
        %1004 = vmatprep.subr.mxu0 0.0
        %1005 = vmatpush1.msra.mxu0 0.0
        %1006 = vmatprep.subr.mxu0 0.0
        %1007 = vmatpush1.msra.mxu0 0.0
        %1008 = vmatprep.subr.mxu0 0.0
        %1009 = vmatpush1.msra.mxu0 0.0
        %1010 = vmatprep.subr.mxu0 0.0
        %1011 = vmatpush1.msra.mxu0 0.0
        %1012 = vmatprep.subr.mxu0 0.0
        %1013 = vmatpush1.msra.mxu0 0.0
        %1014 = vmatprep.subr.mxu0 0.0
        %1015 = vmatpush1.msra.mxu0 0.0
        %1016 = vmatprep.subr.mxu0 0.0
        %1017 = vmatpush1.msra.mxu0 0.0
        %1018 = vmatprep.subr.mxu0 0.0
        %1019 = vmatpush1.msra.mxu0 0.0
        %1020 = vmatprep.subr.mxu0 0.0
        %1021 = vmatpush1.msra.mxu0 0.0
        %1022 = vmatprep.subr.mxu0 0.0
        %1023 = vmatpush1.msra.mxu0 0.0
        %1024 = vmatprep.subr.mxu0 0.0
        %1025 = vmatpush1.msra.mxu0 0.0
        %1026 = vmatprep.mubr.f32.mxu0 0.0
        %1027 = vmatmul.mubr.f32.gmra.mrb[0].mxu0 %v960
        %v1028 = vpop.f32.mrb[0].mxu0
        %v1029 = vadd.f32 0.0, %v1028
        %v1030 = vpop.f32.mrb[0].mxu0
        %1031 = vdwg.mxu0
        %v1033 = vsel %vm696, %v1029, 0
        %1035 = vmatprep.subr.mxu0 0.0
        %1036 = vmatpush1.msra.mxu0 %v689
        %1037 = vmatprep.subr.mxu0 0.0
        %1038 = vmatpush1.msra.mxu0 %v690
        %1039 = vmatprep.subr.mxu0 0.0
        %1040 = vmatpush1.msra.mxu0 %v691
        %1041 = vmatprep.subr.mxu0 0.0
        %1042 = vmatpush1.msra.mxu0 %v692
        %1043 = vmatprep.subr.mxu0 0.0
        %1044 = vmatpush1.msra.mxu0 0.0
        %1045 = vmatprep.subr.mxu0 0.0
        %1046 = vmatpush1.msra.mxu0 0.0
        %1047 = vmatprep.subr.mxu0 0.0
        %1048 = vmatpush1.msra.mxu0 0.0
        %1049 = vmatprep.subr.mxu0 0.0
        %1050 = vmatpush1.msra.mxu0 0.0
        %1051 = vmatprep.subr.mxu0 0.0
        %1052 = vmatpush1.msra.mxu0 0.0
        %1053 = vmatprep.subr.mxu0 0.0
        %1054 = vmatpush1.msra.mxu0 0.0
        %1055 = vmatprep.subr.mxu0 0.0
        %1056 = vmatpush1.msra.mxu0 0.0
        %1057 = vmatprep.subr.mxu0 0.0
        %1058 = vmatpush1.msra.mxu0 0.0
        %1059 = vmatprep.subr.mxu0 0.0
        %1060 = vmatpush1.msra.mxu0 0.0
        %1061 = vmatprep.subr.mxu0 0.0
        %1062 = vmatpush1.msra.mxu0 0.0
        %1063 = vmatprep.subr.mxu0 0.0
        %1064 = vmatpush1.msra.mxu0 0.0
        %1065 = vmatprep.subr.mxu0 0.0
        %1066 = vmatpush1.msra.mxu0 0.0
        %1067 = vmatprep.subr.mxu0 0.0
        %1068 = vmatpush1.msra.mxu0 0.0
        %1069 = vmatprep.subr.mxu0 0.0
        %1070 = vmatpush1.msra.mxu0 0.0
        %1071 = vmatprep.subr.mxu0 0.0
        %1072 = vmatpush1.msra.mxu0 0.0
        %1073 = vmatprep.subr.mxu0 0.0
        %1074 = vmatpush1.msra.mxu0 0.0
        %1075 = vmatprep.subr.mxu0 0.0
        %1076 = vmatpush1.msra.mxu0 0.0
        %1077 = vmatprep.subr.mxu0 0.0
        %1078 = vmatpush1.msra.mxu0 0.0
        %1079 = vmatprep.subr.mxu0 0.0
        %1080 = vmatpush1.msra.mxu0 0.0
        %1081 = vmatprep.subr.mxu0 0.0
        %1082 = vmatpush1.msra.mxu0 0.0
        %1083 = vmatprep.subr.mxu0 0.0
        %1084 = vmatpush1.msra.mxu0 0.0
        %1085 = vmatprep.subr.mxu0 0.0
        %1086 = vmatpush1.msra.mxu0 0.0
        %1087 = vmatprep.subr.mxu0 0.0
        %1088 = vmatpush1.msra.mxu0 0.0
        %1089 = vmatprep.subr.mxu0 0.0
        %1090 = vmatpush1.msra.mxu0 0.0
        %1091 = vmatprep.subr.mxu0 0.0
        %1092 = vmatpush1.msra.mxu0 0.0
        %1093 = vmatprep.subr.mxu0 0.0
        %1094 = vmatpush1.msra.mxu0 0.0
        %1095 = vmatprep.subr.mxu0 0.0
        %1096 = vmatpush1.msra.mxu0 0.0
        %1097 = vmatprep.subr.mxu0 0.0
        %1098 = vmatpush1.msra.mxu0 0.0
        %1099 = vmatprep.mubr.f32.mxu0 0.0
        %1100 = vmatmul.mubr.f32.gmra.mrb[0].mxu0 %v1033
        %v1101 = vpop.f32.mrb[0].mxu0
        %v1102 = vadd.f32 0.0, %v1101
        %v1103 = vpop.f32.mrb[0].mxu0
        %1104 = vdwg.mxu0
        %v1106 = vsel %vm696, %v861, 0
        %1108 = vmatprep.subr.mxu0 0.0
        %1109 = vmatpush1.msra.mxu0 %v685
        %1110 = vmatprep.subr.mxu0 0.0
        %1111 = vmatpush1.msra.mxu0 %v686
        %1112 = vmatprep.subr.mxu0 0.0
        %1113 = vmatpush1.msra.mxu0 %v687
        %1114 = vmatprep.subr.mxu0 0.0
        %1115 = vmatpush1.msra.mxu0 %v688
        %1116 = vmatprep.subr.mxu0 0.0
        %1117 = vmatpush1.msra.mxu0 0.0
        %1118 = vmatprep.subr.mxu0 0.0
        %1119 = vmatpush1.msra.mxu0 0.0
        %1120 = vmatprep.subr.mxu0 0.0
        %1121 = vmatpush1.msra.mxu0 0.0
        %1122 = vmatprep.subr.mxu0 0.0
        %1123 = vmatpush1.msra.mxu0 0.0
        %1124 = vmatprep.subr.mxu0 0.0
        %1125 = vmatpush1.msra.mxu0 0.0
        %1126 = vmatprep.subr.mxu0 0.0
        %1127 = vmatpush1.msra.mxu0 0.0
        %1128 = vmatprep.subr.mxu0 0.0
        %1129 = vmatpush1.msra.mxu0 0.0
        %1130 = vmatprep.subr.mxu0 0.0
        %1131 = vmatpush1.msra.mxu0 0.0
        %1132 = vmatprep.subr.mxu0 0.0
        %1133 = vmatpush1.msra.mxu0 0.0
        %1134 = vmatprep.subr.mxu0 0.0
        %1135 = vmatpush1.msra.mxu0 0.0
        %1136 = vmatprep.subr.mxu0 0.0
        %1137 = vmatpush1.msra.mxu0 0.0
        %1138 = vmatprep.subr.mxu0 0.0
        %1139 = vmatpush1.msra.mxu0 0.0
        %1140 = vmatprep.subr.mxu0 0.0
        %1141 = vmatpush1.msra.mxu0 0.0
        %1142 = vmatprep.subr.mxu0 0.0
        %1143 = vmatpush1.msra.mxu0 0.0
        %1144 = vmatprep.subr.mxu0 0.0
        %1145 = vmatpush1.msra.mxu0 0.0
        %1146 = vmatprep.subr.mxu0 0.0
        %1147 = vmatpush1.msra.mxu0 0.0
        %1148 = vmatprep.subr.mxu0 0.0
        %1149 = vmatpush1.msra.mxu0 0.0
        %1150 = vmatprep.subr.mxu0 0.0
        %1151 = vmatpush1.msra.mxu0 0.0
        %1152 = vmatprep.subr.mxu0 0.0
        %1153 = vmatpush1.msra.mxu0 0.0
        %1154 = vmatprep.subr.mxu0 0.0
        %1155 = vmatpush1.msra.mxu0 0.0
        %1156 = vmatprep.subr.mxu0 0.0
        %1157 = vmatpush1.msra.mxu0 0.0
        %1158 = vmatprep.subr.mxu0 0.0
        %1159 = vmatpush1.msra.mxu0 0.0
        %1160 = vmatprep.subr.mxu0 0.0
        %1161 = vmatpush1.msra.mxu0 0.0
        %1162 = vmatprep.subr.mxu0 0.0
        %1163 = vmatpush1.msra.mxu0 0.0
        %1164 = vmatprep.subr.mxu0 0.0
        %1165 = vmatpush1.msra.mxu0 0.0
        %1166 = vmatprep.subr.mxu0 0.0
        %1167 = vmatpush1.msra.mxu0 0.0
        %1168 = vmatprep.subr.mxu0 0.0
        %1169 = vmatpush1.msra.mxu0 0.0
        %1170 = vmatprep.subr.mxu0 0.0
        %1171 = vmatpush1.msra.mxu0 0.0
        %1172 = vmatprep.mubr.f32.mxu0 0.0
        %1173 = vmatmul.mubr.f32.gmra.mrb[0].mxu0 %v1106
        %v1174 = vpop.f32.mrb[0].mxu0
        %v1175 = vadd.f32 %v1102, %v1174
        %v1176 = vpop.f32.mrb[0].mxu0
        %1177 = vdwg.mxu0
        %v1178 = vld [vmem:[%s5] sm:$0x1]
        %v1180 = vlaneseq
        %v1181 = vshrl.u32 %v1180, 7
        %v1182 = vsub.s32 0, %v1181
        %v1183 = vrot.slane %v1178, %v1182
        %v1185 = vadd.f32 %v1175, %v1183
        %v1186 = vadd.f32 %v580, %v1185
        %v1187 = vld [vmem:[%s6] sm:$0x1]
        %v1188 = vld [vmem:[%s7] sm:$0x1]
        %v1189 = vsel %vm610, %v1186, 0.0
        %1190 = vadd.xlane.f32.xlu0 %v1189
        %v1191 = vpop.xlane.xlu0 %1190
        %v1192 = vrcp.pop 64.0
        %v1193 = vmul.f32 %v1191, %v1192
        %v1194 = vsub.f32 %v1186, %v1193
        %v1195 = vmul.f32 %v1194, %v1194
        %v1196 = vsel %vm610, %v1195, 0.0
        %1197 = vadd.xlane.f32.xlu0 %v1196
        %v1198 = vpop.xlane.xlu0 %1197
        %v1199 = vmul.f32 %v1198, %v1192
        %v1200 = vadd.f32 %v1199, 1e-05
        %v1201 = vrsqrt.pop %v1200
        %v1202 = vmul.f32 %v1194, %v1201
        %v1204 = vlaneseq
        %v1205 = vshrl.u32 %v1204, 7
        %v1206 = vsub.s32 0, %v1205
        %v1207 = vrot.slane %v1187, %v1206
        %v1209 = vmul.f32 %v1202, %v1207
        %v1211 = vlaneseq
        %v1212 = vshrl.u32 %v1211, 7
        %v1213 = vsub.s32 0, %v1212
        %v1214 = vrot.slane %v1188, %v1213
        %v1216 = vadd.f32 %v1209, %v1214
        %v1217 = vld [vmem:[#allocation5] sm:$0xff]
        %v1218 = vld [vmem:[#allocation5 + $0x8] sm:$0xff]
        %v1219 = vld [vmem:[#allocation5 + $0x10] sm:$0xff]
        %v1220 = vld [vmem:[#allocation5 + $0x18] sm:$0xff]
        %v1221 = vld [vmem:[#allocation5 + $0x20] sm:$0xff]
        %v1222 = vld [vmem:[#allocation5 + $0x28] sm:$0xff]
        %v1223 = vld [vmem:[#allocation5 + $0x30] sm:$0xff]
        %v1224 = vld [vmem:[#allocation5 + $0x38] sm:$0xff]
        %v1225 = vld [vmem:[%s9] sm:$0x1]
        %v1227 = vlaneseq
        %v1228 = vshrl.u32 %v1227, 7
        %v1229 = vsub.s32 0, %v1228
        %v1230 = vrot.slane %v1225, %v1229
        %v1233 = vsel %vm610, %v1216, 0
        %1235 = vmatprep.subr.mxu0 0.0
        %1236 = vmatpush1.msra.mxu0 %v1217
        %1237 = vmatprep.subr.mxu0 0.0
        %1238 = vmatpush1.msra.mxu0 %v1218
        %1239 = vmatprep.subr.mxu0 0.0
        %1240 = vmatpush1.msra.mxu0 %v1219
        %1241 = vmatprep.subr.mxu0 0.0
        %1242 = vmatpush1.msra.mxu0 %v1220
        %1243 = vmatprep.subr.mxu0 0.0
        %1244 = vmatpush1.msra.mxu0 %v1221
        %1245 = vmatprep.subr.mxu0 0.0
        %1246 = vmatpush1.msra.mxu0 %v1222
        %1247 = vmatprep.subr.mxu0 0.0
        %1248 = vmatpush1.msra.mxu0 %v1223
        %1249 = vmatprep.subr.mxu0 0.0
        %1250 = vmatpush1.msra.mxu0 %v1224
        %1251 = vmatprep.subr.mxu0 0.0
        %1252 = vmatpush1.msra.mxu0 0.0
        %1253 = vmatprep.subr.mxu0 0.0
        %1254 = vmatpush1.msra.mxu0 0.0
        %1255 = vmatprep.subr.mxu0 0.0
        %1256 = vmatpush1.msra.mxu0 0.0
        %1257 = vmatprep.subr.mxu0 0.0
        %1258 = vmatpush1.msra.mxu0 0.0
        %1259 = vmatprep.subr.mxu0 0.0
        %1260 = vmatpush1.msra.mxu0 0.0
        %1261 = vmatprep.subr.mxu0 0.0
        %1262 = vmatpush1.msra.mxu0 0.0
        %1263 = vmatprep.subr.mxu0 0.0
        %1264 = vmatpush1.msra.mxu0 0.0
        %1265 = vmatprep.subr.mxu0 0.0
        %1266 = vmatpush1.msra.mxu0 0.0
        %1267 = vmatprep.subr.mxu0 0.0
        %1268 = vmatpush1.msra.mxu0 0.0
        %1269 = vmatprep.subr.mxu0 0.0
        %1270 = vmatpush1.msra.mxu0 0.0
        %1271 = vmatprep.subr.mxu0 0.0
        %1272 = vmatpush1.msra.mxu0 0.0
        %1273 = vmatprep.subr.mxu0 0.0
        %1274 = vmatpush1.msra.mxu0 0.0
        %1275 = vmatprep.subr.mxu0 0.0
        %1276 = vmatpush1.msra.mxu0 0.0
        %1277 = vmatprep.subr.mxu0 0.0
        %1278 = vmatpush1.msra.mxu0 0.0
        %1279 = vmatprep.subr.mxu0 0.0
        %1280 = vmatpush1.msra.mxu0 0.0
        %1281 = vmatprep.subr.mxu0 0.0
        %1282 = vmatpush1.msra.mxu0 0.0
        %1283 = vmatprep.subr.mxu0 0.0
        %1284 = vmatpush1.msra.mxu0 0.0
        %1285 = vmatprep.subr.mxu0 0.0
        %1286 = vmatpush1.msra.mxu0 0.0
        %1287 = vmatprep.subr.mxu0 0.0
        %1288 = vmatpush1.msra.mxu0 0.0
        %1289 = vmatprep.subr.mxu0 0.0
        %1290 = vmatpush1.msra.mxu0 0.0
        %1291 = vmatprep.subr.mxu0 0.0
        %1292 = vmatpush1.msra.mxu0 0.0
        %1293 = vmatprep.subr.mxu0 0.0
        %1294 = vmatpush1.msra.mxu0 0.0
        %1295 = vmatprep.subr.mxu0 0.0
        %1296 = vmatpush1.msra.mxu0 0.0
        %1297 = vmatprep.subr.mxu0 0.0
        %1298 = vmatpush1.msra.mxu0 0.0
        %1299 = vmatprep.mubr.f32.mxu0 0.0
        %1300 = vmatmul.mubr.f32.gmra.mrb[0].mxu0 %v1233
        %v1301 = vpop.f32.mrb[0].mxu0
        %v1302 = vadd.f32 %v1230, %v1301
        %v1303 = vpop.f32.mrb[0].mxu0
        %1304 = vdwg.mxu0
        %v1305 = vmul.f32 %v1302, %v1302
        %v1306 = vmul.f32 %v1302, %v1305
        %v1307 = vmul.f32 %v1306, 0.044715
        %v1308 = vadd.f32 %v1302, %v1307
        %v1309 = vmul.f32 %v1308, 0.7978846
        %v1310 = vtanh.pop %v1309
        %v1311 = vadd.f32 %v1310, 1.0
        %v1312 = vmul.f32 %v1311, 0.5
        %v1313 = vmul.f32 %v1302, %v1312
        %v1314 = vld [vmem:[%s10] sm:$0xff]
        %v1315 = vld [vmem:[%s10 + $0x8] sm:$0xff]
        %v1316 = vld [vmem:[%s10 + $0x10] sm:$0xff]
        %v1317 = vld [vmem:[%s10 + $0x18] sm:$0xff]
        %v1318 = vld [vmem:[%s10 + $0x20] sm:$0xff]
        %v1319 = vld [vmem:[%s10 + $0x28] sm:$0xff]
        %v1320 = vld [vmem:[%s10 + $0x30] sm:$0xff]
        %v1321 = vld [vmem:[%s10 + $0x38] sm:$0xff]
        %v1322 = vld [vmem:[%s10 + $0x40] sm:$0xff]
        %v1323 = vld [vmem:[%s10 + $0x48] sm:$0xff]
        %v1324 = vld [vmem:[%s10 + $0x50] sm:$0xff]
        %v1325 = vld [vmem:[%s10 + $0x58] sm:$0xff]
        %v1326 = vld [vmem:[%s10 + $0x60] sm:$0xff]
        %v1327 = vld [vmem:[%s10 + $0x68] sm:$0xff]
        %v1328 = vld [vmem:[%s10 + $0x70] sm:$0xff]
        %v1329 = vld [vmem:[%s10 + $0x78] sm:$0xff]
        %v1330 = vld [vmem:[%s11] sm:$0x1]
        %v1332 = vlaneseq
        %v1333 = vshrl.u32 %v1332, 7
        %v1334 = vsub.s32 0, %v1333
        %v1335 = vrot.slane %v1330, %v1334
        %1337 = vmatprep.subr.mxu0 0.0
        %1338 = vmatpush1.msra.mxu0 %v1314
        %1339 = vmatprep.subr.mxu0 0.0
        %1340 = vmatpush1.msra.mxu0 %v1315
        %1341 = vmatprep.subr.mxu0 0.0
        %1342 = vmatpush1.msra.mxu0 %v1316
        %1343 = vmatprep.subr.mxu0 0.0
        %1344 = vmatpush1.msra.mxu0 %v1317
        %1345 = vmatprep.subr.mxu0 0.0
        %1346 = vmatpush1.msra.mxu0 %v1318
        %1347 = vmatprep.subr.mxu0 0.0
        %1348 = vmatpush1.msra.mxu0 %v1319
        %1349 = vmatprep.subr.mxu0 0.0
        %1350 = vmatpush1.msra.mxu0 %v1320
        %1351 = vmatprep.subr.mxu0 0.0
        %1352 = vmatpush1.msra.mxu0 %v1321
        %1353 = vmatprep.subr.mxu0 0.0
        %1354 = vmatpush1.msra.mxu0 %v1322
        %1355 = vmatprep.subr.mxu0 0.0
        %1356 = vmatpush1.msra.mxu0 %v1323
        %1357 = vmatprep.subr.mxu0 0.0
        %1358 = vmatpush1.msra.mxu0 %v1324
        %1359 = vmatprep.subr.mxu0 0.0
        %1360 = vmatpush1.msra.mxu0 %v1325
        %1361 = vmatprep.subr.mxu0 0.0
        %1362 = vmatpush1.msra.mxu0 %v1326
        %1363 = vmatprep.subr.mxu0 0.0
        %1364 = vmatpush1.msra.mxu0 %v1327
        %1365 = vmatprep.subr.mxu0 0.0
        %1366 = vmatpush1.msra.mxu0 %v1328
        %1367 = vmatprep.subr.mxu0 0.0
        %1368 = vmatpush1.msra.mxu0 %v1329
        %1369 = vmatprep.subr.mxu0 0.0
        %1370 = vmatpush1.msra.mxu0 0.0
        %1371 = vmatprep.subr.mxu0 0.0
        %1372 = vmatpush1.msra.mxu0 0.0
        %1373 = vmatprep.subr.mxu0 0.0
        %1374 = vmatpush1.msra.mxu0 0.0
        %1375 = vmatprep.subr.mxu0 0.0
        %1376 = vmatpush1.msra.mxu0 0.0
        %1377 = vmatprep.subr.mxu0 0.0
        %1378 = vmatpush1.msra.mxu0 0.0
        %1379 = vmatprep.subr.mxu0 0.0
        %1380 = vmatpush1.msra.mxu0 0.0
        %1381 = vmatprep.subr.mxu0 0.0
        %1382 = vmatpush1.msra.mxu0 0.0
        %1383 = vmatprep.subr.mxu0 0.0
        %1384 = vmatpush1.msra.mxu0 0.0
        %1385 = vmatprep.subr.mxu0 0.0
        %1386 = vmatpush1.msra.mxu0 0.0
        %1387 = vmatprep.subr.mxu0 0.0
        %1388 = vmatpush1.msra.mxu0 0.0
        %1389 = vmatprep.subr.mxu0 0.0
        %1390 = vmatpush1.msra.mxu0 0.0
        %1391 = vmatprep.subr.mxu0 0.0
        %1392 = vmatpush1.msra.mxu0 0.0
        %1393 = vmatprep.subr.mxu0 0.0
        %1394 = vmatpush1.msra.mxu0 0.0
        %1395 = vmatprep.subr.mxu0 0.0
        %1396 = vmatpush1.msra.mxu0 0.0
        %1397 = vmatprep.subr.mxu0 0.0
        %1398 = vmatpush1.msra.mxu0 0.0
        %1399 = vmatprep.subr.mxu0 0.0
        %1400 = vmatpush1.msra.mxu0 0.0
        %1401 = vmatprep.mubr.f32.mxu0 0.0
        %1402 = vmatmul.mubr.f32.gmra.mrb[0].mxu0 %v1313
        %v1403 = vpop.f32.mrb[0].mxu0
        %v1404 = vadd.f32 %v1335, %v1403
        %v1405 = vpop.f32.mrb[0].mxu0
        %1406 = vdwg.mxu0
        %v1407 = vadd.f32 %v1216, %v1404
        %v1408 = vld [vmem:[%s12] sm:$0x1]
        %v1409 = vld [vmem:[%s13] sm:$0x1]
        %v1410 = vsel %vm610, %v1407, 0.0
        %1411 = vadd.xlane.f32.xlu0 %v1410
        %v1412 = vpop.xlane.xlu0 %1411
        %v1413 = vmul.f32 %v1412, %v1192
        %v1414 = vsub.f32 %v1407, %v1413
        %v1415 = vmul.f32 %v1414, %v1414
        %v1416 = vsel %vm610, %v1415, 0.0
        %1417 = vadd.xlane.f32.xlu0 %v1416
        %v1418 = vpop.xlane.xlu0 %1417
        %v1419 = vmul.f32 %v1418, %v1192
        %v1420 = vadd.f32 %v1419, 1e-05
        %v1421 = vrsqrt.pop %v1420
        %v1422 = vmul.f32 %v1414, %v1421
        %v1424 = vlaneseq
        %v1425 = vshrl.u32 %v1424, 7
        %v1426 = vsub.s32 0, %v1425
        %v1427 = vrot.slane %v1408, %v1426
        %v1429 = vmul.f32 %v1422, %v1427
        %v1431 = vlaneseq
        %v1432 = vshrl.u32 %v1431, 7
        %v1433 = vsub.s32 0, %v1432
        %v1434 = vrot.slane %v1409, %v1433
        %v1436 = vadd.f32 %v1429, %v1434
        %s1437 = scalar_lea.vmem %s2, 128
        %v1438 = vld [vmem:[%s1437] sm:$0xff]
        %v1439 = vld [vmem:[%s1437 + $0x8] sm:$0xff]
        %v1440 = vld [vmem:[%s1437 + $0x10] sm:$0xff]
        %v1441 = vld [vmem:[%s1437 + $0x18] sm:$0xff]
        %v1442 = vld [vmem:[%s1437 + $0x20] sm:$0xff]
        %v1443 = vld [vmem:[%s1437 + $0x28] sm:$0xff]
        %v1444 = vld [vmem:[%s1437 + $0x30] sm:$0xff]
        %v1445 = vld [vmem:[%s1437 + $0x38] sm:$0xff]
        %v1446 = vld [vmem:[%s1437 + $0x40] sm:$0xff]
        %v1447 = vld [vmem:[%s1437 + $0x48] sm:$0xff]
        %v1448 = vld [vmem:[%s1437 + $0x50] sm:$0xff]
        %v1449 = vld [vmem:[%s1437 + $0x58] sm:$0xff]
        %v1450 = vld [vmem:[%s1437 + $0x60] sm:$0xff]
        %v1451 = vld [vmem:[%s1437 + $0x68] sm:$0xff]
        %v1452 = vld [vmem:[%s1437 + $0x70] sm:$0xff]
        %v1453 = vld [vmem:[%s1437 + $0x78] sm:$0xff]
        %s1454 = scalar_lea.vmem %s3, 2
        %v1455 = vld [vmem:[%s1454] sm:$0x3]
        %v1457 = vlaneseq
        %v1458 = vshrl.u32 %v1457, 7
        %v1459 = vsub.s32 0, %v1458
        %v1460 = vrot.slane %v1455, %v1459
        %v1461 = vlaneseq
        %v1462 = vshrl.u32 %v1461, 7
        %v1463 = vsub.s32 1, %v1462
        %v1464 = vrot.slane %v1455, %v1463
        %v1468 = vsel %vm610, %v1436, 0
        %1470 = vmatprep.subr.mxu0 %v1439
        %1471 = vmatpush1.msra.mxu0 %v1438
        %1472 = vmatprep.subr.mxu0 %v1441
        %1473 = vmatpush1.msra.mxu0 %v1440
        %1474 = vmatprep.subr.mxu0 %v1443
        %1475 = vmatpush1.msra.mxu0 %v1442
        %1476 = vmatprep.subr.mxu0 %v1445
        %1477 = vmatpush1.msra.mxu0 %v1444
        %1478 = vmatprep.subr.mxu0 %v1447
        %1479 = vmatpush1.msra.mxu0 %v1446
        %1480 = vmatprep.subr.mxu0 %v1449
        %1481 = vmatpush1.msra.mxu0 %v1448
        %1482 = vmatprep.subr.mxu0 %v1451
        %1483 = vmatpush1.msra.mxu0 %v1450
        %1484 = vmatprep.subr.mxu0 %v1453
        %1485 = vmatpush1.msra.mxu0 %v1452
        %1486 = vmatprep.subr.mxu0 0.0
        %1487 = vmatpush1.msra.mxu0 0.0
        %1488 = vmatprep.subr.mxu0 0.0
        %1489 = vmatpush1.msra.mxu0 0.0
        %1490 = vmatprep.subr.mxu0 0.0
        %1491 = vmatpush1.msra.mxu0 0.0
        %1492 = vmatprep.subr.mxu0 0.0
        %1493 = vmatpush1.msra.mxu0 0.0
        %1494 = vmatprep.subr.mxu0 0.0
        %1495 = vmatpush1.msra.mxu0 0.0
        %1496 = vmatprep.subr.mxu0 0.0
        %1497 = vmatpush1.msra.mxu0 0.0
        %1498 = vmatprep.subr.mxu0 0.0
        %1499 = vmatpush1.msra.mxu0 0.0
        %1500 = vmatprep.subr.mxu0 0.0
        %1501 = vmatpush1.msra.mxu0 0.0
        %1502 = vmatprep.subr.mxu0 0.0
        %1503 = vmatpush1.msra.mxu0 0.0
        %1504 = vmatprep.subr.mxu0 0.0
        %1505 = vmatpush1.msra.mxu0 0.0
        %1506 = vmatprep.subr.mxu0 0.0
        %1507 = vmatpush1.msra.mxu0 0.0
        %1508 = vmatprep.subr.mxu0 0.0
        %1509 = vmatpush1.msra.mxu0 0.0
        %1510 = vmatprep.subr.mxu0 0.0
        %1511 = vmatpush1.msra.mxu0 0.0
        %1512 = vmatprep.subr.mxu0 0.0
        %1513 = vmatpush1.msra.mxu0 0.0
        %1514 = vmatprep.subr.mxu0 0.0
        %1515 = vmatpush1.msra.mxu0 0.0
        %1516 = vmatprep.subr.mxu0 0.0
        %1517 = vmatpush1.msra.mxu0 0.0
        %1518 = vmatprep.subr.mxu0 0.0
        %1519 = vmatpush1.msra.mxu0 0.0
        %1520 = vmatprep.subr.mxu0 0.0
        %1521 = vmatpush1.msra.mxu0 0.0
        %1522 = vmatprep.subr.mxu0 0.0
        %1523 = vmatpush1.msra.mxu0 0.0
        %1524 = vmatprep.subr.mxu0 0.0
        %1525 = vmatpush1.msra.mxu0 0.0
        %1526 = vmatprep.subr.mxu0 0.0
        %1527 = vmatpush1.msra.mxu0 0.0
        %1528 = vmatprep.subr.mxu0 0.0
        %1529 = vmatpush1.msra.mxu0 0.0
        %1530 = vmatprep.subr.mxu0 0.0
        %1531 = vmatpush1.msra.mxu0 0.0
        %1532 = vmatprep.subr.mxu0 0.0
        %1533 = vmatpush1.msra.mxu0 0.0
        %1534 = vmatprep.mubr.f32.mxu0 0.0
        %1535 = vmatmul.mubr.f32.gmra.mrb[0].mxu0 %v1468
        %v1536 = vpop.f32.mrb[0].mxu0
        %v1537 = vadd.f32 %v1460, %v1536
        %v1538 = vpop.f32.mrb[0].mxu0
        %v1539 = vadd.f32 %v1464, %v1538
        %1540 = vdwg.mxu0
        %s1541 = scalar_lea.vmem %s4, 64
        %v1542 = vld [vmem:[%s1541] sm:$0xff]
        %v1543 = vld [vmem:[%s1541 + $0x8] sm:$0xff]
        %v1544 = vld [vmem:[%s1541 + $0x10] sm:$0xff]
        %v1545 = vld [vmem:[%s1541 + $0x18] sm:$0xff]
        %v1546 = vld [vmem:[%s1541 + $0x20] sm:$0xff]
        %v1547 = vld [vmem:[%s1541 + $0x28] sm:$0xff]
        %v1548 = vld [vmem:[%s1541 + $0x30] sm:$0xff]
        %v1549 = vld [vmem:[%s1541 + $0x38] sm:$0xff]
        %1551 = vrot.lane.b32.xlu0 %v1537, 64
        %v1552 = vpop.permute.xlu0 %1551
        %v1553 = vsel %vm696, %v1537, 0
        %v1555 = vsel %vm696, %v1552, 0
        %1557 = vmatprep.subr.mxu0 0.0
        %1558 = vmatpush1.xpose.msra.mxu0 %v1555
        %1559 = vmatprep.subr.mxu0 0.0
        %1560 = vmatpush1.xpose.msra.mxu0 0.0
        %1561 = vmatprep.subr.mxu0 0.0
        %1562 = vmatpush1.xpose.msra.mxu0 0.0
        %1563 = vmatprep.subr.mxu0 0.0
        %1564 = vmatpush1.xpose.msra.mxu0 0.0
        %1565 = vmatprep.subr.mxu0 0.0
        %1566 = vmatpush1.xpose.msra.mxu0 0.0
        %1567 = vmatprep.subr.mxu0 0.0
        %1568 = vmatpush1.xpose.msra.mxu0 0.0
        %1569 = vmatprep.subr.mxu0 0.0
        %1570 = vmatpush1.xpose.msra.mxu0 0.0
        %1571 = vmatprep.subr.mxu0 0.0
        %1572 = vmatpush1.xpose.msra.mxu0 0.0
        %1573 = vmatprep.subr.mxu0 0.0
        %1574 = vmatpush1.xpose.msra.mxu0 0.0
        %1575 = vmatprep.subr.mxu0 0.0
        %1576 = vmatpush1.xpose.msra.mxu0 0.0
        %1577 = vmatprep.subr.mxu0 0.0
        %1578 = vmatpush1.xpose.msra.mxu0 0.0
        %1579 = vmatprep.subr.mxu0 0.0
        %1580 = vmatpush1.xpose.msra.mxu0 0.0
        %1581 = vmatprep.subr.mxu0 0.0
        %1582 = vmatpush1.xpose.msra.mxu0 0.0
        %1583 = vmatprep.subr.mxu0 0.0
        %1584 = vmatpush1.xpose.msra.mxu0 0.0
        %1585 = vmatprep.subr.mxu0 0.0
        %1586 = vmatpush1.xpose.msra.mxu0 0.0
        %1587 = vmatprep.subr.mxu0 0.0
        %1588 = vmatpush1.xpose.msra.mxu0 0.0
        %1589 = vmatprep.subr.mxu0 0.0
        %1590 = vmatpush1.xpose.msra.mxu0 0.0
        %1591 = vmatprep.subr.mxu0 0.0
        %1592 = vmatpush1.xpose.msra.mxu0 0.0
        %1593 = vmatprep.subr.mxu0 0.0
        %1594 = vmatpush1.xpose.msra.mxu0 0.0
        %1595 = vmatprep.subr.mxu0 0.0
        %1596 = vmatpush1.xpose.msra.mxu0 0.0
        %1597 = vmatprep.subr.mxu0 0.0
        %1598 = vmatpush1.xpose.msra.mxu0 0.0
        %1599 = vmatprep.subr.mxu0 0.0
        %1600 = vmatpush1.xpose.msra.mxu0 0.0
        %1601 = vmatprep.subr.mxu0 0.0
        %1602 = vmatpush1.xpose.msra.mxu0 0.0
        %1603 = vmatprep.subr.mxu0 0.0
        %1604 = vmatpush1.xpose.msra.mxu0 0.0
        %1605 = vmatprep.subr.mxu0 0.0
        %1606 = vmatpush1.xpose.msra.mxu0 0.0
        %1607 = vmatprep.subr.mxu0 0.0
        %1608 = vmatpush1.xpose.msra.mxu0 0.0
        %1609 = vmatprep.subr.mxu0 0.0
        %1610 = vmatpush1.xpose.msra.mxu0 0.0
        %1611 = vmatprep.subr.mxu0 0.0
        %1612 = vmatpush1.xpose.msra.mxu0 0.0
        %1613 = vmatprep.subr.mxu0 0.0
        %1614 = vmatpush1.xpose.msra.mxu0 0.0
        %1615 = vmatprep.subr.mxu0 0.0
        %1616 = vmatpush1.xpose.msra.mxu0 0.0
        %1617 = vmatprep.subr.mxu0 0.0
        %1618 = vmatpush1.xpose.msra.mxu0 0.0
        %1619 = vmatprep.subr.mxu0 0.0
        %1620 = vmatpush1.xpose.msra.mxu0 0.0
        %1621 = vmatprep.mubr.f32.mxu0 0.0
        %1622 = vmatmul.mubr.f32.gmra.mrb[0].mxu0 %v1553
        %v1623 = vpop.f32.mrb[0].mxu0
        %v1624 = vadd.f32 0.0, %v1623
        %v1625 = vpop.f32.mrb[0].mxu0
        %1626 = vdwg.mxu0
        %v1627 = vmul.f32 %v1624, 0.17677669
        %v1628 = vadd.f32 %v1627, %v776
        %v1629 = vsel %vm779, %v1628, -inf
        %1630 = vmax.xlane.f32.xlu0 %v1629
        %v1631 = vpop.xlane.xlu0 %1630
        %v1632 = vsub.f32 %v1628, %v1631
        %v1633 = vmul.f32 %v1632, 1.442695
        %v1634 = vpow.pop %v1633
        %v1635 = vsel %vm779, %v1634, 0.0
        %1636 = vadd.xlane.f32.xlu0 %v1635
        %v1637 = vpop.xlane.xlu0 %1636
        %v1638 = vrcp.pop %v1637
        %v1639 = vmul.f32 %v1634, %v1638
        %v1641 = vsel %vm779, %v1639, 0
        %1643 = vmatprep.subr.mxu0 0.0
        %1644 = vmatpush1.msra.mxu0 %v1539
        %1645 = vmatprep.subr.mxu0 0.0
        %1646 = vmatpush1.msra.mxu0 0.0
        %1647 = vmatprep.subr.mxu0 0.0
        %1648 = vmatpush1.msra.mxu0 0.0
        %1649 = vmatprep.subr.mxu0 0.0
        %1650 = vmatpush1.msra.mxu0 0.0
        %1651 = vmatprep.subr.mxu0 0.0
        %1652 = vmatpush1.msra.mxu0 0.0
        %1653 = vmatprep.subr.mxu0 0.0
        %1654 = vmatpush1.msra.mxu0 0.0
        %1655 = vmatprep.subr.mxu0 0.0
        %1656 = vmatpush1.msra.mxu0 0.0
        %1657 = vmatprep.subr.mxu0 0.0
        %1658 = vmatpush1.msra.mxu0 0.0
        %1659 = vmatprep.subr.mxu0 0.0
        %1660 = vmatpush1.msra.mxu0 0.0
        %1661 = vmatprep.subr.mxu0 0.0
        %1662 = vmatpush1.msra.mxu0 0.0
        %1663 = vmatprep.subr.mxu0 0.0
        %1664 = vmatpush1.msra.mxu0 0.0
        %1665 = vmatprep.subr.mxu0 0.0
        %1666 = vmatpush1.msra.mxu0 0.0
        %1667 = vmatprep.subr.mxu0 0.0
        %1668 = vmatpush1.msra.mxu0 0.0
        %1669 = vmatprep.subr.mxu0 0.0
        %1670 = vmatpush1.msra.mxu0 0.0
        %1671 = vmatprep.subr.mxu0 0.0
        %1672 = vmatpush1.msra.mxu0 0.0
        %1673 = vmatprep.subr.mxu0 0.0
        %1674 = vmatpush1.msra.mxu0 0.0
        %1675 = vmatprep.subr.mxu0 0.0
        %1676 = vmatpush1.msra.mxu0 0.0
        %1677 = vmatprep.subr.mxu0 0.0
        %1678 = vmatpush1.msra.mxu0 0.0
        %1679 = vmatprep.subr.mxu0 0.0
        %1680 = vmatpush1.msra.mxu0 0.0
        %1681 = vmatprep.subr.mxu0 0.0
        %1682 = vmatpush1.msra.mxu0 0.0
        %1683 = vmatprep.subr.mxu0 0.0
        %1684 = vmatpush1.msra.mxu0 0.0
        %1685 = vmatprep.subr.mxu0 0.0
        %1686 = vmatpush1.msra.mxu0 0.0
        %1687 = vmatprep.subr.mxu0 0.0
        %1688 = vmatpush1.msra.mxu0 0.0
        %1689 = vmatprep.subr.mxu0 0.0
        %1690 = vmatpush1.msra.mxu0 0.0
        %1691 = vmatprep.subr.mxu0 0.0
        %1692 = vmatpush1.msra.mxu0 0.0
        %1693 = vmatprep.subr.mxu0 0.0
        %1694 = vmatpush1.msra.mxu0 0.0
        %1695 = vmatprep.subr.mxu0 0.0
        %1696 = vmatpush1.msra.mxu0 0.0
        %1697 = vmatprep.subr.mxu0 0.0
        %1698 = vmatpush1.msra.mxu0 0.0
        %1699 = vmatprep.subr.mxu0 0.0
        %1700 = vmatpush1.msra.mxu0 0.0
        %1701 = vmatprep.subr.mxu0 0.0
        %1702 = vmatpush1.msra.mxu0 0.0
        %1703 = vmatprep.subr.mxu0 0.0
        %1704 = vmatpush1.msra.mxu0 0.0
        %1705 = vmatprep.subr.mxu0 0.0
        %1706 = vmatpush1.msra.mxu0 0.0
        %1707 = vmatprep.mubr.f32.mxu0 0.0
        %1708 = vmatmul.mubr.f32.gmra.mrb[0].mxu0 %v1641
        %v1709 = vpop.f32.mrb[0].mxu0
        %v1710 = vadd.f32 0.0, %v1709
        %v1711 = vpop.f32.mrb[0].mxu0
        %1712 = vdwg.mxu0
        %1713 = vrot.lane.b32.xlu0 %v1537, 96
        %v1714 = vpop.permute.xlu0 %1713
        %1715 = vrot.lane.b32.xlu0 %v1537, 32
        %v1716 = vpop.permute.xlu0 %1715
        %v1717 = vsel %vm696, %v1714, 0
        %v1719 = vsel %vm696, %v1716, 0
        %1721 = vmatprep.subr.mxu0 0.0
        %1722 = vmatpush1.xpose.msra.mxu0 %v1719
        %1723 = vmatprep.subr.mxu0 0.0
        %1724 = vmatpush1.xpose.msra.mxu0 0.0
        %1725 = vmatprep.subr.mxu0 0.0
        %1726 = vmatpush1.xpose.msra.mxu0 0.0
        %1727 = vmatprep.subr.mxu0 0.0
        %1728 = vmatpush1.xpose.msra.mxu0 0.0
        %1729 = vmatprep.subr.mxu0 0.0
        %1730 = vmatpush1.xpose.msra.mxu0 0.0
        %1731 = vmatprep.subr.mxu0 0.0
        %1732 = vmatpush1.xpose.msra.mxu0 0.0
        %1733 = vmatprep.subr.mxu0 0.0
        %1734 = vmatpush1.xpose.msra.mxu0 0.0
        %1735 = vmatprep.subr.mxu0 0.0
        %1736 = vmatpush1.xpose.msra.mxu0 0.0
        %1737 = vmatprep.subr.mxu0 0.0
        %1738 = vmatpush1.xpose.msra.mxu0 0.0
        %1739 = vmatprep.subr.mxu0 0.0
        %1740 = vmatpush1.xpose.msra.mxu0 0.0
        %1741 = vmatprep.subr.mxu0 0.0
        %1742 = vmatpush1.xpose.msra.mxu0 0.0
        %1743 = vmatprep.subr.mxu0 0.0
        %1744 = vmatpush1.xpose.msra.mxu0 0.0
        %1745 = vmatprep.subr.mxu0 0.0
        %1746 = vmatpush1.xpose.msra.mxu0 0.0
        %1747 = vmatprep.subr.mxu0 0.0
        %1748 = vmatpush1.xpose.msra.mxu0 0.0
        %1749 = vmatprep.subr.mxu0 0.0
        %1750 = vmatpush1.xpose.msra.mxu0 0.0
        %1751 = vmatprep.subr.mxu0 0.0
        %1752 = vmatpush1.xpose.msra.mxu0 0.0
        %1753 = vmatprep.subr.mxu0 0.0
        %1754 = vmatpush1.xpose.msra.mxu0 0.0
        %1755 = vmatprep.subr.mxu0 0.0
        %1756 = vmatpush1.xpose.msra.mxu0 0.0
        %1757 = vmatprep.subr.mxu0 0.0
        %1758 = vmatpush1.xpose.msra.mxu0 0.0
        %1759 = vmatprep.subr.mxu0 0.0
        %1760 = vmatpush1.xpose.msra.mxu0 0.0
        %1761 = vmatprep.subr.mxu0 0.0
        %1762 = vmatpush1.xpose.msra.mxu0 0.0
        %1763 = vmatprep.subr.mxu0 0.0
        %1764 = vmatpush1.xpose.msra.mxu0 0.0
        %1765 = vmatprep.subr.mxu0 0.0
        %1766 = vmatpush1.xpose.msra.mxu0 0.0
        %1767 = vmatprep.subr.mxu0 0.0
        %1768 = vmatpush1.xpose.msra.mxu0 0.0
        %1769 = vmatprep.subr.mxu0 0.0
        %1770 = vmatpush1.xpose.msra.mxu0 0.0
        %1771 = vmatprep.subr.mxu0 0.0
        %1772 = vmatpush1.xpose.msra.mxu0 0.0
        %1773 = vmatprep.subr.mxu0 0.0
        %1774 = vmatpush1.xpose.msra.mxu0 0.0
        %1775 = vmatprep.subr.mxu0 0.0
        %1776 = vmatpush1.xpose.msra.mxu0 0.0
        %1777 = vmatprep.subr.mxu0 0.0
        %1778 = vmatpush1.xpose.msra.mxu0 0.0
        %1779 = vmatprep.subr.mxu0 0.0
        %1780 = vmatpush1.xpose.msra.mxu0 0.0
        %1781 = vmatprep.subr.mxu0 0.0
        %1782 = vmatpush1.xpose.msra.mxu0 0.0
        %1783 = vmatprep.subr.mxu0 0.0
        %1784 = vmatpush1.xpose.msra.mxu0 0.0
        %1785 = vmatprep.mubr.f32.mxu0 0.0
        %1786 = vmatmul.mubr.f32.gmra.mrb[0].mxu0 %v1717
        %v1787 = vpop.f32.mrb[0].mxu0
        %v1788 = vadd.f32 0.0, %v1787
        %v1789 = vpop.f32.mrb[0].mxu0
        %1790 = vdwg.mxu0
        %v1791 = vmul.f32 %v1788, 0.17677669
        %v1792 = vadd.f32 %v1791, %v776
        %v1793 = vsel %vm779, %v1792, -inf
        %1794 = vmax.xlane.f32.xlu0 %v1793
        %v1795 = vpop.xlane.xlu0 %1794
        %v1796 = vsub.f32 %v1792, %v1795
        %v1797 = vmul.f32 %v1796, 1.442695
        %v1798 = vpow.pop %v1797
        %v1799 = vsel %vm779, %v1798, 0.0
        %1800 = vadd.xlane.f32.xlu0 %v1799
        %v1801 = vpop.xlane.xlu0 %1800
        %v1802 = vrcp.pop %v1801
        %v1803 = vmul.f32 %v1798, %v1802
        %1805 = vrot.lane.b32.xlu0 %v1539, 96
        %v1806 = vpop.permute.xlu0 %1805
        %v1809 = vsel %vm779, %v1803, 0
        %1811 = vmatprep.subr.mxu0 0.0
        %1812 = vmatpush1.msra.mxu0 %v1806
        %1813 = vmatprep.subr.mxu0 0.0
        %1814 = vmatpush1.msra.mxu0 0.0
        %1815 = vmatprep.subr.mxu0 0.0
        %1816 = vmatpush1.msra.mxu0 0.0
        %1817 = vmatprep.subr.mxu0 0.0
        %1818 = vmatpush1.msra.mxu0 0.0
        %1819 = vmatprep.subr.mxu0 0.0
        %1820 = vmatpush1.msra.mxu0 0.0
        %1821 = vmatprep.subr.mxu0 0.0
        %1822 = vmatpush1.msra.mxu0 0.0
        %1823 = vmatprep.subr.mxu0 0.0
        %1824 = vmatpush1.msra.mxu0 0.0
        %1825 = vmatprep.subr.mxu0 0.0
        %1826 = vmatpush1.msra.mxu0 0.0
        %1827 = vmatprep.subr.mxu0 0.0
        %1828 = vmatpush1.msra.mxu0 0.0
        %1829 = vmatprep.subr.mxu0 0.0
        %1830 = vmatpush1.msra.mxu0 0.0
        %1831 = vmatprep.subr.mxu0 0.0
        %1832 = vmatpush1.msra.mxu0 0.0
        %1833 = vmatprep.subr.mxu0 0.0
        %1834 = vmatpush1.msra.mxu0 0.0
        %1835 = vmatprep.subr.mxu0 0.0
        %1836 = vmatpush1.msra.mxu0 0.0
        %1837 = vmatprep.subr.mxu0 0.0
        %1838 = vmatpush1.msra.mxu0 0.0
        %1839 = vmatprep.subr.mxu0 0.0
        %1840 = vmatpush1.msra.mxu0 0.0
        %1841 = vmatprep.subr.mxu0 0.0
        %1842 = vmatpush1.msra.mxu0 0.0
        %1843 = vmatprep.subr.mxu0 0.0
        %1844 = vmatpush1.msra.mxu0 0.0
        %1845 = vmatprep.subr.mxu0 0.0
        %1846 = vmatpush1.msra.mxu0 0.0
        %1847 = vmatprep.subr.mxu0 0.0
        %1848 = vmatpush1.msra.mxu0 0.0
        %1849 = vmatprep.subr.mxu0 0.0
        %1850 = vmatpush1.msra.mxu0 0.0
        %1851 = vmatprep.subr.mxu0 0.0
        %1852 = vmatpush1.msra.mxu0 0.0
        %1853 = vmatprep.subr.mxu0 0.0
        %1854 = vmatpush1.msra.mxu0 0.0
        %1855 = vmatprep.subr.mxu0 0.0
        %1856 = vmatpush1.msra.mxu0 0.0
        %1857 = vmatprep.subr.mxu0 0.0
        %1858 = vmatpush1.msra.mxu0 0.0
        %1859 = vmatprep.subr.mxu0 0.0
        %1860 = vmatpush1.msra.mxu0 0.0
        %1861 = vmatprep.subr.mxu0 0.0
        %1862 = vmatpush1.msra.mxu0 0.0
        %1863 = vmatprep.subr.mxu0 0.0
        %1864 = vmatpush1.msra.mxu0 0.0
        %1865 = vmatprep.subr.mxu0 0.0
        %1866 = vmatpush1.msra.mxu0 0.0
        %1867 = vmatprep.subr.mxu0 0.0
        %1868 = vmatpush1.msra.mxu0 0.0
        %1869 = vmatprep.subr.mxu0 0.0
        %1870 = vmatpush1.msra.mxu0 0.0
        %1871 = vmatprep.subr.mxu0 0.0
        %1872 = vmatpush1.msra.mxu0 0.0
        %1873 = vmatprep.subr.mxu0 0.0
        %1874 = vmatpush1.msra.mxu0 0.0
        %1875 = vmatprep.mubr.f32.mxu0 0.0
        %1876 = vmatmul.mubr.f32.gmra.mrb[0].mxu0 %v1809
        %v1877 = vpop.f32.mrb[0].mxu0
        %v1878 = vadd.f32 0.0, %v1877
        %v1879 = vpop.f32.mrb[0].mxu0
        %1880 = vdwg.mxu0
        %v1882 = vsel %vm696, %v1878, 0
        %1884 = vmatprep.subr.mxu0 0.0
        %1885 = vmatpush1.msra.mxu0 %v1546
        %1886 = vmatprep.subr.mxu0 0.0
        %1887 = vmatpush1.msra.mxu0 %v1547
        %1888 = vmatprep.subr.mxu0 0.0
        %1889 = vmatpush1.msra.mxu0 %v1548
        %1890 = vmatprep.subr.mxu0 0.0
        %1891 = vmatpush1.msra.mxu0 %v1549
        %1892 = vmatprep.subr.mxu0 0.0
        %1893 = vmatpush1.msra.mxu0 0.0
        %1894 = vmatprep.subr.mxu0 0.0
        %1895 = vmatpush1.msra.mxu0 0.0
        %1896 = vmatprep.subr.mxu0 0.0
        %1897 = vmatpush1.msra.mxu0 0.0
        %1898 = vmatprep.subr.mxu0 0.0
        %1899 = vmatpush1.msra.mxu0 0.0
        %1900 = vmatprep.subr.mxu0 0.0
        %1901 = vmatpush1.msra.mxu0 0.0
        %1902 = vmatprep.subr.mxu0 0.0
        %1903 = vmatpush1.msra.mxu0 0.0
        %1904 = vmatprep.subr.mxu0 0.0
        %1905 = vmatpush1.msra.mxu0 0.0
        %1906 = vmatprep.subr.mxu0 0.0
        %1907 = vmatpush1.msra.mxu0 0.0
        %1908 = vmatprep.subr.mxu0 0.0
        %1909 = vmatpush1.msra.mxu0 0.0
        %1910 = vmatprep.subr.mxu0 0.0
        %1911 = vmatpush1.msra.mxu0 0.0
        %1912 = vmatprep.subr.mxu0 0.0
        %1913 = vmatpush1.msra.mxu0 0.0
        %1914 = vmatprep.subr.mxu0 0.0
        %1915 = vmatpush1.msra.mxu0 0.0
        %1916 = vmatprep.subr.mxu0 0.0
        %1917 = vmatpush1.msra.mxu0 0.0
        %1918 = vmatprep.subr.mxu0 0.0
        %1919 = vmatpush1.msra.mxu0 0.0
        %1920 = vmatprep.subr.mxu0 0.0
        %1921 = vmatpush1.msra.mxu0 0.0
        %1922 = vmatprep.subr.mxu0 0.0
        %1923 = vmatpush1.msra.mxu0 0.0
        %1924 = vmatprep.subr.mxu0 0.0
        %1925 = vmatpush1.msra.mxu0 0.0
        %1926 = vmatprep.subr.mxu0 0.0
        %1927 = vmatpush1.msra.mxu0 0.0
        %1928 = vmatprep.subr.mxu0 0.0
        %1929 = vmatpush1.msra.mxu0 0.0
        %1930 = vmatprep.subr.mxu0 0.0
        %1931 = vmatpush1.msra.mxu0 0.0
        %1932 = vmatprep.subr.mxu0 0.0
        %1933 = vmatpush1.msra.mxu0 0.0
        %1934 = vmatprep.subr.mxu0 0.0
        %1935 = vmatpush1.msra.mxu0 0.0
        %1936 = vmatprep.subr.mxu0 0.0
        %1937 = vmatpush1.msra.mxu0 0.0
        %1938 = vmatprep.subr.mxu0 0.0
        %1939 = vmatpush1.msra.mxu0 0.0
        %1940 = vmatprep.subr.mxu0 0.0
        %1941 = vmatpush1.msra.mxu0 0.0
        %1942 = vmatprep.subr.mxu0 0.0
        %1943 = vmatpush1.msra.mxu0 0.0
        %1944 = vmatprep.subr.mxu0 0.0
        %1945 = vmatpush1.msra.mxu0 0.0
        %1946 = vmatprep.subr.mxu0 0.0
        %1947 = vmatpush1.msra.mxu0 0.0
        %1948 = vmatprep.mubr.f32.mxu0 0.0
        %1949 = vmatmul.mubr.f32.gmra.mrb[0].mxu0 %v1882
        %v1950 = vpop.f32.mrb[0].mxu0
        %v1951 = vadd.f32 0.0, %v1950
        %v1952 = vpop.f32.mrb[0].mxu0
        %1953 = vdwg.mxu0
        %v1955 = vsel %vm696, %v1710, 0
        %1957 = vmatprep.subr.mxu0 0.0
        %1958 = vmatpush1.msra.mxu0 %v1542
        %1959 = vmatprep.subr.mxu0 0.0
        %1960 = vmatpush1.msra.mxu0 %v1543
        %1961 = vmatprep.subr.mxu0 0.0
        %1962 = vmatpush1.msra.mxu0 %v1544
        %1963 = vmatprep.subr.mxu0 0.0
        %1964 = vmatpush1.msra.mxu0 %v1545
        %1965 = vmatprep.subr.mxu0 0.0
        %1966 = vmatpush1.msra.mxu0 0.0
        %1967 = vmatprep.subr.mxu0 0.0
        %1968 = vmatpush1.msra.mxu0 0.0
        %1969 = vmatprep.subr.mxu0 0.0
        %1970 = vmatpush1.msra.mxu0 0.0
        %1971 = vmatprep.subr.mxu0 0.0
        %1972 = vmatpush1.msra.mxu0 0.0
        %1973 = vmatprep.subr.mxu0 0.0
        %1974 = vmatpush1.msra.mxu0 0.0
        %1975 = vmatprep.subr.mxu0 0.0
        %1976 = vmatpush1.msra.mxu0 0.0
        %1977 = vmatprep.subr.mxu0 0.0
        %1978 = vmatpush1.msra.mxu0 0.0
        %1979 = vmatprep.subr.mxu0 0.0
        %1980 = vmatpush1.msra.mxu0 0.0
        %1981 = vmatprep.subr.mxu0 0.0
        %1982 = vmatpush1.msra.mxu0 0.0
        %1983 = vmatprep.subr.mxu0 0.0
        %1984 = vmatpush1.msra.mxu0 0.0
        %1985 = vmatprep.subr.mxu0 0.0
        %1986 = vmatpush1.msra.mxu0 0.0
        %1987 = vmatprep.subr.mxu0 0.0
        %1988 = vmatpush1.msra.mxu0 0.0
        %1989 = vmatprep.subr.mxu0 0.0
        %1990 = vmatpush1.msra.mxu0 0.0
        %1991 = vmatprep.subr.mxu0 0.0
        %1992 = vmatpush1.msra.mxu0 0.0
        %1993 = vmatprep.subr.mxu0 0.0
        %1994 = vmatpush1.msra.mxu0 0.0
        %1995 = vmatprep.subr.mxu0 0.0
        %1996 = vmatpush1.msra.mxu0 0.0
        %1997 = vmatprep.subr.mxu0 0.0
        %1998 = vmatpush1.msra.mxu0 0.0
        %1999 = vmatprep.subr.mxu0 0.0
        %2000 = vmatpush1.msra.mxu0 0.0
        %2001 = vmatprep.subr.mxu0 0.0
        %2002 = vmatpush1.msra.mxu0 0.0
        %2003 = vmatprep.subr.mxu0 0.0
        %2004 = vmatpush1.msra.mxu0 0.0
        %2005 = vmatprep.subr.mxu0 0.0
        %2006 = vmatpush1.msra.mxu0 0.0
        %2007 = vmatprep.subr.mxu0 0.0
        %2008 = vmatpush1.msra.mxu0 0.0
        %2009 = vmatprep.subr.mxu0 0.0
        %2010 = vmatpush1.msra.mxu0 0.0
        %2011 = vmatprep.subr.mxu0 0.0
        %2012 = vmatpush1.msra.mxu0 0.0
        %2013 = vmatprep.subr.mxu0 0.0
        %2014 = vmatpush1.msra.mxu0 0.0
        %2015 = vmatprep.subr.mxu0 0.0
        %2016 = vmatpush1.msra.mxu0 0.0
        %2017 = vmatprep.subr.mxu0 0.0
        %2018 = vmatpush1.msra.mxu0 0.0
        %2019 = vmatprep.subr.mxu0 0.0
        %2020 = vmatpush1.msra.mxu0 0.0
        %2021 = vmatprep.mubr.f32.mxu0 0.0
        %2022 = vmatmul.mubr.f32.gmra.mrb[0].mxu0 %v1955
        %v2023 = vpop.f32.mrb[0].mxu0
        %v2024 = vadd.f32 %v1951, %v2023
        %v2025 = vpop.f32.mrb[0].mxu0
        %2026 = vdwg.mxu0
        %s2027 = scalar_lea.vmem %s5, 1
        %v2028 = vld [vmem:[%s2027] sm:$0x1]
        %v2030 = vlaneseq
        %v2031 = vshrl.u32 %v2030, 7
        %v2032 = vsub.s32 0, %v2031
        %v2033 = vrot.slane %v2028, %v2032
        %v2035 = vadd.f32 %v2024, %v2033
        %v2036 = vadd.f32 %v1436, %v2035
        %s2037 = scalar_lea.vmem %s6, 1
        %v2038 = vld [vmem:[%s2037] sm:$0x1]
        %s2039 = scalar_lea.vmem %s7, 1
        %v2040 = vld [vmem:[%s2039] sm:$0x1]
        %v2041 = vsel %vm610, %v2036, 0.0
        %2042 = vadd.xlane.f32.xlu0 %v2041
        %v2043 = vpop.xlane.xlu0 %2042
        %v2044 = vmul.f32 %v2043, %v1192
        %v2045 = vsub.f32 %v2036, %v2044
        %v2046 = vmul.f32 %v2045, %v2045
        %v2047 = vsel %vm610, %v2046, 0.0
        %2048 = vadd.xlane.f32.xlu0 %v2047
        %v2049 = vpop.xlane.xlu0 %2048
        %v2050 = vmul.f32 %v2049, %v1192
        %v2051 = vadd.f32 %v2050, 1e-05
        %v2052 = vrsqrt.pop %v2051
        %v2053 = vmul.f32 %v2045, %v2052
        %v2055 = vlaneseq
        %v2056 = vshrl.u32 %v2055, 7
        %v2057 = vsub.s32 0, %v2056
        %v2058 = vrot.slane %v2038, %v2057
        %v2060 = vmul.f32 %v2053, %v2058
        %v2062 = vlaneseq
        %v2063 = vshrl.u32 %v2062, 7
        %v2064 = vsub.s32 0, %v2063
        %v2065 = vrot.slane %v2040, %v2064
        %v2067 = vadd.f32 %v2060, %v2065
        %s2068 = scalar_lea.vmem [#allocation5], 64
        %v2069 = vld [vmem:[%s2068] sm:$0xff]
        %v2070 = vld [vmem:[%s2068 + $0x8] sm:$0xff]
        %v2071 = vld [vmem:[%s2068 + $0x10] sm:$0xff]
        %v2072 = vld [vmem:[%s2068 + $0x18] sm:$0xff]
        %v2073 = vld [vmem:[%s2068 + $0x20] sm:$0xff]
        %v2074 = vld [vmem:[%s2068 + $0x28] sm:$0xff]
        %v2075 = vld [vmem:[%s2068 + $0x30] sm:$0xff]
        %v2076 = vld [vmem:[%s2068 + $0x38] sm:$0xff]
        %s2077 = scalar_lea.vmem %s9, 1
        %v2078 = vld [vmem:[%s2077] sm:$0x1]
        %v2080 = vlaneseq
        %v2081 = vshrl.u32 %v2080, 7
        %v2082 = vsub.s32 0, %v2081
        %v2083 = vrot.slane %v2078, %v2082
        %v2086 = vsel %vm610, %v2067, 0
        %2088 = vmatprep.subr.mxu0 0.0
        %2089 = vmatpush1.msra.mxu0 %v2069
        %2090 = vmatprep.subr.mxu0 0.0
        %2091 = vmatpush1.msra.mxu0 %v2070
        %2092 = vmatprep.subr.mxu0 0.0
        %2093 = vmatpush1.msra.mxu0 %v2071
        %2094 = vmatprep.subr.mxu0 0.0
        %2095 = vmatpush1.msra.mxu0 %v2072
        %2096 = vmatprep.subr.mxu0 0.0
        %2097 = vmatpush1.msra.mxu0 %v2073
        %2098 = vmatprep.subr.mxu0 0.0
        %2099 = vmatpush1.msra.mxu0 %v2074
        %2100 = vmatprep.subr.mxu0 0.0
        %2101 = vmatpush1.msra.mxu0 %v2075
        %2102 = vmatprep.subr.mxu0 0.0
        %2103 = vmatpush1.msra.mxu0 %v2076
        %2104 = vmatprep.subr.mxu0 0.0
        %2105 = vmatpush1.msra.mxu0 0.0
        %2106 = vmatprep.subr.mxu0 0.0
        %2107 = vmatpush1.msra.mxu0 0.0
        %2108 = vmatprep.subr.mxu0 0.0
        %2109 = vmatpush1.msra.mxu0 0.0
        %2110 = vmatprep.subr.mxu0 0.0
        %2111 = vmatpush1.msra.mxu0 0.0
        %2112 = vmatprep.subr.mxu0 0.0
        %2113 = vmatpush1.msra.mxu0 0.0
        %2114 = vmatprep.subr.mxu0 0.0
        %2115 = vmatpush1.msra.mxu0 0.0
        %2116 = vmatprep.subr.mxu0 0.0
        %2117 = vmatpush1.msra.mxu0 0.0
        %2118 = vmatprep.subr.mxu0 0.0
        %2119 = vmatpush1.msra.mxu0 0.0
        %2120 = vmatprep.subr.mxu0 0.0
        %2121 = vmatpush1.msra.mxu0 0.0
        %2122 = vmatprep.subr.mxu0 0.0
        %2123 = vmatpush1.msra.mxu0 0.0
        %2124 = vmatprep.subr.mxu0 0.0
        %2125 = vmatpush1.msra.mxu0 0.0
        %2126 = vmatprep.subr.mxu0 0.0
        %2127 = vmatpush1.msra.mxu0 0.0
        %2128 = vmatprep.subr.mxu0 0.0
        %2129 = vmatpush1.msra.mxu0 0.0
        %2130 = vmatprep.subr.mxu0 0.0
        %2131 = vmatpush1.msra.mxu0 0.0
        %2132 = vmatprep.subr.mxu0 0.0
        %2133 = vmatpush1.msra.mxu0 0.0
        %2134 = vmatprep.subr.mxu0 0.0
        %2135 = vmatpush1.msra.mxu0 0.0
        %2136 = vmatprep.subr.mxu0 0.0
        %2137 = vmatpush1.msra.mxu0 0.0
        %2138 = vmatprep.subr.mxu0 0.0
        %2139 = vmatpush1.msra.mxu0 0.0
        %2140 = vmatprep.subr.mxu0 0.0
        %2141 = vmatpush1.msra.mxu0 0.0
        %2142 = vmatprep.subr.mxu0 0.0
        %2143 = vmatpush1.msra.mxu0 0.0
        %2144 = vmatprep.subr.mxu0 0.0
        %2145 = vmatpush1.msra.mxu0 0.0
        %2146 = vmatprep.subr.mxu0 0.0
        %2147 = vmatpush1.msra.mxu0 0.0
        %2148 = vmatprep.subr.mxu0 0.0
        %2149 = vmatpush1.msra.mxu0 0.0
        %2150 = vmatprep.subr.mxu0 0.0
        %2151 = vmatpush1.msra.mxu0 0.0
        %2152 = vmatprep.mubr.f32.mxu0 0.0
        %2153 = vmatmul.mubr.f32.gmra.mrb[0].mxu0 %v2086
        %v2154 = vpop.f32.mrb[0].mxu0
        %v2155 = vadd.f32 %v2083, %v2154
        %v2156 = vpop.f32.mrb[0].mxu0
        %2157 = vdwg.mxu0
        %v2158 = vmul.f32 %v2155, %v2155
        %v2159 = vmul.f32 %v2155, %v2158
        %v2160 = vmul.f32 %v2159, 0.044715
        %v2161 = vadd.f32 %v2155, %v2160
        %v2162 = vmul.f32 %v2161, 0.7978846
        %v2163 = vtanh.pop %v2162
        %v2164 = vadd.f32 %v2163, 1.0
        %v2165 = vmul.f32 %v2164, 0.5
        %v2166 = vmul.f32 %v2155, %v2165
        %s2167 = scalar_lea.vmem %s10, 128
        %v2168 = vld [vmem:[%s2167] sm:$0xff]
        %v2169 = vld [vmem:[%s2167 + $0x8] sm:$0xff]
        %v2170 = vld [vmem:[%s2167 + $0x10] sm:$0xff]
        %v2171 = vld [vmem:[%s2167 + $0x18] sm:$0xff]
        %v2172 = vld [vmem:[%s2167 + $0x20] sm:$0xff]
        %v2173 = vld [vmem:[%s2167 + $0x28] sm:$0xff]
        %v2174 = vld [vmem:[%s2167 + $0x30] sm:$0xff]
        %v2175 = vld [vmem:[%s2167 + $0x38] sm:$0xff]
        %v2176 = vld [vmem:[%s2167 + $0x40] sm:$0xff]
        %v2177 = vld [vmem:[%s2167 + $0x48] sm:$0xff]
        %v2178 = vld [vmem:[%s2167 + $0x50] sm:$0xff]
        %v2179 = vld [vmem:[%s2167 + $0x58] sm:$0xff]
        %v2180 = vld [vmem:[%s2167 + $0x60] sm:$0xff]
        %v2181 = vld [vmem:[%s2167 + $0x68] sm:$0xff]
        %v2182 = vld [vmem:[%s2167 + $0x70] sm:$0xff]
        %v2183 = vld [vmem:[%s2167 + $0x78] sm:$0xff]
        %s2184 = scalar_lea.vmem %s11, 1
        %v2185 = vld [vmem:[%s2184] sm:$0x1]
        %v2187 = vlaneseq
        %v2188 = vshrl.u32 %v2187, 7
        %v2189 = vsub.s32 0, %v2188
        %v2190 = vrot.slane %v2185, %v2189
        %2192 = vmatprep.subr.mxu0 0.0
        %2193 = vmatpush1.msra.mxu0 %v2168
        %2194 = vmatprep.subr.mxu0 0.0
        %2195 = vmatpush1.msra.mxu0 %v2169
        %2196 = vmatprep.subr.mxu0 0.0
        %2197 = vmatpush1.msra.mxu0 %v2170
        %2198 = vmatprep.subr.mxu0 0.0
        %2199 = vmatpush1.msra.mxu0 %v2171
        %2200 = vmatprep.subr.mxu0 0.0
        %2201 = vmatpush1.msra.mxu0 %v2172
        %2202 = vmatprep.subr.mxu0 0.0
        %2203 = vmatpush1.msra.mxu0 %v2173
        %2204 = vmatprep.subr.mxu0 0.0
        %2205 = vmatpush1.msra.mxu0 %v2174
        %2206 = vmatprep.subr.mxu0 0.0
        %2207 = vmatpush1.msra.mxu0 %v2175
        %2208 = vmatprep.subr.mxu0 0.0
        %2209 = vmatpush1.msra.mxu0 %v2176
        %2210 = vmatprep.subr.mxu0 0.0
        %2211 = vmatpush1.msra.mxu0 %v2177
        %2212 = vmatprep.subr.mxu0 0.0
        %2213 = vmatpush1.msra.mxu0 %v2178
        %2214 = vmatprep.subr.mxu0 0.0
        %2215 = vmatpush1.msra.mxu0 %v2179
        %2216 = vmatprep.subr.mxu0 0.0
        %2217 = vmatpush1.msra.mxu0 %v2180
        %2218 = vmatprep.subr.mxu0 0.0
        %2219 = vmatpush1.msra.mxu0 %v2181
        %2220 = vmatprep.subr.mxu0 0.0
        %2221 = vmatpush1.msra.mxu0 %v2182
        %2222 = vmatprep.subr.mxu0 0.0
        %2223 = vmatpush1.msra.mxu0 %v2183
        %2224 = vmatprep.subr.mxu0 0.0
        %2225 = vmatpush1.msra.mxu0 0.0
        %2226 = vmatprep.subr.mxu0 0.0
        %2227 = vmatpush1.msra.mxu0 0.0
        %2228 = vmatprep.subr.mxu0 0.0
        %2229 = vmatpush1.msra.mxu0 0.0
        %2230 = vmatprep.subr.mxu0 0.0
        %2231 = vmatpush1.msra.mxu0 0.0
        %2232 = vmatprep.subr.mxu0 0.0
        %2233 = vmatpush1.msra.mxu0 0.0
        %2234 = vmatprep.subr.mxu0 0.0
        %2235 = vmatpush1.msra.mxu0 0.0
        %2236 = vmatprep.subr.mxu0 0.0
        %2237 = vmatpush1.msra.mxu0 0.0
        %2238 = vmatprep.subr.mxu0 0.0
        %2239 = vmatpush1.msra.mxu0 0.0
        %2240 = vmatprep.subr.mxu0 0.0
        %2241 = vmatpush1.msra.mxu0 0.0
        %2242 = vmatprep.subr.mxu0 0.0
        %2243 = vmatpush1.msra.mxu0 0.0
        %2244 = vmatprep.subr.mxu0 0.0
        %2245 = vmatpush1.msra.mxu0 0.0
        %2246 = vmatprep.subr.mxu0 0.0
        %2247 = vmatpush1.msra.mxu0 0.0
        %2248 = vmatprep.subr.mxu0 0.0
        %2249 = vmatpush1.msra.mxu0 0.0
        %2250 = vmatprep.subr.mxu0 0.0
        %2251 = vmatpush1.msra.mxu0 0.0
        %2252 = vmatprep.subr.mxu0 0.0
        %2253 = vmatpush1.msra.mxu0 0.0
        %2254 = vmatprep.subr.mxu0 0.0
        %2255 = vmatpush1.msra.mxu0 0.0
        %2256 = vmatprep.mubr.f32.mxu0 0.0
        %2257 = vmatmul.mubr.f32.gmra.mrb[0].mxu0 %v2166
        %v2258 = vpop.f32.mrb[0].mxu0
        %v2259 = vadd.f32 %v2190, %v2258
        %v2260 = vpop.f32.mrb[0].mxu0
        %2261 = vdwg.mxu0
        %v2262 = vadd.f32 %v2067, %v2259
        %s2263 = scalar_lea.vmem %s12, 1
        %v2264 = vld [vmem:[%s2263] sm:$0x1]
        %s2265 = scalar_lea.vmem %s13, 1
        %v2266 = vld [vmem:[%s2265] sm:$0x1]
        %v2267 = vsel %vm610, %v2262, 0.0
        %2268 = vadd.xlane.f32.xlu0 %v2267
        %v2269 = vpop.xlane.xlu0 %2268
        %v2270 = vmul.f32 %v2269, %v1192
        %v2271 = vsub.f32 %v2262, %v2270
        %v2272 = vmul.f32 %v2271, %v2271
        %v2273 = vsel %vm610, %v2272, 0.0
        %2274 = vadd.xlane.f32.xlu0 %v2273
        %v2275 = vpop.xlane.xlu0 %2274
        %v2276 = vmul.f32 %v2275, %v1192
        %v2277 = vadd.f32 %v2276, 1e-05
        %v2278 = vrsqrt.pop %v2277
        %v2279 = vmul.f32 %v2271, %v2278
        %v2281 = vlaneseq
        %v2282 = vshrl.u32 %v2281, 7
        %v2283 = vsub.s32 0, %v2282
        %v2284 = vrot.slane %v2264, %v2283
        %v2286 = vmul.f32 %v2279, %v2284
        %v2288 = vlaneseq
        %v2289 = vshrl.u32 %v2288, 7
        %v2290 = vsub.s32 0, %v2289
        %v2291 = vrot.slane %v2266, %v2290
        %v2293 = vadd.f32 %v2286, %v2291
        %v2294 = vld [vmem:[#allocation7] sm:$0xff]
        %v2295 = vld [vmem:[#allocation7 + $0x8] sm:$0xff]
        %v2296 = vld [vmem:[#allocation7 + $0x10] sm:$0xff]
        %v2297 = vld [vmem:[#allocation7 + $0x18] sm:$0xff]
        %v2298 = vld [vmem:[#allocation7 + $0x20] sm:$0xff]
        %v2299 = vld [vmem:[#allocation7 + $0x28] sm:$0xff]
        %v2300 = vld [vmem:[#allocation7 + $0x30] sm:$0xff]
        %v2301 = vld [vmem:[#allocation7 + $0x38] sm:$0xff]
        %v2302 = vld [vmem:[%s15] sm:$0x1]
        %v2304 = vlaneseq
        %v2305 = vshrl.u32 %v2304, 7
        %v2306 = vsub.s32 0, %v2305
        %v2307 = vrot.slane %v2302, %v2306
        %v2310 = vsel %vm610, %v2293, 0
        %2312 = vmatprep.subr.mxu0 0.0
        %2313 = vmatpush1.msra.mxu0 %v2294
        %2314 = vmatprep.subr.mxu0 0.0
        %2315 = vmatpush1.msra.mxu0 %v2295
        %2316 = vmatprep.subr.mxu0 0.0
        %2317 = vmatpush1.msra.mxu0 %v2296
        %2318 = vmatprep.subr.mxu0 0.0
        %2319 = vmatpush1.msra.mxu0 %v2297
        %2320 = vmatprep.subr.mxu0 0.0
        %2321 = vmatpush1.msra.mxu0 %v2298
        %2322 = vmatprep.subr.mxu0 0.0
        %2323 = vmatpush1.msra.mxu0 %v2299
        %2324 = vmatprep.subr.mxu0 0.0
        %2325 = vmatpush1.msra.mxu0 %v2300
        %2326 = vmatprep.subr.mxu0 0.0
        %2327 = vmatpush1.msra.mxu0 %v2301
        %2328 = vmatprep.subr.mxu0 0.0
        %2329 = vmatpush1.msra.mxu0 0.0
        %2330 = vmatprep.subr.mxu0 0.0
        %2331 = vmatpush1.msra.mxu0 0.0
        %2332 = vmatprep.subr.mxu0 0.0
        %2333 = vmatpush1.msra.mxu0 0.0
        %2334 = vmatprep.subr.mxu0 0.0
        %2335 = vmatpush1.msra.mxu0 0.0
        %2336 = vmatprep.subr.mxu0 0.0
        %2337 = vmatpush1.msra.mxu0 0.0
        %2338 = vmatprep.subr.mxu0 0.0
        %2339 = vmatpush1.msra.mxu0 0.0
        %2340 = vmatprep.subr.mxu0 0.0
        %2341 = vmatpush1.msra.mxu0 0.0
        %2342 = vmatprep.subr.mxu0 0.0
        %2343 = vmatpush1.msra.mxu0 0.0
        %2344 = vmatprep.subr.mxu0 0.0
        %2345 = vmatpush1.msra.mxu0 0.0
        %2346 = vmatprep.subr.mxu0 0.0
        %2347 = vmatpush1.msra.mxu0 0.0
        %2348 = vmatprep.subr.mxu0 0.0
        %2349 = vmatpush1.msra.mxu0 0.0
        %2350 = vmatprep.subr.mxu0 0.0
        %2351 = vmatpush1.msra.mxu0 0.0
        %2352 = vmatprep.subr.mxu0 0.0
        %2353 = vmatpush1.msra.mxu0 0.0
        %2354 = vmatprep.subr.mxu0 0.0
        %2355 = vmatpush1.msra.mxu0 0.0
        %2356 = vmatprep.subr.mxu0 0.0
        %2357 = vmatpush1.msra.mxu0 0.0
        %2358 = vmatprep.subr.mxu0 0.0
        %2359 = vmatpush1.msra.mxu0 0.0
        %2360 = vmatprep.subr.mxu0 0.0
        %2361 = vmatpush1.msra.mxu0 0.0
        %2362 = vmatprep.subr.mxu0 0.0
        %2363 = vmatpush1.msra.mxu0 0.0
        %2364 = vmatprep.subr.mxu0 0.0
        %2365 = vmatpush1.msra.mxu0 0.0
        %2366 = vmatprep.subr.mxu0 0.0
        %2367 = vmatpush1.msra.mxu0 0.0
        %2368 = vmatprep.subr.mxu0 0.0
        %2369 = vmatpush1.msra.mxu0 0.0
        %2370 = vmatprep.subr.mxu0 0.0
        %2371 = vmatpush1.msra.mxu0 0.0
        %2372 = vmatprep.subr.mxu0 0.0
        %2373 = vmatpush1.msra.mxu0 0.0
        %2374 = vmatprep.subr.mxu0 0.0
        %2375 = vmatpush1.msra.mxu0 0.0
        %2376 = vmatprep.mubr.f32.mxu0 0.0
        %2377 = vmatmul.mubr.f32.gmra.mrb[0].mxu0 %v2310
        %v2378 = vpop.f32.mrb[0].mxu0
        %v2379 = vadd.f32 %v2307, %v2378
        %v2380 = vpop.f32.mrb[0].mxu0
        %2381 = vdwg.mxu0
        %2382 = vst [vmem:[%s576] sm:$0xff] %v2379
        %s2383 = sand.u32 %s388, 1
        %s2384 = scalar_lea.sflag [#allocation4], %s2383
        %s2385 = sand.u32 %s388, 1
        %s2386 = smul.addr %s2385, 8
        %s2387 = scalar_lea.vmem [#allocation8], %s2386
        // Predicated region
        $region97: #{tpu_custom_call.1} parent=83 // pred_check
          %p2388 = pneg %p398
        $region98: #{tpu_custom_call.1} parent=83 // pred_check_branch
          %2390 = sbr.rel (%p2388) target = $region100
        $region99: #{tpu_custom_call.1} parent=83 // pred_region
          %s2392 = ssub.s32 128, 128
          %2393 = vsyncadd %s2384, %s2392
          %s2394 = smul.addr %s34, 128
          %s2395 = scalar_lea.hbm %s16, %s2394
          %s2397 = sshll.u32 %s2387, 4
          %s2398 = int_to_ptr.vmem [resolvable:$true] %s2397
          %2400 = dma.vmem_to_hbm [thread:$0]  %s2398, 128, %s2395, %s2384
        $region100: #{tpu_custom_call.1} parent=83 // pred_fallthru
          _
      $region84: #{tpu_custom_call.1} parent=5 // pred_fallthru
        _
      %p2401 = scmp.le.s32.totalorder 2, %s29
      // Predicated region
      $region101: #{tpu_custom_call.1} parent=5 // pred_check
        %p2402 = pneg %p2401
      $region102: #{tpu_custom_call.1} parent=5 // pred_check_branch
        %2404 = sbr.rel (%p2402) target = $region104
      $region103: #{tpu_custom_call.1} parent=5 // pred_region
        %s2405 = ssub.s32 %s29, 2
        // Predicated region
        $region105: #{tpu_custom_call.1} parent=103 // pred_check
          %p2406 = pneg %p404
        $region106: #{tpu_custom_call.1} parent=103 // pred_check_branch
          %2408 = sbr.rel (%p2406) target = $region108
        $region107: #{tpu_custom_call.1} parent=103 // pred_region
          %s2409 = sand.u32 %s389, 1
          %s2410 = scalar_lea.sflag [#allocation4], %s2409
          %s2411 = sand.u32 %s389, 1
          %s2412 = smul.addr %s2411, 8
          %s2413 = scalar_lea.vmem [#allocation8], %s2412
          %2414 = dma.done %s2410, 128
        $region108: #{tpu_custom_call.1} parent=103 // pred_fallthru
          _
      $region104: #{tpu_custom_call.1} parent=5 // pred_fallthru
        _
    $region6: #{tpu_custom_call.1} parent=1 // loop_footer
      %s33 = sadd.s32 1, %s29
    $region7: #{tpu_custom_call.1} parent=1 // loop_footer_branch
      %28 = sbr.rel target = $region3
    $region8: #{tpu_custom_call.1} parent=1 // loop_exit
      _
    %2415 = vsyncpa [#allocation3], 1
    %s2416 = scalar_lea.sflag [#allocation3], 1
    %2417 = vsyncpa %s2416, 1
    %2418 = vsyncpa [#allocation6], 1
    %2419 = vsyncpa [#allocation4], 1
    %s2420 = scalar_lea.sflag [#allocation4], 1
    %2421 = vsyncpa %s2420, 1

</llo_original>
